<compile_context>
chip_gen: v5e
topology: v5e:2x2
jax: 0.10.0
libtpu: 0.0.40
codegen_flags: <defaults>
</compile_context>

<pallas_src>
import functools

import numpy as np
import jax
import jax.numpy as jnp
from jax.experimental import pallas as pl
from jax.experimental.pallas import tpu as pltpu


# --------------------------------------------------------------------------
# helpers
# --------------------------------------------------------------------------
def _pick_tile(dim, pref, align):
    """Largest t <= pref with t % align == 0 and dim % t == 0, else full dim."""
    if dim <= align or dim % align != 0:
        return dim
    t = min(pref, dim)
    t -= t % align
    while t >= align:
        if dim % t == 0:
            return t
        t -= align
    return dim


def _bilinear_matrix(n_in):
    """1-D bilinear interpolation matrix, scale factor 2, align_corners=True."""
    n_out = 2 * n_in
    U = np.zeros((n_out, n_in), dtype=np.float64)
    if n_in == 1:
        U[:, 0] = 1.0
        return U
    scale = (n_in - 1) / (n_out - 1)
    for i in range(n_out):
        src = i * scale
        i0 = min(int(np.floor(src)), n_in - 1)
        i1 = min(i0 + 1, n_in - 1)
        frac = src - i0
        U[i, i0] += 1.0 - frac
        U[i, i1] += frac
    return U


def make_upsample_weight(H, W):
    """Returns (H*W, 4*H*W) matrix so that rows @ M == upsampled rows."""
    M = np.kron(_bilinear_matrix(H), _bilinear_matrix(W))   # (2H*2W, H*W)
    return jnp.asarray(M.T, dtype=jnp.float32)


# --------------------------------------------------------------------------
# Pallas kernel 1: y = x @ w + b   (2-D matmul, bf16 operands, f32 accumulate)
# --------------------------------------------------------------------------
def _mm_bias_kernel(x_ref, w_ref, b_ref, o_ref):
    acc = jnp.dot(x_ref[...], w_ref[...], preferred_element_type=jnp.float32)
    o_ref[...] = acc + b_ref[...]


def matmul_bias(x, w, b, *, tm_pref=256, tn_pref=1024):
    """x:(M,K) @ w:(K,N) + b:(N,) -> (M,N) float32."""
    M, K = x.shape
    K2, N = w.shape
    assert K == K2
    Mp = -(-M // 8) * 8                       # pad tiny M up to one sublane
    xb = x.astype(jnp.bfloat16)
    if Mp != M:
        xb = jnp.pad(xb, ((0, Mp - M), (0, 0)))
    wb = w.astype(jnp.bfloat16)
    bb = b.reshape(1, N).astype(jnp.float32)

    TM = _pick_tile(Mp, tm_pref, 8)
    TN = _pick_tile(N, tn_pref, 128)
    out = pl.pallas_call(
        _mm_bias_kernel,
        out_shape=jax.ShapeDtypeStruct((Mp, N), jnp.float32),
        grid=(Mp // TM, N // TN),
        in_specs=[
            pl.BlockSpec((TM, K), lambda i, j: (i, 0)),
            pl.BlockSpec((K, TN), lambda i, j: (0, j)),
            pl.BlockSpec((1, TN), lambda i, j: (0, j)),
        ],
        out_specs=pl.BlockSpec((TM, TN), lambda i, j: (i, j)),
        compiler_params=pltpu.CompilerParams(
            dimension_semantics=("parallel", "parallel")),
    )(xb, wb, bb)
    return out[:M] if Mp != M else out


# --------------------------------------------------------------------------
# Pallas kernel 2: per-batch conv-as-matmul  out[b] = W @ patches[b] + bias
# (spatial on lanes -> lane-dense output)
# --------------------------------------------------------------------------
def _bconv_kernel(w_ref, p_ref, b_ref, o_ref):
    acc = jnp.dot(w_ref[...], p_ref[0], preferred_element_type=jnp.float32)
    o_ref[0] = acc + b_ref[...]


def conv_as_matmul(w2d, bias, patches, *, tn_pref=1024):
    """w2d:(Cout,K), patches:(B,K,S), bias:(Cout,) -> (B,Cout,S) float32."""
    Cout, K = w2d.shape
    B, K2, S = patches.shape
    assert K == K2
    TN = _pick_tile(S, tn_pref, 128)
    wb = w2d.astype(jnp.bfloat16)
    pb = patches.astype(jnp.bfloat16)
    bb = bias.reshape(Cout, 1).astype(jnp.float32)
    return pl.pallas_call(
        _bconv_kernel,
        out_shape=jax.ShapeDtypeStruct((B, Cout, S), jnp.float32),
        grid=(B, S // TN),
        in_specs=[
            pl.BlockSpec((Cout, K), lambda g, j: (0, 0)),
            pl.BlockSpec((1, K, TN), lambda g, j: (g, 0, j)),
            pl.BlockSpec((Cout, 1), lambda g, j: (0, 0)),
        ],
        out_specs=pl.BlockSpec((1, Cout, TN), lambda g, j: (g, 0, j)),
        compiler_params=pltpu.CompilerParams(
            dimension_semantics=("parallel", "parallel")),
    )(wb, pb, bb)


# --------------------------------------------------------------------------
# Pallas kernel 3: InstanceNorm (affine-free, eps=1e-5) + LeakyReLU(0.1)
# rows = (batch, channel), lanes = flattened spatial
# --------------------------------------------------------------------------
def _instnorm_lrelu_kernel(x_ref, o_ref, *, eps, slope):
    x = x_ref[...]
    mean = jnp.mean(x, axis=-1, keepdims=True)
    xc = x - mean
    var = jnp.mean(xc * xc, axis=-1, keepdims=True)
    y = xc * jax.lax.rsqrt(var + eps)
    o_ref[...] = jnp.where(y >= 0, y, slope * y)


def instnorm_lrelu_rows(x2d, eps=1e-5, slope=0.1):
    R, S = x2d.shape
    xr = x2d.astype(jnp.float32)
    TR = _pick_tile(R, 64, 8)
    return pl.pallas_call(
        functools.partial(_instnorm_lrelu_kernel, eps=eps, slope=slope),
        out_shape=jax.ShapeDtypeStruct((R, S), jnp.float32),
        grid=(R // TR,),
        in_specs=[pl.BlockSpec((TR, S), lambda i: (i, 0))],
        out_specs=pl.BlockSpec((TR, S), lambda i: (i, 0)),
        compiler_params=pltpu.CompilerParams(
            dimension_semantics=("parallel",)),
    )(xr)


# --------------------------------------------------------------------------
# im2col (3x3, stride 1, pad 1) -- layout plumbing in plain JAX
# --------------------------------------------------------------------------
def im2col_3x3(x_bchw):
    B, C, H, W = x_bchw.shape
    xp = jnp.pad(x_bchw, ((0, 0), (0, 0), (1, 1), (1, 1)))
    taps = []
    for dh in range(3):
        for dw in range(3):
            taps.append(xp[:, :, dh:dh + H, dw:dw + W])
    p = jnp.stack(taps, axis=2)                 # (B, C, 9, H, W)
    return p.reshape(B, C * 9, H * W)           # k index = ci*9 + dh*3 + dw


# --------------------------------------------------------------------------
# parameters (deterministic synthetic init, PyTorch shapes)
# --------------------------------------------------------------------------
def init_params(key, input_nc, output_nc, hidden_nc, shape):
    s0, s1, s2 = shape
    ks = jax.random.split(key, 8)

    def w(k, sh, scale=0.05):
        return scale * jax.random.normal(k, sh, jnp.float32)

    return dict(
        linear_w=w(ks[0], (s0 * s1 * s2, 512)),
        linear_b=w(ks[1], (s0 * s1 * s2,)),
        main_conv_w=w(ks[2], (output_nc, input_nc, 1, 1)),
        main_conv_b=w(ks[3], (output_nc,)),
        bypass_conv1_w=w(ks[4], (hidden_nc, hidden_nc, 3, 3)),
        bypass_conv1_b=w(ks[5], (hidden_nc,)),
        bypass_conv2_w=w(ks[6], (output_nc, hidden_nc, 3, 3)),
        bypass_conv2_b=w(ks[7], (output_nc,)),
    )


# --------------------------------------------------------------------------
# forward
# --------------------------------------------------------------------------
def resblock_decoder_forward(params, x, feature, shape):
    s0, s1, s2 = shape
    B, Cin, H, W = x.shape
    assert (H, W) == (s1, s2)
    hidden_nc = params["bypass_conv1_w"].shape[1]
    assert Cin + s0 == hidden_nc
    Cout = params["bypass_conv2_w"].shape[0]
    HW, H2, W2 = H * W, 2 * H, 2 * W
    S2 = H2 * W2

    x_flat = x.astype(jnp.float32).reshape(B, Cin, HW)
    feature = feature.astype(jnp.float32)

    # (1) Linear 512 -> s0*s1*s2, viewed as (B, s0, H*W)
    lin = matmul_bias(feature, params["linear_w"].T, params["linear_b"])
    bypass = lin.reshape(B, s0, HW)

    # concat along channels (layout plumbing)
    cat = jnp.concatenate([x_flat, bypass], axis=1)          # (B, hidden, HW)

    # (2) norm1 + leaky_relu.  Because both InstanceNorm2d layers are
    # affine-free, rows [0:Cin] of this result are exactly
    # leaky_relu(norm3(x)) -> the main path reuses them below.
    n1 = instnorm_lrelu_rows(cat.reshape(B * hidden_nc, HW))

    # (3) bilinear x2 upsample (align_corners=True) as an MXU matmul
    up_w = make_upsample_weight(H, W)                         # (HW, 4HW)
    up = matmul_bias(n1, up_w, jnp.zeros((S2,), jnp.float32)) # (B*hidden, S2)
    up = up.reshape(B, hidden_nc, S2)
    main_up = up[:, :Cin, :]                                  # main path, exact

    # (4) bypass_conv1 (3x3, pad 1)
    p1 = im2col_3x3(up.reshape(B, hidden_nc, H2, W2))         # (B, hidden*9, S2)
    w1 = params["bypass_conv1_w"].reshape(hidden_nc, hidden_nc * 9)
    c1 = conv_as_matmul(w1, params["bypass_conv1_b"], p1)     # (B, hidden, S2)

    # (5) norm2 + leaky_relu
    n2 = instnorm_lrelu_rows(c1.reshape(B * hidden_nc, S2))
    n2 = n2.reshape(B, hidden_nc, H2, W2)

    # (6) fused [bypass_conv2 (3x3) + main_conv (1x1) + add] as one matmul:
    #     out = [W2 | Wm] @ [patches2 ; main_up] + (b2 + bm)
    p2 = im2col_3x3(n2)                                       # (B, hidden*9, S2)
    pk = jnp.concatenate([p2, main_up], axis=1)               # (B, hidden*9+Cin, S2)
    w2 = params["bypass_conv2_w"].reshape(Cout, hidden_nc * 9)
    wm = params["main_conv_w"].reshape(Cout, Cin)
    wk = jnp.concatenate([w2, wm], axis=1)
    bk = params["bypass_conv2_b"] + params["main_conv_b"]
    out = conv_as_matmul(wk, bk, pk)                          # (B, Cout, S2)

    return out.reshape(B, Cout, H2, W2)


# --------------------------------------------------------------------------
# pure-JAX reference (for a loose self-check only)
# --------------------------------------------------------------------------
def _reference_forward(params, x, feature, shape):
    s0, s1, s2 = shape
    B = x.shape[0]
    eps = 1e-5

    def inorm_lrelu(t):
        m = t.mean(axis=(2, 3), keepdims=True)
        v = ((t - m) ** 2).mean(axis=(2, 3), keepdims=True)
        y = (t - m) / jnp.sqrt(v + eps)
        return jnp.where(y >= 0, y, 0.1 * y)

    def upsample(t):
        U = jnp.asarray(_bilinear_matrix(t.shape[2]), jnp.float32)
        V = jnp.asarray(_bilinear_matrix(t.shape[3]), jnp.float32)
        return jnp.einsum('ih,jw,bchw->bcij', U, V, t)

    def conv(t, w, b, pad):
        y = jax.lax.conv_general_dilated(
            t, w, (1, 1), pad, dimension_numbers=('NCHW', 'OIHW', 'NCHW'))
        return y + b[None, :, None, None]

    lin = feature @ params['linear_w'].T + params['linear_b']
    byp = jnp.concatenate([x, lin.reshape(B, s0, s1, s2)], axis=1)
    byp = upsample(inorm_lrelu(byp))
    byp = conv(byp, params['bypass_conv1_w'], params['bypass_conv1_b'],
               ((1, 1), (1, 1)))
    byp = inorm_lrelu(byp)
    byp = conv(byp, params['bypass_conv2_w'], params['bypass_conv2_b'],
               ((1, 1), (1, 1)))
    main = upsample(inorm_lrelu(x))
    main = conv(main, params['main_conv_w'], params['main_conv_b'], 'VALID')
    return main + byp


if __name__ == "__main__":
    key = jax.random.PRNGKey(0)
    kp, kx, kf = jax.random.split(key, 3)

    B = 2
    input_nc, output_nc, hidden_nc = 8, 16, 16
    shape = (hidden_nc - input_nc, 16, 16)         # (8, 16, 16)

    params = init_params(kp, input_nc, output_nc, hidden_nc, shape)
    x = jax.random.normal(kx, (B, input_nc, shape[1], shape[2]), jnp.float32)
    feature = jax.random.normal(kf, (B, 512), jnp.float32)

    fwd = jax.jit(functools.partial(resblock_decoder_forward, shape=shape))
    out = fwd(params, x, feature)
    jax.block_until_ready(out)

    assert out.shape == (B, output_nc, 2 * shape[1], 2 * shape[2])
    assert bool(jnp.all(jnp.isfinite(out)))

    ref = jax.jit(functools.partial(_reference_forward, shape=shape))(
        params, x, feature)
    jax.block_until_ready(ref)
    err = float(jnp.max(jnp.abs(out - ref)) / (jnp.max(jnp.abs(ref)) + 1e-6))
    assert err < 0.1, f"mismatch vs reference: {err}"

    print("KERNEL_OK")
</pallas_src>

<mosaic_0001>
module attributes {stable_mosaic.version = 11 : i64} {
  func.func @_mm_bias_kernel(%arg0: i32, %arg1: i32, %arg2: memref<8x512xbf16, #tpu.memory_space<vmem>>, %arg3: memref<512x1024xbf16, #tpu.memory_space<vmem>>, %arg4: memref<1x1024xf32, #tpu.memory_space<vmem>>, %arg5: memref<8x1024xf32, #tpu.memory_space<vmem>>) attributes {dimension_semantics = [#tpu.dimension_semantics<parallel>, #tpu.dimension_semantics<parallel>], iteration_bounds = array<i64: 1, 2>, scalar_prefetch = 0 : i64, scratch_operands = 0 : i64, tpu.core_type = #tpu.core_type<tc>, window_params = [{transform_indices = @transform_0, window_bounds = array<i64: 8, 512>}, {transform_indices = @transform_1, window_bounds = array<i64: 512, 1024>}, {transform_indices = @transform_2, window_bounds = array<i64: 1, 1024>}, {transform_indices = @transform_3, window_bounds = array<i64: 8, 1024>}]} {
    %c0 = arith.constant 0 : index
    %c0_0 = arith.constant 0 : index
    %0 = vector.load %arg2[%c0, %c0_0] : memref<8x512xbf16, #tpu.memory_space<vmem>>, vector<8x512xbf16>
    %c0_1 = arith.constant 0 : index
    %c0_2 = arith.constant 0 : index
    %1 = vector.load %arg3[%c0_1, %c0_2] : memref<512x1024xbf16, #tpu.memory_space<vmem>>, vector<512x1024xbf16>
    %cst = arith.constant dense<0.000000e+00> : vector<8x1024xf32>
    %2 = tpu.matmul %0, %1, %cst {dimension_numbers = #tpu.dot_dimension_numbers<[1], [0], [0], [1], [0, 0, 1, 1], [], []>} : vector<8x512xbf16>, vector<512x1024xbf16>, vector<8x1024xf32> -> vector<8x1024xf32>
    %c0_3 = arith.constant 0 : index
    %c0_4 = arith.constant 0 : index
    %3 = vector.load %arg4[%c0_3, %c0_4] : memref<1x1024xf32, #tpu.memory_space<vmem>>, vector<1x1024xf32>
    %4 = vector.broadcast %3 : vector<1x1024xf32> to vector<8x1024xf32>
    %5 = arith.addf %2, %4 : vector<8x1024xf32>
    %c0_5 = arith.constant 0 : index
    %c0_6 = arith.constant 0 : index
    %6 = vector.load %arg5[%c0_5, %c0_6] : memref<8x1024xf32, #tpu.memory_space<vmem>>, vector<8x1024xf32>
    tpu.vector_store %arg5[%c0_5, %c0_6], %5 {strides = array<i32>} : memref<8x1024xf32, #tpu.memory_space<vmem>>, vector<8x1024xf32>,
    return
  }
  func.func @transform_0(%arg0: i32, %arg1: i32) -> (i32, i32) {
    %c0_i32 = arith.constant 0 : i32
    %c0_i32_0 = arith.constant 0 : i32
    return %arg0, %c0_i32 : i32, i32
  }
  func.func @transform_1(%arg0: i32, %arg1: i32) -> (i32, i32) {
    %c0_i32 = arith.constant 0 : i32
    %c0_i32_0 = arith.constant 0 : i32
    return %c0_i32, %arg1 : i32, i32
  }
  func.func @transform_2(%arg0: i32, %arg1: i32) -> (i32, i32) {
    %c0_i32 = arith.constant 0 : i32
    %c0_i32_0 = arith.constant 0 : i32
    return %c0_i32, %arg1 : i32, i32
  }
  func.func @transform_3(%arg0: i32, %arg1: i32) -> (i32, i32) {
    %c0_i32 = arith.constant 0 : i32
    return %arg0, %arg1 : i32, i32
  }
}

module attributes {stable_mosaic.version = 11 : i64} {
  func.func @_instnorm_lrelu_kernel(%arg0: i32, %arg1: memref<32x256xf32, #tpu.memory_space<vmem>>, %arg2: memref<32x256xf32, #tpu.memory_space<vmem>>) attributes {dimension_semantics = [#tpu.dimension_semantics<parallel>], iteration_bounds = array<i64: 1>, scalar_prefetch = 0 : i64, scratch_operands = 0 : i64, tpu.core_type = #tpu.core_type<tc>, window_params = [{transform_indices = @transform_0, window_bounds = array<i64: 32, 256>}, {transform_indices = @transform_1, window_bounds = array<i64: 32, 256>}]} {
    %c0 = arith.constant 0 : index
    %c0_0 = arith.constant 0 : index
    %0 = vector.load %arg1[%c0, %c0_0] : memref<32x256xf32, #tpu.memory_space<vmem>>, vector<32x256xf32>
    %cst = arith.constant dense<0.000000e+00> : vector<32xf32>
    %1 = vector.multi_reduction <add>, %0, %cst [1] : vector<32x256xf32> to vector<32xf32>
    %2 = vector.shape_cast %1 : vector<32xf32> to vector<32x1xf32>
    %cst_1 = arith.constant 2.560000e+02 : f32
    %3 = vector.broadcast %cst_1 : f32 to vector<32x1xf32>
    %4 = arith.divf %2, %3 : vector<32x1xf32>
    %5 = vector.broadcast %4 : vector<32x1xf32> to vector<32x256xf32>
    %6 = arith.subf %0, %5 : vector<32x256xf32>
    %7 = arith.mulf %6, %6 : vector<32x256xf32>
    %cst_2 = arith.constant dense<0.000000e+00> : vector<32xf32>
    %8 = vector.multi_reduction <add>, %7, %cst_2 [1] : vector<32x256xf32> to vector<32xf32>
    %9 = vector.shape_cast %8 : vector<32xf32> to vector<32x1xf32>
    %cst_3 = arith.constant 2.560000e+02 : f32
    %10 = vector.broadcast %cst_3 : f32 to vector<32x1xf32>
    %11 = arith.divf %9, %10 : vector<32x1xf32>
    %cst_4 = arith.constant 9.99999974E-6 : f32
    %12 = vector.broadcast %cst_4 : f32 to vector<32x1xf32>
    %13 = arith.addf %11, %12 : vector<32x1xf32>
    %14 = math.rsqrt %13 : vector<32x1xf32>
    %15 = vector.broadcast %14 : vector<32x1xf32> to vector<32x256xf32>
    %16 = arith.mulf %6, %15 : vector<32x256xf32>
    %cst_5 = arith.constant 0.000000e+00 : f32
    %17 = vector.broadcast %cst_5 : f32 to vector<32x256xf32>
    %18 = arith.cmpf oge, %16, %17 : vector<32x256xf32>
    %cst_6 = arith.constant 1.000000e-01 : f32
    %19 = vector.broadcast %cst_6 : f32 to vector<32x256xf32>
    %20 = arith.mulf %19, %16 : vector<32x256xf32>
    %21 = arith.select %18, %16, %20 : vector<32x256xi1>, vector<32x256xf32>
    %c0_7 = arith.constant 0 : index
    %c0_8 = arith.constant 0 : index
    %22 = vector.load %arg2[%c0_7, %c0_8] : memref<32x256xf32, #tpu.memory_space<vmem>>, vector<32x256xf32>
    tpu.vector_store %arg2[%c0_7, %c0_8], %21 {strides = array<i32>} : memref<32x256xf32, #tpu.memory_space<vmem>>, vector<32x256xf32>,
    return
  }
  func.func @transform_0(%arg0: i32) -> (i32, i32) {
    %c0_i32 = arith.constant 0 : i32
    %c0_i32_0 = arith.constant 0 : i32
    return %arg0, %c0_i32 : i32, i32
  }
  func.func @transform_1(%arg0: i32) -> (i32, i32) {
    %c0_i32 = arith.constant 0 : i32
    %c0_i32_0 = arith.constant 0 : i32
    return %arg0, %c0_i32 : i32, i32
  }
}

module attributes {stable_mosaic.version = 11 : i64} {
  func.func @_mm_bias_kernel(%arg0: i32, %arg1: i32, %arg2: memref<32x256xbf16, #tpu.memory_space<vmem>>, %arg3: memref<256x1024xbf16, #tpu.memory_space<vmem>>, %arg4: memref<1x1024xf32, #tpu.memory_space<vmem>>, %arg5: memref<32x1024xf32, #tpu.memory_space<vmem>>) attributes {dimension_semantics = [#tpu.dimension_semantics<parallel>, #tpu.dimension_semantics<parallel>], iteration_bounds = array<i64: 1, 1>, scalar_prefetch = 0 : i64, scratch_operands = 0 : i64, tpu.core_type = #tpu.core_type<tc>, window_params = [{transform_indices = @transform_0, window_bounds = array<i64: 32, 256>}, {transform_indices = @transform_1, window_bounds = array<i64: 256, 1024>}, {transform_indices = @transform_2, window_bounds = array<i64: 1, 1024>}, {transform_indices = @transform_3, window_bounds = array<i64: 32, 1024>}]} {
    %c0 = arith.constant 0 : index
    %c0_0 = arith.constant 0 : index
    %0 = vector.load %arg2[%c0, %c0_0] : memref<32x256xbf16, #tpu.memory_space<vmem>>, vector<32x256xbf16>
    %c0_1 = arith.constant 0 : index
    %c0_2 = arith.constant 0 : index
    %1 = vector.load %arg3[%c0_1, %c0_2] : memref<256x1024xbf16, #tpu.memory_space<vmem>>, vector<256x1024xbf16>
    %cst = arith.constant dense<0.000000e+00> : vector<32x1024xf32>
    %2 = tpu.matmul %0, %1, %cst {dimension_numbers = #tpu.dot_dimension_numbers<[1], [0], [0], [1], [0, 0, 1, 1], [], []>} : vector<32x256xbf16>, vector<256x1024xbf16>, vector<32x1024xf32> -> vector<32x1024xf32>
    %c0_3 = arith.constant 0 : index
    %c0_4 = arith.constant 0 : index
    %3 = vector.load %arg4[%c0_3, %c0_4] : memref<1x1024xf32, #tpu.memory_space<vmem>>, vector<1x1024xf32>
    %4 = vector.broadcast %3 : vector<1x1024xf32> to vector<32x1024xf32>
    %5 = arith.addf %2, %4 : vector<32x1024xf32>
    %c0_5 = arith.constant 0 : index
    %c0_6 = arith.constant 0 : index
    %6 = vector.load %arg5[%c0_5, %c0_6] : memref<32x1024xf32, #tpu.memory_space<vmem>>, vector<32x1024xf32>
    tpu.vector_store %arg5[%c0_5, %c0_6], %5 {strides = array<i32>} : memref<32x1024xf32, #tpu.memory_space<vmem>>, vector<32x1024xf32>,
    return
  }
  func.func @transform_0(%arg0: i32, %arg1: i32) -> (i32, i32) {
    %c0_i32 = arith.constant 0 : i32
    %c0_i32_0 = arith.constant 0 : i32
    return %arg0, %c0_i32 : i32, i32
  }
  func.func @transform_1(%arg0: i32, %arg1: i32) -> (i32, i32) {
    %c0_i32 = arith.constant 0 : i32
    %c0_i32_0 = arith.constant 0 : i32
    return %c0_i32, %arg1 : i32, i32
  }
  func.func @transform_2(%arg0: i32, %arg1: i32) -> (i32, i32) {
    %c0_i32 = arith.constant 0 : i32
    %c0_i32_0 = arith.constant 0 : i32
    return %c0_i32, %arg1 : i32, i32
  }
  func.func @transform_3(%arg0: i32, %arg1: i32) -> (i32, i32) {
    %c0_i32 = arith.constant 0 : i32
    return %arg0, %arg1 : i32, i32
  }
}

module attributes {stable_mosaic.version = 11 : i64} {
  func.func @_bconv_kernel(%arg0: i32, %arg1: i32, %arg2: memref<16x144xbf16, #tpu.memory_space<vmem>>, %arg3: memref<1x144x1024xbf16, #tpu.memory_space<vmem>>, %arg4: memref<16x1xf32, #tpu.memory_space<vmem>>, %arg5: memref<1x16x1024xf32, #tpu.memory_space<vmem>>) attributes {dimension_semantics = [#tpu.dimension_semantics<parallel>, #tpu.dimension_semantics<parallel>], iteration_bounds = array<i64: 2, 1>, scalar_prefetch = 0 : i64, scratch_operands = 0 : i64, tpu.core_type = #tpu.core_type<tc>, window_params = [{pipeline_mode = #tpu.pipeline_mode<synchronous>, transform_indices = @transform_0, window_bounds = array<i64: 16, 144>}, {transform_indices = @transform_1, window_bounds = array<i64: 1, 144, 1024>}, {pipeline_mode = #tpu.pipeline_mode<synchronous>, transform_indices = @transform_2, window_bounds = array<i64: 16, 1>}, {transform_indices = @transform_3, window_bounds = array<i64: 1, 16, 1024>}]} {
    %c0 = arith.constant 0 : index
    %c0_0 = arith.constant 0 : index
    %0 = vector.load %arg2[%c0, %c0_0] : memref<16x144xbf16, #tpu.memory_space<vmem>>, vector<16x144xbf16>
    %c0_1 = arith.constant 0 : index
    %c0_2 = arith.constant 0 : index
    %c0_3 = arith.constant 0 : index
    %1 = vector.load %arg3[%c0_1, %c0_2, %c0_3] : memref<1x144x1024xbf16, #tpu.memory_space<vmem>>, vector<1x144x1024xbf16>
    %2 = vector.shape_cast %1 : vector<1x144x1024xbf16> to vector<144x1024xbf16>
    %cst = arith.constant dense<0.000000e+00> : vector<16x1024xf32>
    %3 = tpu.matmul %0, %2, %cst {dimension_numbers = #tpu.dot_dimension_numbers<[1], [0], [0], [1], [0, 0, 1, 1], [], []>} : vector<16x144xbf16>, vector<144x1024xbf16>, vector<16x1024xf32> -> vector<16x1024xf32>
    %c0_4 = arith.constant 0 : index
    %c0_5 = arith.constant 0 : index
    %4 = vector.load %arg4[%c0_4, %c0_5] : memref<16x1xf32, #tpu.memory_space<vmem>>, vector<16x1xf32>
    %5 = vector.broadcast %4 : vector<16x1xf32> to vector<16x1024xf32>
    %6 = arith.addf %3, %5 : vector<16x1024xf32>
    %c0_6 = arith.constant 0 : index
    %c0_7 = arith.constant 0 : index
    %c0_8 = arith.constant 0 : index
    %7 = vector.load %arg5[%c0_6, %c0_7, %c0_8] : memref<1x16x1024xf32, #tpu.memory_space<vmem>>, vector<1x16x1024xf32>
    %8 = vector.shape_cast %7 : vector<1x16x1024xf32> to vector<16x1024xf32>
    %9 = vector.shape_cast %6 : vector<16x1024xf32> to vector<1x16x1024xf32>
    tpu.vector_store %arg5[%c0_6, %c0_7, %c0_8], %9 {strides = array<i32>} : memref<1x16x1024xf32, #tpu.memory_space<vmem>>, vector<1x16x1024xf32>,
    return
  }
  func.func @transform_0(%arg0: i32, %arg1: i32) -> (i32, i32) {
    %c0_i32 = arith.constant 0 : i32
    %c0_i32_0 = arith.constant 0 : i32
    %c0_i32_1 = arith.constant 0 : i32
    return %c0_i32, %c0_i32_0 : i32, i32
  }
  func.func @transform_1(%arg0: i32, %arg1: i32) -> (i32, i32, i32) {
    %c0_i32 = arith.constant 0 : i32
    %c0_i32_0 = arith.constant 0 : i32
    return %arg0, %c0_i32, %arg1 : i32, i32, i32
  }
  func.func @transform_2(%arg0: i32, %arg1: i32) -> (i32, i32) {
    %c0_i32 = arith.constant 0 : i32
    %c0_i32_0 = arith.constant 0 : i32
    %c0_i32_1 = arith.constant 0 : i32
    return %c0_i32, %c0_i32_0 : i32, i32
  }
  func.func @transform_3(%arg0: i32, %arg1: i32) -> (i32, i32, i32) {
    %c0_i32 = arith.constant 0 : i32
    %c0_i32_0 = arith.constant 0 : i32
    return %arg0, %c0_i32, %arg1 : i32, i32, i32
  }
}

module attributes {stable_mosaic.version = 11 : i64} {
  func.func @_instnorm_lrelu_kernel(%arg0: i32, %arg1: memref<32x1024xf32, #tpu.memory_space<vmem>>, %arg2: memref<32x1024xf32, #tpu.memory_space<vmem>>) attributes {dimension_semantics = [#tpu.dimension_semantics<parallel>], iteration_bounds = array<i64: 1>, scalar_prefetch = 0 : i64, scratch_operands = 0 : i64, tpu.core_type = #tpu.core_type<tc>, window_params = [{transform_indices = @transform_0, window_bounds = array<i64: 32, 1024>}, {transform_indices = @transform_1, window_bounds = array<i64: 32, 1024>}]} {
    %c0 = arith.constant 0 : index
    %c0_0 = arith.constant 0 : index
    %0 = vector.load %arg1[%c0, %c0_0] : memref<32x1024xf32, #tpu.memory_space<vmem>>, vector<32x1024xf32>
    %cst = arith.constant dense<0.000000e+00> : vector<32xf32>
    %1 = vector.multi_reduction <add>, %0, %cst [1] : vector<32x1024xf32> to vector<32xf32>
    %2 = vector.shape_cast %1 : vector<32xf32> to vector<32x1xf32>
    %cst_1 = arith.constant 1.024000e+03 : f32
    %3 = vector.broadcast %cst_1 : f32 to vector<32x1xf32>
    %4 = arith.divf %2, %3 : vector<32x1xf32>
    %5 = vector.broadcast %4 : vector<32x1xf32> to vector<32x1024xf32>
    %6 = arith.subf %0, %5 : vector<32x1024xf32>
    %7 = arith.mulf %6, %6 : vector<32x1024xf32>
    %cst_2 = arith.constant dense<0.000000e+00> : vector<32xf32>
    %8 = vector.multi_reduction <add>, %7, %cst_2 [1] : vector<32x1024xf32> to vector<32xf32>
    %9 = vector.shape_cast %8 : vector<32xf32> to vector<32x1xf32>
    %cst_3 = arith.constant 1.024000e+03 : f32
    %10 = vector.broadcast %cst_3 : f32 to vector<32x1xf32>
    %11 = arith.divf %9, %10 : vector<32x1xf32>
    %cst_4 = arith.constant 9.99999974E-6 : f32
    %12 = vector.broadcast %cst_4 : f32 to vector<32x1xf32>
    %13 = arith.addf %11, %12 : vector<32x1xf32>
    %14 = math.rsqrt %13 : vector<32x1xf32>
    %15 = vector.broadcast %14 : vector<32x1xf32> to vector<32x1024xf32>
    %16 = arith.mulf %6, %15 : vector<32x1024xf32>
    %cst_5 = arith.constant 0.000000e+00 : f32
    %17 = vector.broadcast %cst_5 : f32 to vector<32x1024xf32>
    %18 = arith.cmpf oge, %16, %17 : vector<32x1024xf32>
    %cst_6 = arith.constant 1.000000e-01 : f32
    %19 = vector.broadcast %cst_6 : f32 to vector<32x1024xf32>
    %20 = arith.mulf %19, %16 : vector<32x1024xf32>
    %21 = arith.select %18, %16, %20 : vector<32x1024xi1>, vector<32x1024xf32>
    %c0_7 = arith.constant 0 : index
    %c0_8 = arith.constant 0 : index
    %22 = vector.load %arg2[%c0_7, %c0_8] : memref<32x1024xf32, #tpu.memory_space<vmem>>, vector<32x1024xf32>
    tpu.vector_store %arg2[%c0_7, %c0_8], %21 {strides = array<i32>} : memref<32x1024xf32, #tpu.memory_space<vmem>>, vector<32x1024xf32>,
    return
  }
  func.func @transform_0(%arg0: i32) -> (i32, i32) {
    %c0_i32 = arith.constant 0 : i32
    %c0_i32_0 = arith.constant 0 : i32
    return %arg0, %c0_i32 : i32, i32
  }
  func.func @transform_1(%arg0: i32) -> (i32, i32) {
    %c0_i32 = arith.constant 0 : i32
    %c0_i32_0 = arith.constant 0 : i32
    return %arg0, %c0_i32 : i32, i32
  }
}

module attributes {stable_mosaic.version = 11 : i64} {
  func.func @_bconv_kernel(%arg0: i32, %arg1: i32, %arg2: memref<16x152xbf16, #tpu.memory_space<vmem>>, %arg3: memref<1x152x1024xbf16, #tpu.memory_space<vmem>>, %arg4: memref<16x1xf32, #tpu.memory_space<vmem>>, %arg5: memref<1x16x1024xf32, #tpu.memory_space<vmem>>) attributes {dimension_semantics = [#tpu.dimension_semantics<parallel>, #tpu.dimension_semantics<parallel>], iteration_bounds = array<i64: 2, 1>, scalar_prefetch = 0 : i64, scratch_operands = 0 : i64, tpu.core_type = #tpu.core_type<tc>, window_params = [{pipeline_mode = #tpu.pipeline_mode<synchronous>, transform_indices = @transform_0, window_bounds = array<i64: 16, 152>}, {transform_indices = @transform_1, window_bounds = array<i64: 1, 152, 1024>}, {pipeline_mode = #tpu.pipeline_mode<synchronous>, transform_indices = @transform_2, window_bounds = array<i64: 16, 1>}, {transform_indices = @transform_3, window_bounds = array<i64: 1, 16, 1024>}]} {
    %c0 = arith.constant 0 : index
    %c0_0 = arith.constant 0 : index
    %0 = vector.load %arg2[%c0, %c0_0] : memref<16x152xbf16, #tpu.memory_space<vmem>>, vector<16x152xbf16>
    %c0_1 = arith.constant 0 : index
    %c0_2 = arith.constant 0 : index
    %c0_3 = arith.constant 0 : index
    %1 = vector.load %arg3[%c0_1, %c0_2, %c0_3] : memref<1x152x1024xbf16, #tpu.memory_space<vmem>>, vector<1x152x1024xbf16>
    %2 = vector.shape_cast %1 : vector<1x152x1024xbf16> to vector<152x1024xbf16>
    %cst = arith.constant dense<0.000000e+00> : vector<16x1024xf32>
    %3 = tpu.matmul %0, %2, %cst {dimension_numbers = #tpu.dot_dimension_numbers<[1], [0], [0], [1], [0, 0, 1, 1], [], []>} : vector<16x152xbf16>, vector<152x1024xbf16>, vector<16x1024xf32> -> vector<16x1024xf32>
    %c0_4 = arith.constant 0 : index
    %c0_5 = arith.constant 0 : index
    %4 = vector.load %arg4[%c0_4, %c0_5] : memref<16x1xf32, #tpu.memory_space<vmem>>, vector<16x1xf32>
    %5 = vector.broadcast %4 : vector<16x1xf32> to vector<16x1024xf32>
    %6 = arith.addf %3, %5 : vector<16x1024xf32>
    %c0_6 = arith.constant 0 : index
    %c0_7 = arith.constant 0 : index
    %c0_8 = arith.constant 0 : index
    %7 = vector.load %arg5[%c0_6, %c0_7, %c0_8] : memref<1x16x1024xf32, #tpu.memory_space<vmem>>, vector<1x16x1024xf32>
    %8 = vector.shape_cast %7 : vector<1x16x1024xf32> to vector<16x1024xf32>
    %9 = vector.shape_cast %6 : vector<16x1024xf32> to vector<1x16x1024xf32>
    tpu.vector_store %arg5[%c0_6, %c0_7, %c0_8], %9 {strides = array<i32>} : memref<1x16x1024xf32, #tpu.memory_space<vmem>>, vector<1x16x1024xf32>,
    return
  }
  func.func @transform_0(%arg0: i32, %arg1: i32) -> (i32, i32) {
    %c0_i32 = arith.constant 0 : i32
    %c0_i32_0 = arith.constant 0 : i32
    %c0_i32_1 = arith.constant 0 : i32
    return %c0_i32, %c0_i32_0 : i32, i32
  }
  func.func @transform_1(%arg0: i32, %arg1: i32) -> (i32, i32, i32) {
    %c0_i32 = arith.constant 0 : i32
    %c0_i32_0 = arith.constant 0 : i32
    return %arg0, %c0_i32, %arg1 : i32, i32, i32
  }
  func.func @transform_2(%arg0: i32, %arg1: i32) -> (i32, i32) {
    %c0_i32 = arith.constant 0 : i32
    %c0_i32_0 = arith.constant 0 : i32
    %c0_i32_1 = arith.constant 0 : i32
    return %c0_i32, %c0_i32_0 : i32, i32
  }
  func.func @transform_3(%arg0: i32, %arg1: i32) -> (i32, i32, i32) {
    %c0_i32 = arith.constant 0 : i32
    %c0_i32_0 = arith.constant 0 : i32
    return %arg0, %c0_i32, %arg1 : i32, i32, i32
  }
}

</mosaic_0001>

<llo_original>
// kernel: resblock_decoder_forward.7
$region0: #{resblock_decoder_forward.7}
  #allocation0 [shape = 'u32[]', space=smem, size = 0x4, offset = 0x4, fixed_abs, tag = 'smem constant byte address 0x4 - core index']
  #allocation1 [shape = 'u32[72,128]{1,0:T(1,128)}', space=vmem, size = 0x9000, scoped, tag = 'internal scratch']
  %s0 = inlined_call_operand.vmem [shape: f32[32,256], index: 0, kind: input, shape index: {}]
  %s1 = inlined_call_operand.vmem [shape: f32[32,256], index: 1, kind: output, shape index: {}]
  %s2 = sld [smem:[#allocation0]]
  $region14: #{resblock_decoder_forward.7} parent=0
    _
  %s4 = ssub.s32 1, %s2
  %s5 = scalar_select 0, %s4, %s2
  // Predicated region
  $region2: #{resblock_decoder_forward.7} parent=0 // pred_check
    _
  $region3: #{resblock_decoder_forward.7} parent=0 // pred_check_branch
    %7 = sbr.rel (0) target = $region5
  $region4: #{resblock_decoder_forward.7} parent=0 // pred_region
    _
  $region5: #{resblock_decoder_forward.7} parent=0 // pred_fallthru
    _
  %v8 = vld [vmem:[%s0] sm:$0xff]
  %v9 = vld [vmem:[%s0 + $0x8] sm:$0xff]
  %v10 = vld [vmem:[%s0 + $0x10] sm:$0xff]
  %v11 = vld [vmem:[%s0 + $0x18] sm:$0xff]
  %v12 = vld [vmem:[%s0 + $0x20] sm:$0xff]
  %v13 = vld [vmem:[%s0 + $0x28] sm:$0xff]
  %v14 = vld [vmem:[%s0 + $0x30] sm:$0xff]
  %v15 = vld [vmem:[%s0 + $0x38] sm:$0xff]
  %v16 = vadd.f32 %v8, %v9
  %17 = vadd.xlane.f32.xlu0 %v16
  %v18 = vpop.xlane.xlu0 %17
  %v19 = vadd.f32 %v10, %v11
  %20 = vadd.xlane.f32.xlu0 %v19
  %v21 = vpop.xlane.xlu0 %20
  %v22 = vadd.f32 %v12, %v13
  %23 = vadd.xlane.f32.xlu0 %v22
  %v24 = vpop.xlane.xlu0 %23
  %v25 = vadd.f32 %v14, %v15
  %26 = vadd.xlane.f32.xlu0 %v25
  %v27 = vpop.xlane.xlu0 %26
  %v28 = vrcp.pop 256.0
  %v29 = vmul.f32 256.0, %v28
  %v30 = vsub.f32 1.0, %v29
  %v31 = vmul.f32 %v28, %v30
  %v32 = vadd.f32 %v28, %v31
  %vm33 = vweird.f32 %v28
  %v34 = vsel %vm33, %v28, %v32
  %v35 = vmul.f32 %v18, %v34
  %v36 = vmul.f32 %v21, %v34
  %v37 = vmul.f32 %v24, %v34
  %v38 = vmul.f32 %v27, %v34
  %v39 = vsub.f32 %v8, %v35
  %v40 = vsub.f32 %v9, %v35
  %v41 = vsub.f32 %v10, %v36
  %v42 = vsub.f32 %v11, %v36
  %v43 = vsub.f32 %v12, %v37
  %v44 = vsub.f32 %v13, %v37
  %v45 = vsub.f32 %v14, %v38
  %v46 = vsub.f32 %v15, %v38
  %v47 = vmul.f32 %v39, %v39
  %v48 = vmul.f32 %v40, %v40
  %v49 = vmul.f32 %v41, %v41
  %v50 = vmul.f32 %v42, %v42
  %v51 = vmul.f32 %v43, %v43
  %v52 = vmul.f32 %v44, %v44
  %v53 = vmul.f32 %v45, %v45
  %v54 = vmul.f32 %v46, %v46
  %v55 = vadd.f32 %v47, %v48
  %56 = vadd.xlane.f32.xlu0 %v55
  %v57 = vpop.xlane.xlu0 %56
  %v58 = vadd.f32 %v49, %v50
  %59 = vadd.xlane.f32.xlu0 %v58
  %v60 = vpop.xlane.xlu0 %59
  %v61 = vadd.f32 %v51, %v52
  %62 = vadd.xlane.f32.xlu0 %v61
  %v63 = vpop.xlane.xlu0 %62
  %v64 = vadd.f32 %v53, %v54
  %65 = vadd.xlane.f32.xlu0 %v64
  %v66 = vpop.xlane.xlu0 %65
  %v67 = vmul.f32 %v57, %v34
  %v68 = vmul.f32 %v60, %v34
  %v69 = vmul.f32 %v63, %v34
  %v70 = vmul.f32 %v66, %v34
  %v71 = vadd.f32 %v67, 1e-05
  %v72 = vadd.f32 %v68, 1e-05
  %v73 = vadd.f32 %v69, 1e-05
  %v74 = vadd.f32 %v70, 1e-05
  %v75 = vrsqrt.pop %v71
  %v76 = vmul.f32 %v75, %v71
  %v77 = vmul.f32 %v76, %v75
  %v78 = vmul.f32 0.5, %v77
  %v79 = vsub.f32 1.5, %v78
  %v80 = vmul.f32 %v75, %v79
  %vm81 = vweird.f32 %v71
  %vm82 = vweird.f32 %v75
  %vm83 = vmor %vm81, %vm82
  %v84 = vsel %vm83, %v75, %v80
  %v85 = vrsqrt.pop %v72
  %v86 = vmul.f32 %v85, %v72
  %v87 = vmul.f32 %v86, %v85
  %v88 = vmul.f32 0.5, %v87
  %v89 = vsub.f32 1.5, %v88
  %v90 = vmul.f32 %v85, %v89
  %vm91 = vweird.f32 %v72
  %vm92 = vweird.f32 %v85
  %vm93 = vmor %vm91, %vm92
  %v94 = vsel %vm93, %v85, %v90
  %v95 = vrsqrt.pop %v73
  %v96 = vmul.f32 %v95, %v73
  %v97 = vmul.f32 %v96, %v95
  %v98 = vmul.f32 0.5, %v97
  %v99 = vsub.f32 1.5, %v98
  %v100 = vmul.f32 %v95, %v99
  %vm101 = vweird.f32 %v73
  %vm102 = vweird.f32 %v95
  %vm103 = vmor %vm101, %vm102
  %v104 = vsel %vm103, %v95, %v100
  %v105 = vrsqrt.pop %v74
  %v106 = vmul.f32 %v105, %v74
  %v107 = vmul.f32 %v106, %v105
  %v108 = vmul.f32 0.5, %v107
  %v109 = vsub.f32 1.5, %v108
  %v110 = vmul.f32 %v105, %v109
  %vm111 = vweird.f32 %v74
  %vm112 = vweird.f32 %v105
  %vm113 = vmor %vm111, %vm112
  %v114 = vsel %vm113, %v105, %v110
  %v115 = vmul.f32 %v39, %v84
  %v116 = vmul.f32 %v40, %v84
  %v117 = vmul.f32 %v41, %v94
  %v118 = vmul.f32 %v42, %v94
  %v119 = vmul.f32 %v43, %v104
  %v120 = vmul.f32 %v44, %v104
  %v121 = vmul.f32 %v45, %v114
  %v122 = vmul.f32 %v46, %v114
  %vm123 = vcmp.ge.f32.partialorder %v115, 0.0
  %vm124 = vcmp.ge.f32.partialorder %v116, 0.0
  %vm125 = vcmp.ge.f32.partialorder %v117, 0.0
  %vm126 = vcmp.ge.f32.partialorder %v118, 0.0
  %vm127 = vcmp.ge.f32.partialorder %v119, 0.0
  %vm128 = vcmp.ge.f32.partialorder %v120, 0.0
  %vm129 = vcmp.ge.f32.partialorder %v121, 0.0
  %vm130 = vcmp.ge.f32.partialorder %v122, 0.0
  %v131 = vmul.f32 %v115, 0.1
  %v132 = vmul.f32 %v116, 0.1
  %v133 = vmul.f32 %v117, 0.1
  %v134 = vmul.f32 %v118, 0.1
  %v135 = vmul.f32 %v119, 0.1
  %v136 = vmul.f32 %v120, 0.1
  %v137 = vmul.f32 %v121, 0.1
  %v138 = vmul.f32 %v122, 0.1
  %v139 = vsel %vm123, %v115, %v131
  %v140 = vsel %vm124, %v116, %v132
  %v141 = vsel %vm125, %v117, %v133
  %v142 = vsel %vm126, %v118, %v134
  %v143 = vsel %vm127, %v119, %v135
  %v144 = vsel %vm128, %v120, %v136
  %v145 = vsel %vm129, %v121, %v137
  %v146 = vsel %vm130, %v122, %v138
  %147 = vst [vmem:[%s1] sm:$0xff] %v139
  %148 = vst [vmem:[%s1 + $0x8] sm:$0xff] %v140
  %149 = vst [vmem:[%s1 + $0x10] sm:$0xff] %v141
  %150 = vst [vmem:[%s1 + $0x18] sm:$0xff] %v142
  %151 = vst [vmem:[%s1 + $0x20] sm:$0xff] %v143
  %152 = vst [vmem:[%s1 + $0x28] sm:$0xff] %v144
  %153 = vst [vmem:[%s1 + $0x30] sm:$0xff] %v145
  %154 = vst [vmem:[%s1 + $0x38] sm:$0xff] %v146
  // Predicated region
  $region6: #{resblock_decoder_forward.7} parent=0 // pred_check
    _
  $region7: #{resblock_decoder_forward.7} parent=0 // pred_check_branch
    %156 = sbr.rel (0) target = $region9
  $region8: #{resblock_decoder_forward.7} parent=0 // pred_region
    _
  $region9: #{resblock_decoder_forward.7} parent=0 // pred_fallthru
    _
  // Predicated region
  $region10: #{resblock_decoder_forward.7} parent=0 // pred_check
    _
  $region11: #{resblock_decoder_forward.7} parent=0 // pred_check_branch
    %158 = sbr.rel (0) target = $region13
  $region12: #{resblock_decoder_forward.7} parent=0 // pred_region
    _
  $region13: #{resblock_decoder_forward.7} parent=0 // pred_fallthru
    _

// kernel: resblock_decoder_forward.8
$region0: #{resblock_decoder_forward.8}
  #allocation0 [shape = 'u32[]', space=smem, size = 0x4, offset = 0x4, fixed_abs, tag = 'smem constant byte address 0x4 - core index']
  #allocation1 [shape = 'u32[72,128]{1,0:T(1,128)}', space=vmem, size = 0x9000, scoped, tag = 'internal scratch']
  %s0 = inlined_call_operand.vmem [shape: bf16[32,256], index: 0, kind: input, shape index: {}]
  %s1 = inlined_call_operand.vmem [shape: bf16[256,1024], index: 1, kind: input, shape index: {}]
  %s2 = inlined_call_operand.vmem [shape: f32[1,1024], index: 2, kind: input, shape index: {}]
  %s3 = inlined_call_operand.vmem [shape: f32[32,1024], index: 3, kind: output, shape index: {}]
  %s4 = sld [smem:[#allocation0]]
  $region22: #{resblock_decoder_forward.8} parent=0
    _
  %s6 = ssub.s32 1, %s4
  %s7 = scalar_select 0, %s6, %s4
  // Predicated region
  $region2: #{resblock_decoder_forward.8} parent=0 // pred_check
    _
  $region3: #{resblock_decoder_forward.8} parent=0 // pred_check_branch
    %9 = sbr.rel (0) target = $region5
  $region4: #{resblock_decoder_forward.8} parent=0 // pred_region
    _
  $region5: #{resblock_decoder_forward.8} parent=0 // pred_fallthru
    _
  // Predicated region
  $region6: #{resblock_decoder_forward.8} parent=0 // pred_check
    _
  $region7: #{resblock_decoder_forward.8} parent=0 // pred_check_branch
    %11 = sbr.rel (0) target = $region9
  $region8: #{resblock_decoder_forward.8} parent=0 // pred_region
    _
  $region9: #{resblock_decoder_forward.8} parent=0 // pred_fallthru
    _
  // Predicated region
  $region10: #{resblock_decoder_forward.8} parent=0 // pred_check
    _
  $region11: #{resblock_decoder_forward.8} parent=0 // pred_check_branch
    %13 = sbr.rel (0) target = $region13
  $region12: #{resblock_decoder_forward.8} parent=0 // pred_region
    _
  $region13: #{resblock_decoder_forward.8} parent=0 // pred_fallthru
    _
  %v14 = vld [vmem:[%s0] sm:$0xff]
  %v15 = vld [vmem:[%s0 + $0x8] sm:$0xff]
  %v16 = vld [vmem:[%s0 + $0x10] sm:$0xff]
  %v17 = vld [vmem:[%s0 + $0x18] sm:$0xff]
  %v18 = vld [vmem:[%s1] sm:$0xff]
  %v19 = vld [vmem:[%s1 + $0x8] sm:$0xff]
  %v20 = vld [vmem:[%s1 + $0x10] sm:$0xff]
  %v21 = vld [vmem:[%s1 + $0x18] sm:$0xff]
  %v22 = vld [vmem:[%s1 + $0x20] sm:$0xff]
  %v23 = vld [vmem:[%s1 + $0x28] sm:$0xff]
  %v24 = vld [vmem:[%s1 + $0x30] sm:$0xff]
  %v25 = vld [vmem:[%s1 + $0x38] sm:$0xff]
  %v26 = vld [vmem:[%s1 + $0x40] sm:$0xff]
  %v27 = vld [vmem:[%s1 + $0x48] sm:$0xff]
  %v28 = vld [vmem:[%s1 + $0x50] sm:$0xff]
  %v29 = vld [vmem:[%s1 + $0x58] sm:$0xff]
  %v30 = vld [vmem:[%s1 + $0x60] sm:$0xff]
  %v31 = vld [vmem:[%s1 + $0x68] sm:$0xff]
  %v32 = vld [vmem:[%s1 + $0x70] sm:$0xff]
  %v33 = vld [vmem:[%s1 + $0x78] sm:$0xff]
  %v34 = vld [vmem:[%s1 + $0x80] sm:$0xff]
  %v35 = vld [vmem:[%s1 + $0x88] sm:$0xff]
  %v36 = vld [vmem:[%s1 + $0x90] sm:$0xff]
  %v37 = vld [vmem:[%s1 + $0x98] sm:$0xff]
  %v38 = vld [vmem:[%s1 + $0xa0] sm:$0xff]
  %v39 = vld [vmem:[%s1 + $0xa8] sm:$0xff]
  %v40 = vld [vmem:[%s1 + $0xb0] sm:$0xff]
  %v41 = vld [vmem:[%s1 + $0xb8] sm:$0xff]
  %v42 = vld [vmem:[%s1 + $0xc0] sm:$0xff]
  %v43 = vld [vmem:[%s1 + $0xc8] sm:$0xff]
  %v44 = vld [vmem:[%s1 + $0xd0] sm:$0xff]
  %v45 = vld [vmem:[%s1 + $0xd8] sm:$0xff]
  %v46 = vld [vmem:[%s1 + $0xe0] sm:$0xff]
  %v47 = vld [vmem:[%s1 + $0xe8] sm:$0xff]
  %v48 = vld [vmem:[%s1 + $0xf0] sm:$0xff]
  %v49 = vld [vmem:[%s1 + $0xf8] sm:$0xff]
  %v50 = vld [vmem:[%s1 + $0x100] sm:$0xff]
  %v51 = vld [vmem:[%s1 + $0x108] sm:$0xff]
  %v52 = vld [vmem:[%s1 + $0x110] sm:$0xff]
  %v53 = vld [vmem:[%s1 + $0x118] sm:$0xff]
  %v54 = vld [vmem:[%s1 + $0x120] sm:$0xff]
  %v55 = vld [vmem:[%s1 + $0x128] sm:$0xff]
  %v56 = vld [vmem:[%s1 + $0x130] sm:$0xff]
  %v57 = vld [vmem:[%s1 + $0x138] sm:$0xff]
  %v58 = vld [vmem:[%s1 + $0x140] sm:$0xff]
  %v59 = vld [vmem:[%s1 + $0x148] sm:$0xff]
  %v60 = vld [vmem:[%s1 + $0x150] sm:$0xff]
  %v61 = vld [vmem:[%s1 + $0x158] sm:$0xff]
  %v62 = vld [vmem:[%s1 + $0x160] sm:$0xff]
  %v63 = vld [vmem:[%s1 + $0x168] sm:$0xff]
  %v64 = vld [vmem:[%s1 + $0x170] sm:$0xff]
  %v65 = vld [vmem:[%s1 + $0x178] sm:$0xff]
  %v66 = vld [vmem:[%s1 + $0x180] sm:$0xff]
  %v67 = vld [vmem:[%s1 + $0x188] sm:$0xff]
  %v68 = vld [vmem:[%s1 + $0x190] sm:$0xff]
  %v69 = vld [vmem:[%s1 + $0x198] sm:$0xff]
  %v70 = vld [vmem:[%s1 + $0x1a0] sm:$0xff]
  %v71 = vld [vmem:[%s1 + $0x1a8] sm:$0xff]
  %v72 = vld [vmem:[%s1 + $0x1b0] sm:$0xff]
  %v73 = vld [vmem:[%s1 + $0x1b8] sm:$0xff]
  %v74 = vld [vmem:[%s1 + $0x1c0] sm:$0xff]
  %v75 = vld [vmem:[%s1 + $0x1c8] sm:$0xff]
  %v76 = vld [vmem:[%s1 + $0x1d0] sm:$0xff]
  %v77 = vld [vmem:[%s1 + $0x1d8] sm:$0xff]
  %v78 = vld [vmem:[%s1 + $0x1e0] sm:$0xff]
  %v79 = vld [vmem:[%s1 + $0x1e8] sm:$0xff]
  %v80 = vld [vmem:[%s1 + $0x1f0] sm:$0xff]
  %v81 = vld [vmem:[%s1 + $0x1f8] sm:$0xff]
  %v82 = vld [vmem:[%s1 + $0x200] sm:$0xff]
  %v83 = vld [vmem:[%s1 + $0x208] sm:$0xff]
  %v84 = vld [vmem:[%s1 + $0x210] sm:$0xff]
  %v85 = vld [vmem:[%s1 + $0x218] sm:$0xff]
  %v86 = vld [vmem:[%s1 + $0x220] sm:$0xff]
  %v87 = vld [vmem:[%s1 + $0x228] sm:$0xff]
  %v88 = vld [vmem:[%s1 + $0x230] sm:$0xff]
  %v89 = vld [vmem:[%s1 + $0x238] sm:$0xff]
  %v90 = vld [vmem:[%s1 + $0x240] sm:$0xff]
  %v91 = vld [vmem:[%s1 + $0x248] sm:$0xff]
  %v92 = vld [vmem:[%s1 + $0x250] sm:$0xff]
  %v93 = vld [vmem:[%s1 + $0x258] sm:$0xff]
  %v94 = vld [vmem:[%s1 + $0x260] sm:$0xff]
  %v95 = vld [vmem:[%s1 + $0x268] sm:$0xff]
  %v96 = vld [vmem:[%s1 + $0x270] sm:$0xff]
  %v97 = vld [vmem:[%s1 + $0x278] sm:$0xff]
  %v98 = vld [vmem:[%s1 + $0x280] sm:$0xff]
  %v99 = vld [vmem:[%s1 + $0x288] sm:$0xff]
  %v100 = vld [vmem:[%s1 + $0x290] sm:$0xff]
  %v101 = vld [vmem:[%s1 + $0x298] sm:$0xff]
  %v102 = vld [vmem:[%s1 + $0x2a0] sm:$0xff]
  %v103 = vld [vmem:[%s1 + $0x2a8] sm:$0xff]
  %v104 = vld [vmem:[%s1 + $0x2b0] sm:$0xff]
  %v105 = vld [vmem:[%s1 + $0x2b8] sm:$0xff]
  %v106 = vld [vmem:[%s1 + $0x2c0] sm:$0xff]
  %v107 = vld [vmem:[%s1 + $0x2c8] sm:$0xff]
  %v108 = vld [vmem:[%s1 + $0x2d0] sm:$0xff]
  %v109 = vld [vmem:[%s1 + $0x2d8] sm:$0xff]
  %v110 = vld [vmem:[%s1 + $0x2e0] sm:$0xff]
  %v111 = vld [vmem:[%s1 + $0x2e8] sm:$0xff]
  %v112 = vld [vmem:[%s1 + $0x2f0] sm:$0xff]
  %v113 = vld [vmem:[%s1 + $0x2f8] sm:$0xff]
  %v114 = vld [vmem:[%s1 + $0x300] sm:$0xff]
  %v115 = vld [vmem:[%s1 + $0x308] sm:$0xff]
  %v116 = vld [vmem:[%s1 + $0x310] sm:$0xff]
  %v117 = vld [vmem:[%s1 + $0x318] sm:$0xff]
  %v118 = vld [vmem:[%s1 + $0x320] sm:$0xff]
  %v119 = vld [vmem:[%s1 + $0x328] sm:$0xff]
  %v120 = vld [vmem:[%s1 + $0x330] sm:$0xff]
  %v121 = vld [vmem:[%s1 + $0x338] sm:$0xff]
  %v122 = vld [vmem:[%s1 + $0x340] sm:$0xff]
  %v123 = vld [vmem:[%s1 + $0x348] sm:$0xff]
  %v124 = vld [vmem:[%s1 + $0x350] sm:$0xff]
  %v125 = vld [vmem:[%s1 + $0x358] sm:$0xff]
  %v126 = vld [vmem:[%s1 + $0x360] sm:$0xff]
  %v127 = vld [vmem:[%s1 + $0x368] sm:$0xff]
  %v128 = vld [vmem:[%s1 + $0x370] sm:$0xff]
  %v129 = vld [vmem:[%s1 + $0x378] sm:$0xff]
  %v130 = vld [vmem:[%s1 + $0x380] sm:$0xff]
  %v131 = vld [vmem:[%s1 + $0x388] sm:$0xff]
  %v132 = vld [vmem:[%s1 + $0x390] sm:$0xff]
  %v133 = vld [vmem:[%s1 + $0x398] sm:$0xff]
  %v134 = vld [vmem:[%s1 + $0x3a0] sm:$0xff]
  %v135 = vld [vmem:[%s1 + $0x3a8] sm:$0xff]
  %v136 = vld [vmem:[%s1 + $0x3b0] sm:$0xff]
  %v137 = vld [vmem:[%s1 + $0x3b8] sm:$0xff]
  %v138 = vld [vmem:[%s1 + $0x3c0] sm:$0xff]
  %v139 = vld [vmem:[%s1 + $0x3c8] sm:$0xff]
  %v140 = vld [vmem:[%s1 + $0x3d0] sm:$0xff]
  %v141 = vld [vmem:[%s1 + $0x3d8] sm:$0xff]
  %v142 = vld [vmem:[%s1 + $0x3e0] sm:$0xff]
  %v143 = vld [vmem:[%s1 + $0x3e8] sm:$0xff]
  %v144 = vld [vmem:[%s1 + $0x3f0] sm:$0xff]
  %v145 = vld [vmem:[%s1 + $0x3f8] sm:$0xff]
  %v146 = vld [vmem:[%s2] sm:$0xff]
  %v148 = vperm.slane %v146, 0
  %v149 = vperm.slane %v146, 1
  %v150 = vperm.slane %v146, 2
  %v151 = vperm.slane %v146, 3
  %v152 = vperm.slane %v146, 4
  %v153 = vperm.slane %v146, 5
  %v154 = vperm.slane %v146, 6
  %v155 = vperm.slane %v146, 7
  %v168 = vunpack.c.l.b16 %v14
  %v169 = vunpack.c.h.b16 %v14
  %v170 = vunpack.c.l.b16 %v15
  %v171 = vunpack.c.h.b16 %v15
  %v172 = vunpack.c.l.b16 %v16
  %v173 = vunpack.c.h.b16 %v16
  %v174 = vunpack.c.l.b16 %v17
  %v175 = vunpack.c.h.b16 %v17
  %v176 = vpack.c.b16 %v170, %v168
  %v177 = vpack.c.b16 %v171, %v169
  %v178 = vpack.c.b16 %v174, %v172
  %v179 = vpack.c.b16 %v175, %v173
  %v312 = vunpack.c.l.b16 %v18
  %v313 = vunpack.c.h.b16 %v18
  %v314 = vunpack.c.l.b16 %v19
  %v315 = vunpack.c.h.b16 %v19
  %v316 = vunpack.c.l.b16 %v20
  %v317 = vunpack.c.h.b16 %v20
  %v318 = vunpack.c.l.b16 %v21
  %v319 = vunpack.c.h.b16 %v21
  %v320 = vunpack.c.l.b16 %v22
  %v321 = vunpack.c.h.b16 %v22
  %v322 = vunpack.c.l.b16 %v23
  %v323 = vunpack.c.h.b16 %v23
  %v324 = vunpack.c.l.b16 %v24
  %v325 = vunpack.c.h.b16 %v24
  %v326 = vunpack.c.l.b16 %v25
  %v327 = vunpack.c.h.b16 %v25
  %v328 = vunpack.c.l.b16 %v26
  %v329 = vunpack.c.h.b16 %v26
  %v330 = vunpack.c.l.b16 %v27
  %v331 = vunpack.c.h.b16 %v27
  %v332 = vunpack.c.l.b16 %v28
  %v333 = vunpack.c.h.b16 %v28
  %v334 = vunpack.c.l.b16 %v29
  %v335 = vunpack.c.h.b16 %v29
  %v336 = vunpack.c.l.b16 %v30
  %v337 = vunpack.c.h.b16 %v30
  %v338 = vunpack.c.l.b16 %v31
  %v339 = vunpack.c.h.b16 %v31
  %v340 = vunpack.c.l.b16 %v32
  %v341 = vunpack.c.h.b16 %v32
  %v342 = vunpack.c.l.b16 %v33
  %v343 = vunpack.c.h.b16 %v33
  %v344 = vunpack.c.l.b16 %v34
  %v345 = vunpack.c.h.b16 %v34
  %v346 = vunpack.c.l.b16 %v35
  %v347 = vunpack.c.h.b16 %v35
  %v348 = vunpack.c.l.b16 %v36
  %v349 = vunpack.c.h.b16 %v36
  %v350 = vunpack.c.l.b16 %v37
  %v351 = vunpack.c.h.b16 %v37
  %v352 = vunpack.c.l.b16 %v38
  %v353 = vunpack.c.h.b16 %v38
  %v354 = vunpack.c.l.b16 %v39
  %v355 = vunpack.c.h.b16 %v39
  %v356 = vunpack.c.l.b16 %v40
  %v357 = vunpack.c.h.b16 %v40
  %v358 = vunpack.c.l.b16 %v41
  %v359 = vunpack.c.h.b16 %v41
  %v360 = vunpack.c.l.b16 %v42
  %v361 = vunpack.c.h.b16 %v42
  %v362 = vunpack.c.l.b16 %v43
  %v363 = vunpack.c.h.b16 %v43
  %v364 = vunpack.c.l.b16 %v44
  %v365 = vunpack.c.h.b16 %v44
  %v366 = vunpack.c.l.b16 %v45
  %v367 = vunpack.c.h.b16 %v45
  %v368 = vunpack.c.l.b16 %v46
  %v369 = vunpack.c.h.b16 %v46
  %v370 = vunpack.c.l.b16 %v47
  %v371 = vunpack.c.h.b16 %v47
  %v372 = vunpack.c.l.b16 %v48
  %v373 = vunpack.c.h.b16 %v48
  %v374 = vunpack.c.l.b16 %v49
  %v375 = vunpack.c.h.b16 %v49
  %v376 = vunpack.c.l.b16 %v50
  %v377 = vunpack.c.h.b16 %v50
  %v378 = vunpack.c.l.b16 %v51
  %v379 = vunpack.c.h.b16 %v51
  %v380 = vunpack.c.l.b16 %v52
  %v381 = vunpack.c.h.b16 %v52
  %v382 = vunpack.c.l.b16 %v53
  %v383 = vunpack.c.h.b16 %v53
  %v384 = vunpack.c.l.b16 %v54
  %v385 = vunpack.c.h.b16 %v54
  %v386 = vunpack.c.l.b16 %v55
  %v387 = vunpack.c.h.b16 %v55
  %v388 = vunpack.c.l.b16 %v56
  %v389 = vunpack.c.h.b16 %v56
  %v390 = vunpack.c.l.b16 %v57
  %v391 = vunpack.c.h.b16 %v57
  %v392 = vunpack.c.l.b16 %v58
  %v393 = vunpack.c.h.b16 %v58
  %v394 = vunpack.c.l.b16 %v59
  %v395 = vunpack.c.h.b16 %v59
  %v396 = vunpack.c.l.b16 %v60
  %v397 = vunpack.c.h.b16 %v60
  %v398 = vunpack.c.l.b16 %v61
  %v399 = vunpack.c.h.b16 %v61
  %v400 = vunpack.c.l.b16 %v62
  %v401 = vunpack.c.h.b16 %v62
  %v402 = vunpack.c.l.b16 %v63
  %v403 = vunpack.c.h.b16 %v63
  %v404 = vunpack.c.l.b16 %v64
  %v405 = vunpack.c.h.b16 %v64
  %v406 = vunpack.c.l.b16 %v65
  %v407 = vunpack.c.h.b16 %v65
  %v408 = vunpack.c.l.b16 %v66
  %v409 = vunpack.c.h.b16 %v66
  %v410 = vunpack.c.l.b16 %v67
  %v411 = vunpack.c.h.b16 %v67
  %v412 = vunpack.c.l.b16 %v68
  %v413 = vunpack.c.h.b16 %v68
  %v414 = vunpack.c.l.b16 %v69
  %v415 = vunpack.c.h.b16 %v69
  %v416 = vunpack.c.l.b16 %v70
  %v417 = vunpack.c.h.b16 %v70
  %v418 = vunpack.c.l.b16 %v71
  %v419 = vunpack.c.h.b16 %v71
  %v420 = vunpack.c.l.b16 %v72
  %v421 = vunpack.c.h.b16 %v72
  %v422 = vunpack.c.l.b16 %v73
  %v423 = vunpack.c.h.b16 %v73
  %v424 = vunpack.c.l.b16 %v74
  %v425 = vunpack.c.h.b16 %v74
  %v426 = vunpack.c.l.b16 %v75
  %v427 = vunpack.c.h.b16 %v75
  %v428 = vunpack.c.l.b16 %v76
  %v429 = vunpack.c.h.b16 %v76
  %v430 = vunpack.c.l.b16 %v77
  %v431 = vunpack.c.h.b16 %v77
  %v432 = vunpack.c.l.b16 %v78
  %v433 = vunpack.c.h.b16 %v78
  %v434 = vunpack.c.l.b16 %v79
  %v435 = vunpack.c.h.b16 %v79
  %v436 = vunpack.c.l.b16 %v80
  %v437 = vunpack.c.h.b16 %v80
  %v438 = vunpack.c.l.b16 %v81
  %v439 = vunpack.c.h.b16 %v81
  %v440 = vunpack.c.l.b16 %v82
  %v441 = vunpack.c.h.b16 %v82
  %v442 = vunpack.c.l.b16 %v83
  %v443 = vunpack.c.h.b16 %v83
  %v444 = vunpack.c.l.b16 %v84
  %v445 = vunpack.c.h.b16 %v84
  %v446 = vunpack.c.l.b16 %v85
  %v447 = vunpack.c.h.b16 %v85
  %v448 = vunpack.c.l.b16 %v86
  %v449 = vunpack.c.h.b16 %v86
  %v450 = vunpack.c.l.b16 %v87
  %v451 = vunpack.c.h.b16 %v87
  %v452 = vunpack.c.l.b16 %v88
  %v453 = vunpack.c.h.b16 %v88
  %v454 = vunpack.c.l.b16 %v89
  %v455 = vunpack.c.h.b16 %v89
  %v456 = vunpack.c.l.b16 %v90
  %v457 = vunpack.c.h.b16 %v90
  %v458 = vunpack.c.l.b16 %v91
  %v459 = vunpack.c.h.b16 %v91
  %v460 = vunpack.c.l.b16 %v92
  %v461 = vunpack.c.h.b16 %v92
  %v462 = vunpack.c.l.b16 %v93
  %v463 = vunpack.c.h.b16 %v93
  %v464 = vunpack.c.l.b16 %v94
  %v465 = vunpack.c.h.b16 %v94
  %v466 = vunpack.c.l.b16 %v95
  %v467 = vunpack.c.h.b16 %v95
  %v468 = vunpack.c.l.b16 %v96
  %v469 = vunpack.c.h.b16 %v96
  %v470 = vunpack.c.l.b16 %v97
  %v471 = vunpack.c.h.b16 %v97
  %v472 = vunpack.c.l.b16 %v98
  %v473 = vunpack.c.h.b16 %v98
  %v474 = vunpack.c.l.b16 %v99
  %v475 = vunpack.c.h.b16 %v99
  %v476 = vunpack.c.l.b16 %v100
  %v477 = vunpack.c.h.b16 %v100
  %v478 = vunpack.c.l.b16 %v101
  %v479 = vunpack.c.h.b16 %v101
  %v480 = vunpack.c.l.b16 %v102
  %v481 = vunpack.c.h.b16 %v102
  %v482 = vunpack.c.l.b16 %v103
  %v483 = vunpack.c.h.b16 %v103
  %v484 = vunpack.c.l.b16 %v104
  %v485 = vunpack.c.h.b16 %v104
  %v486 = vunpack.c.l.b16 %v105
  %v487 = vunpack.c.h.b16 %v105
  %v488 = vunpack.c.l.b16 %v106
  %v489 = vunpack.c.h.b16 %v106
  %v490 = vunpack.c.l.b16 %v107
  %v491 = vunpack.c.h.b16 %v107
  %v492 = vunpack.c.l.b16 %v108
  %v493 = vunpack.c.h.b16 %v108
  %v494 = vunpack.c.l.b16 %v109
  %v495 = vunpack.c.h.b16 %v109
  %v496 = vunpack.c.l.b16 %v110
  %v497 = vunpack.c.h.b16 %v110
  %v498 = vunpack.c.l.b16 %v111
  %v499 = vunpack.c.h.b16 %v111
  %v500 = vunpack.c.l.b16 %v112
  %v501 = vunpack.c.h.b16 %v112
  %v502 = vunpack.c.l.b16 %v113
  %v503 = vunpack.c.h.b16 %v113
  %v504 = vunpack.c.l.b16 %v114
  %v505 = vunpack.c.h.b16 %v114
  %v506 = vunpack.c.l.b16 %v115
  %v507 = vunpack.c.h.b16 %v115
  %v508 = vunpack.c.l.b16 %v116
  %v509 = vunpack.c.h.b16 %v116
  %v510 = vunpack.c.l.b16 %v117
  %v511 = vunpack.c.h.b16 %v117
  %v512 = vunpack.c.l.b16 %v118
  %v513 = vunpack.c.h.b16 %v118
  %v514 = vunpack.c.l.b16 %v119
  %v515 = vunpack.c.h.b16 %v119
  %v516 = vunpack.c.l.b16 %v120
  %v517 = vunpack.c.h.b16 %v120
  %v518 = vunpack.c.l.b16 %v121
  %v519 = vunpack.c.h.b16 %v121
  %v520 = vunpack.c.l.b16 %v122
  %v521 = vunpack.c.h.b16 %v122
  %v522 = vunpack.c.l.b16 %v123
  %v523 = vunpack.c.h.b16 %v123
  %v524 = vunpack.c.l.b16 %v124
  %v525 = vunpack.c.h.b16 %v124
  %v526 = vunpack.c.l.b16 %v125
  %v527 = vunpack.c.h.b16 %v125
  %v528 = vunpack.c.l.b16 %v126
  %v529 = vunpack.c.h.b16 %v126
  %v530 = vunpack.c.l.b16 %v127
  %v531 = vunpack.c.h.b16 %v127
  %v532 = vunpack.c.l.b16 %v128
  %v533 = vunpack.c.h.b16 %v128
  %v534 = vunpack.c.l.b16 %v129
  %v535 = vunpack.c.h.b16 %v129
  %v536 = vunpack.c.l.b16 %v130
  %v537 = vunpack.c.h.b16 %v130
  %v538 = vunpack.c.l.b16 %v131
  %v539 = vunpack.c.h.b16 %v131
  %v540 = vunpack.c.l.b16 %v132
  %v541 = vunpack.c.h.b16 %v132
  %v542 = vunpack.c.l.b16 %v133
  %v543 = vunpack.c.h.b16 %v133
  %v544 = vunpack.c.l.b16 %v134
  %v545 = vunpack.c.h.b16 %v134
  %v546 = vunpack.c.l.b16 %v135
  %v547 = vunpack.c.h.b16 %v135
  %v548 = vunpack.c.l.b16 %v136
  %v549 = vunpack.c.h.b16 %v136
  %v550 = vunpack.c.l.b16 %v137
  %v551 = vunpack.c.h.b16 %v137
  %v552 = vunpack.c.l.b16 %v138
  %v553 = vunpack.c.h.b16 %v138
  %v554 = vunpack.c.l.b16 %v139
  %v555 = vunpack.c.h.b16 %v139
  %v556 = vunpack.c.l.b16 %v140
  %v557 = vunpack.c.h.b16 %v140
  %v558 = vunpack.c.l.b16 %v141
  %v559 = vunpack.c.h.b16 %v141
  %v560 = vunpack.c.l.b16 %v142
  %v561 = vunpack.c.h.b16 %v142
  %v562 = vunpack.c.l.b16 %v143
  %v563 = vunpack.c.h.b16 %v143
  %v564 = vunpack.c.l.b16 %v144
  %v565 = vunpack.c.h.b16 %v144
  %v566 = vunpack.c.l.b16 %v145
  %v567 = vunpack.c.h.b16 %v145
  %v568 = vpack.c.b16 %v320, %v312
  %v569 = vpack.c.b16 %v321, %v313
  %v570 = vpack.c.b16 %v322, %v314
  %v571 = vpack.c.b16 %v323, %v315
  %v572 = vpack.c.b16 %v324, %v316
  %v573 = vpack.c.b16 %v325, %v317
  %v574 = vpack.c.b16 %v326, %v318
  %v575 = vpack.c.b16 %v327, %v319
  %v576 = vpack.c.b16 %v336, %v328
  %v577 = vpack.c.b16 %v337, %v329
  %v578 = vpack.c.b16 %v338, %v330
  %v579 = vpack.c.b16 %v339, %v331
  %v580 = vpack.c.b16 %v340, %v332
  %v581 = vpack.c.b16 %v341, %v333
  %v582 = vpack.c.b16 %v342, %v334
  %v583 = vpack.c.b16 %v343, %v335
  %v584 = vpack.c.b16 %v352, %v344
  %v585 = vpack.c.b16 %v353, %v345
  %v586 = vpack.c.b16 %v354, %v346
  %v587 = vpack.c.b16 %v355, %v347
  %v588 = vpack.c.b16 %v356, %v348
  %v589 = vpack.c.b16 %v357, %v349
  %v590 = vpack.c.b16 %v358, %v350
  %v591 = vpack.c.b16 %v359, %v351
  %v592 = vpack.c.b16 %v368, %v360
  %v593 = vpack.c.b16 %v369, %v361
  %v594 = vpack.c.b16 %v370, %v362
  %v595 = vpack.c.b16 %v371, %v363
  %v596 = vpack.c.b16 %v372, %v364
  %v597 = vpack.c.b16 %v373, %v365
  %v598 = vpack.c.b16 %v374, %v366
  %v599 = vpack.c.b16 %v375, %v367
  %v600 = vpack.c.b16 %v384, %v376
  %v601 = vpack.c.b16 %v385, %v377
  %v602 = vpack.c.b16 %v386, %v378
  %v603 = vpack.c.b16 %v387, %v379
  %v604 = vpack.c.b16 %v388, %v380
  %v605 = vpack.c.b16 %v389, %v381
  %v606 = vpack.c.b16 %v390, %v382
  %v607 = vpack.c.b16 %v391, %v383
  %v608 = vpack.c.b16 %v400, %v392
  %v609 = vpack.c.b16 %v401, %v393
  %v610 = vpack.c.b16 %v402, %v394
  %v611 = vpack.c.b16 %v403, %v395
  %v612 = vpack.c.b16 %v404, %v396
  %v613 = vpack.c.b16 %v405, %v397
  %v614 = vpack.c.b16 %v406, %v398
  %v615 = vpack.c.b16 %v407, %v399
  %v616 = vpack.c.b16 %v416, %v408
  %v617 = vpack.c.b16 %v417, %v409
  %v618 = vpack.c.b16 %v418, %v410
  %v619 = vpack.c.b16 %v419, %v411
  %v620 = vpack.c.b16 %v420, %v412
  %v621 = vpack.c.b16 %v421, %v413
  %v622 = vpack.c.b16 %v422, %v414
  %v623 = vpack.c.b16 %v423, %v415
  %v624 = vpack.c.b16 %v432, %v424
  %v625 = vpack.c.b16 %v433, %v425
  %v626 = vpack.c.b16 %v434, %v426
  %v627 = vpack.c.b16 %v435, %v427
  %v628 = vpack.c.b16 %v436, %v428
  %v629 = vpack.c.b16 %v437, %v429
  %v630 = vpack.c.b16 %v438, %v430
  %v631 = vpack.c.b16 %v439, %v431
  %v632 = vpack.c.b16 %v448, %v440
  %v633 = vpack.c.b16 %v449, %v441
  %v634 = vpack.c.b16 %v450, %v442
  %v635 = vpack.c.b16 %v451, %v443
  %v636 = vpack.c.b16 %v452, %v444
  %v637 = vpack.c.b16 %v453, %v445
  %v638 = vpack.c.b16 %v454, %v446
  %v639 = vpack.c.b16 %v455, %v447
  %v640 = vpack.c.b16 %v464, %v456
  %v641 = vpack.c.b16 %v465, %v457
  %v642 = vpack.c.b16 %v466, %v458
  %v643 = vpack.c.b16 %v467, %v459
  %v644 = vpack.c.b16 %v468, %v460
  %v645 = vpack.c.b16 %v469, %v461
  %v646 = vpack.c.b16 %v470, %v462
  %v647 = vpack.c.b16 %v471, %v463
  %v648 = vpack.c.b16 %v480, %v472
  %v649 = vpack.c.b16 %v481, %v473
  %v650 = vpack.c.b16 %v482, %v474
  %v651 = vpack.c.b16 %v483, %v475
  %v652 = vpack.c.b16 %v484, %v476
  %v653 = vpack.c.b16 %v485, %v477
  %v654 = vpack.c.b16 %v486, %v478
  %v655 = vpack.c.b16 %v487, %v479
  %v656 = vpack.c.b16 %v496, %v488
  %v657 = vpack.c.b16 %v497, %v489
  %v658 = vpack.c.b16 %v498, %v490
  %v659 = vpack.c.b16 %v499, %v491
  %v660 = vpack.c.b16 %v500, %v492
  %v661 = vpack.c.b16 %v501, %v493
  %v662 = vpack.c.b16 %v502, %v494
  %v663 = vpack.c.b16 %v503, %v495
  %v664 = vpack.c.b16 %v512, %v504
  %v665 = vpack.c.b16 %v513, %v505
  %v666 = vpack.c.b16 %v514, %v506
  %v667 = vpack.c.b16 %v515, %v507
  %v668 = vpack.c.b16 %v516, %v508
  %v669 = vpack.c.b16 %v517, %v509
  %v670 = vpack.c.b16 %v518, %v510
  %v671 = vpack.c.b16 %v519, %v511
  %v672 = vpack.c.b16 %v528, %v520
  %v673 = vpack.c.b16 %v529, %v521
  %v674 = vpack.c.b16 %v530, %v522
  %v675 = vpack.c.b16 %v531, %v523
  %v676 = vpack.c.b16 %v532, %v524
  %v677 = vpack.c.b16 %v533, %v525
  %v678 = vpack.c.b16 %v534, %v526
  %v679 = vpack.c.b16 %v535, %v527
  %v680 = vpack.c.b16 %v544, %v536
  %v681 = vpack.c.b16 %v545, %v537
  %v682 = vpack.c.b16 %v546, %v538
  %v683 = vpack.c.b16 %v547, %v539
  %v684 = vpack.c.b16 %v548, %v540
  %v685 = vpack.c.b16 %v549, %v541
  %v686 = vpack.c.b16 %v550, %v542
  %v687 = vpack.c.b16 %v551, %v543
  %v688 = vpack.c.b16 %v560, %v552
  %v689 = vpack.c.b16 %v561, %v553
  %v690 = vpack.c.b16 %v562, %v554
  %v691 = vpack.c.b16 %v563, %v555
  %v692 = vpack.c.b16 %v564, %v556
  %v693 = vpack.c.b16 %v565, %v557
  %v694 = vpack.c.b16 %v566, %v558
  %v695 = vpack.c.b16 %v567, %v559
  %824 = vmatpush.bf16.msra.mxu0 %v624
  %825 = vmatpush.bf16.msra.mxu0 %v616
  %826 = vmatpush.bf16.msra.mxu0 %v608
  %827 = vmatpush.bf16.msra.mxu0 %v600
  %828 = vmatpush.bf16.msra.mxu0 %v592
  %829 = vmatpush.bf16.msra.mxu0 %v584
  %830 = vmatpush.bf16.msra.mxu0 %v576
  %831 = vmatpush.bf16.msra.mxu0 %v568
  %832 = vmatmul.bf16.gmra.mxu0 %v176
  %v833 = vpop.f32.mrf.mxu0
  %v834 = vadd.f32 %v148, %v833
  %v835 = vpop.f32.mrf.mxu0
  %v836 = vadd.f32 %v148, %v835
  %837 = vmatmul.bf16.gmra.mxu0 %v178
  %v838 = vpop.f32.mrf.mxu0
  %v839 = vadd.f32 %v148, %v838
  %v840 = vpop.f32.mrf.mxu0
  %v841 = vadd.f32 %v148, %v840
  %842 = vdwg.mxu0
  %843 = vmatpush.bf16.msra.mxu0 %v688
  %844 = vmatpush.bf16.msra.mxu0 %v680
  %845 = vmatpush.bf16.msra.mxu0 %v672
  %846 = vmatpush.bf16.msra.mxu0 %v664
  %847 = vmatpush.bf16.msra.mxu0 %v656
  %848 = vmatpush.bf16.msra.mxu0 %v648
  %849 = vmatpush.bf16.msra.mxu0 %v640
  %850 = vmatpush.bf16.msra.mxu0 %v632
  %851 = vmatmul.bf16.gmra.mxu0 %v177
  %v852 = vpop.f32.mrf.mxu0
  %v853 = vadd.f32 %v834, %v852
  %v854 = vpop.f32.mrf.mxu0
  %v855 = vadd.f32 %v836, %v854
  %856 = vmatmul.bf16.gmra.mxu0 %v179
  %v857 = vpop.f32.mrf.mxu0
  %v858 = vadd.f32 %v839, %v857
  %v859 = vpop.f32.mrf.mxu0
  %v860 = vadd.f32 %v841, %v859
  %861 = vdwg.mxu0
  %862 = vmatpush.bf16.msra.mxu0 %v625
  %863 = vmatpush.bf16.msra.mxu0 %v617
  %864 = vmatpush.bf16.msra.mxu0 %v609
  %865 = vmatpush.bf16.msra.mxu0 %v601
  %866 = vmatpush.bf16.msra.mxu0 %v593
  %867 = vmatpush.bf16.msra.mxu0 %v585
  %868 = vmatpush.bf16.msra.mxu0 %v577
  %869 = vmatpush.bf16.msra.mxu0 %v569
  %870 = vmatmul.bf16.gmra.mxu0 %v176
  %v871 = vpop.f32.mrf.mxu0
  %v872 = vadd.f32 %v149, %v871
  %v873 = vpop.f32.mrf.mxu0
  %v874 = vadd.f32 %v149, %v873
  %875 = vmatmul.bf16.gmra.mxu0 %v178
  %v876 = vpop.f32.mrf.mxu0
  %v877 = vadd.f32 %v149, %v876
  %v878 = vpop.f32.mrf.mxu0
  %v879 = vadd.f32 %v149, %v878
  %880 = vdwg.mxu0
  %881 = vmatpush.bf16.msra.mxu0 %v689
  %882 = vmatpush.bf16.msra.mxu0 %v681
  %883 = vmatpush.bf16.msra.mxu0 %v673
  %884 = vmatpush.bf16.msra.mxu0 %v665
  %885 = vmatpush.bf16.msra.mxu0 %v657
  %886 = vmatpush.bf16.msra.mxu0 %v649
  %887 = vmatpush.bf16.msra.mxu0 %v641
  %888 = vmatpush.bf16.msra.mxu0 %v633
  %889 = vmatmul.bf16.gmra.mxu0 %v177
  %v890 = vpop.f32.mrf.mxu0
  %v891 = vadd.f32 %v872, %v890
  %v892 = vpop.f32.mrf.mxu0
  %v893 = vadd.f32 %v874, %v892
  %894 = vmatmul.bf16.gmra.mxu0 %v179
  %v895 = vpop.f32.mrf.mxu0
  %v896 = vadd.f32 %v877, %v895
  %v897 = vpop.f32.mrf.mxu0
  %v898 = vadd.f32 %v879, %v897
  %899 = vdwg.mxu0
  %900 = vmatpush.bf16.msra.mxu0 %v626
  %901 = vmatpush.bf16.msra.mxu0 %v618
  %902 = vmatpush.bf16.msra.mxu0 %v610
  %903 = vmatpush.bf16.msra.mxu0 %v602
  %904 = vmatpush.bf16.msra.mxu0 %v594
  %905 = vmatpush.bf16.msra.mxu0 %v586
  %906 = vmatpush.bf16.msra.mxu0 %v578
  %907 = vmatpush.bf16.msra.mxu0 %v570
  %908 = vmatmul.bf16.gmra.mxu0 %v176
  %v909 = vpop.f32.mrf.mxu0
  %v910 = vadd.f32 %v150, %v909
  %v911 = vpop.f32.mrf.mxu0
  %v912 = vadd.f32 %v150, %v911
  %913 = vmatmul.bf16.gmra.mxu0 %v178
  %v914 = vpop.f32.mrf.mxu0
  %v915 = vadd.f32 %v150, %v914
  %v916 = vpop.f32.mrf.mxu0
  %v917 = vadd.f32 %v150, %v916
  %918 = vdwg.mxu0
  %919 = vmatpush.bf16.msra.mxu0 %v690
  %920 = vmatpush.bf16.msra.mxu0 %v682
  %921 = vmatpush.bf16.msra.mxu0 %v674
  %922 = vmatpush.bf16.msra.mxu0 %v666
  %923 = vmatpush.bf16.msra.mxu0 %v658
  %924 = vmatpush.bf16.msra.mxu0 %v650
  %925 = vmatpush.bf16.msra.mxu0 %v642
  %926 = vmatpush.bf16.msra.mxu0 %v634
  %927 = vmatmul.bf16.gmra.mxu0 %v177
  %v928 = vpop.f32.mrf.mxu0
  %v929 = vadd.f32 %v910, %v928
  %v930 = vpop.f32.mrf.mxu0
  %v931 = vadd.f32 %v912, %v930
  %932 = vmatmul.bf16.gmra.mxu0 %v179
  %v933 = vpop.f32.mrf.mxu0
  %v934 = vadd.f32 %v915, %v933
  %v935 = vpop.f32.mrf.mxu0
  %v936 = vadd.f32 %v917, %v935
  %937 = vdwg.mxu0
  %938 = vmatpush.bf16.msra.mxu0 %v627
  %939 = vmatpush.bf16.msra.mxu0 %v619
  %940 = vmatpush.bf16.msra.mxu0 %v611
  %941 = vmatpush.bf16.msra.mxu0 %v603
  %942 = vmatpush.bf16.msra.mxu0 %v595
  %943 = vmatpush.bf16.msra.mxu0 %v587
  %944 = vmatpush.bf16.msra.mxu0 %v579
  %945 = vmatpush.bf16.msra.mxu0 %v571
  %946 = vmatmul.bf16.gmra.mxu0 %v176
  %v947 = vpop.f32.mrf.mxu0
  %v948 = vadd.f32 %v151, %v947
  %v949 = vpop.f32.mrf.mxu0
  %v950 = vadd.f32 %v151, %v949
  %951 = vmatmul.bf16.gmra.mxu0 %v178
  %v952 = vpop.f32.mrf.mxu0
  %v953 = vadd.f32 %v151, %v952
  %v954 = vpop.f32.mrf.mxu0
  %v955 = vadd.f32 %v151, %v954
  %956 = vdwg.mxu0
  %957 = vmatpush.bf16.msra.mxu0 %v691
  %958 = vmatpush.bf16.msra.mxu0 %v683
  %959 = vmatpush.bf16.msra.mxu0 %v675
  %960 = vmatpush.bf16.msra.mxu0 %v667
  %961 = vmatpush.bf16.msra.mxu0 %v659
  %962 = vmatpush.bf16.msra.mxu0 %v651
  %963 = vmatpush.bf16.msra.mxu0 %v643
  %964 = vmatpush.bf16.msra.mxu0 %v635
  %965 = vmatmul.bf16.gmra.mxu0 %v177
  %v966 = vpop.f32.mrf.mxu0
  %v967 = vadd.f32 %v948, %v966
  %v968 = vpop.f32.mrf.mxu0
  %v969 = vadd.f32 %v950, %v968
  %970 = vmatmul.bf16.gmra.mxu0 %v179
  %v971 = vpop.f32.mrf.mxu0
  %v972 = vadd.f32 %v953, %v971
  %v973 = vpop.f32.mrf.mxu0
  %v974 = vadd.f32 %v955, %v973
  %975 = vdwg.mxu0
  %976 = vmatpush.bf16.msra.mxu0 %v628
  %977 = vmatpush.bf16.msra.mxu0 %v620
  %978 = vmatpush.bf16.msra.mxu0 %v612
  %979 = vmatpush.bf16.msra.mxu0 %v604
  %980 = vmatpush.bf16.msra.mxu0 %v596
  %981 = vmatpush.bf16.msra.mxu0 %v588
  %982 = vmatpush.bf16.msra.mxu0 %v580
  %983 = vmatpush.bf16.msra.mxu0 %v572
  %984 = vmatmul.bf16.gmra.mxu0 %v176
  %v985 = vpop.f32.mrf.mxu0
  %v986 = vadd.f32 %v152, %v985
  %v987 = vpop.f32.mrf.mxu0
  %v988 = vadd.f32 %v152, %v987
  %989 = vmatmul.bf16.gmra.mxu0 %v178
  %v990 = vpop.f32.mrf.mxu0
  %v991 = vadd.f32 %v152, %v990
  %v992 = vpop.f32.mrf.mxu0
  %v993 = vadd.f32 %v152, %v992
  %994 = vdwg.mxu0
  %995 = vmatpush.bf16.msra.mxu0 %v692
  %996 = vmatpush.bf16.msra.mxu0 %v684
  %997 = vmatpush.bf16.msra.mxu0 %v676
  %998 = vmatpush.bf16.msra.mxu0 %v668
  %999 = vmatpush.bf16.msra.mxu0 %v660
  %1000 = vmatpush.bf16.msra.mxu0 %v652
  %1001 = vmatpush.bf16.msra.mxu0 %v644
  %1002 = vmatpush.bf16.msra.mxu0 %v636
  %1003 = vmatmul.bf16.gmra.mxu0 %v177
  %v1004 = vpop.f32.mrf.mxu0
  %v1005 = vadd.f32 %v986, %v1004
  %v1006 = vpop.f32.mrf.mxu0
  %v1007 = vadd.f32 %v988, %v1006
  %1008 = vmatmul.bf16.gmra.mxu0 %v179
  %v1009 = vpop.f32.mrf.mxu0
  %v1010 = vadd.f32 %v991, %v1009
  %v1011 = vpop.f32.mrf.mxu0
  %v1012 = vadd.f32 %v993, %v1011
  %1013 = vdwg.mxu0
  %1014 = vmatpush.bf16.msra.mxu0 %v629
  %1015 = vmatpush.bf16.msra.mxu0 %v621
  %1016 = vmatpush.bf16.msra.mxu0 %v613
  %1017 = vmatpush.bf16.msra.mxu0 %v605
  %1018 = vmatpush.bf16.msra.mxu0 %v597
  %1019 = vmatpush.bf16.msra.mxu0 %v589
  %1020 = vmatpush.bf16.msra.mxu0 %v581
  %1021 = vmatpush.bf16.msra.mxu0 %v573
  %1022 = vmatmul.bf16.gmra.mxu0 %v176
  %v1023 = vpop.f32.mrf.mxu0
  %v1024 = vadd.f32 %v153, %v1023
  %v1025 = vpop.f32.mrf.mxu0
  %v1026 = vadd.f32 %v153, %v1025
  %1027 = vmatmul.bf16.gmra.mxu0 %v178
  %v1028 = vpop.f32.mrf.mxu0
  %v1029 = vadd.f32 %v153, %v1028
  %v1030 = vpop.f32.mrf.mxu0
  %v1031 = vadd.f32 %v153, %v1030
  %1032 = vdwg.mxu0
  %1033 = vmatpush.bf16.msra.mxu0 %v693
  %1034 = vmatpush.bf16.msra.mxu0 %v685
  %1035 = vmatpush.bf16.msra.mxu0 %v677
  %1036 = vmatpush.bf16.msra.mxu0 %v669
  %1037 = vmatpush.bf16.msra.mxu0 %v661
  %1038 = vmatpush.bf16.msra.mxu0 %v653
  %1039 = vmatpush.bf16.msra.mxu0 %v645
  %1040 = vmatpush.bf16.msra.mxu0 %v637
  %1041 = vmatmul.bf16.gmra.mxu0 %v177
  %v1042 = vpop.f32.mrf.mxu0
  %v1043 = vadd.f32 %v1024, %v1042
  %v1044 = vpop.f32.mrf.mxu0
  %v1045 = vadd.f32 %v1026, %v1044
  %1046 = vmatmul.bf16.gmra.mxu0 %v179
  %v1047 = vpop.f32.mrf.mxu0
  %v1048 = vadd.f32 %v1029, %v1047
  %v1049 = vpop.f32.mrf.mxu0
  %v1050 = vadd.f32 %v1031, %v1049
  %1051 = vdwg.mxu0
  %1052 = vmatpush.bf16.msra.mxu0 %v630
  %1053 = vmatpush.bf16.msra.mxu0 %v622
  %1054 = vmatpush.bf16.msra.mxu0 %v614
  %1055 = vmatpush.bf16.msra.mxu0 %v606
  %1056 = vmatpush.bf16.msra.mxu0 %v598
  %1057 = vmatpush.bf16.msra.mxu0 %v590
  %1058 = vmatpush.bf16.msra.mxu0 %v582
  %1059 = vmatpush.bf16.msra.mxu0 %v574
  %1060 = vmatmul.bf16.gmra.mxu0 %v176
  %v1061 = vpop.f32.mrf.mxu0
  %v1062 = vadd.f32 %v154, %v1061
  %v1063 = vpop.f32.mrf.mxu0
  %v1064 = vadd.f32 %v154, %v1063
  %1065 = vmatmul.bf16.gmra.mxu0 %v178
  %v1066 = vpop.f32.mrf.mxu0
  %v1067 = vadd.f32 %v154, %v1066
  %v1068 = vpop.f32.mrf.mxu0
  %v1069 = vadd.f32 %v154, %v1068
  %1070 = vdwg.mxu0
  %1071 = vmatpush.bf16.msra.mxu0 %v694
  %1072 = vmatpush.bf16.msra.mxu0 %v686
  %1073 = vmatpush.bf16.msra.mxu0 %v678
  %1074 = vmatpush.bf16.msra.mxu0 %v670
  %1075 = vmatpush.bf16.msra.mxu0 %v662
  %1076 = vmatpush.bf16.msra.mxu0 %v654
  %1077 = vmatpush.bf16.msra.mxu0 %v646
  %1078 = vmatpush.bf16.msra.mxu0 %v638
  %1079 = vmatmul.bf16.gmra.mxu0 %v177
  %v1080 = vpop.f32.mrf.mxu0
  %v1081 = vadd.f32 %v1062, %v1080
  %v1082 = vpop.f32.mrf.mxu0
  %v1083 = vadd.f32 %v1064, %v1082
  %1084 = vmatmul.bf16.gmra.mxu0 %v179
  %v1085 = vpop.f32.mrf.mxu0
  %v1086 = vadd.f32 %v1067, %v1085
  %v1087 = vpop.f32.mrf.mxu0
  %v1088 = vadd.f32 %v1069, %v1087
  %1089 = vdwg.mxu0
  %1090 = vmatpush.bf16.msra.mxu0 %v631
  %1091 = vmatpush.bf16.msra.mxu0 %v623
  %1092 = vmatpush.bf16.msra.mxu0 %v615
  %1093 = vmatpush.bf16.msra.mxu0 %v607
  %1094 = vmatpush.bf16.msra.mxu0 %v599
  %1095 = vmatpush.bf16.msra.mxu0 %v591
  %1096 = vmatpush.bf16.msra.mxu0 %v583
  %1097 = vmatpush.bf16.msra.mxu0 %v575
  %1098 = vmatmul.bf16.gmra.mxu0 %v176
  %v1099 = vpop.f32.mrf.mxu0
  %v1100 = vadd.f32 %v155, %v1099
  %v1101 = vpop.f32.mrf.mxu0
  %v1102 = vadd.f32 %v155, %v1101
  %1103 = vmatmul.bf16.gmra.mxu0 %v178
  %v1104 = vpop.f32.mrf.mxu0
  %v1105 = vadd.f32 %v155, %v1104
  %v1106 = vpop.f32.mrf.mxu0
  %v1107 = vadd.f32 %v155, %v1106
  %1108 = vdwg.mxu0
  %1109 = vmatpush.bf16.msra.mxu0 %v695
  %1110 = vmatpush.bf16.msra.mxu0 %v687
  %1111 = vmatpush.bf16.msra.mxu0 %v679
  %1112 = vmatpush.bf16.msra.mxu0 %v671
  %1113 = vmatpush.bf16.msra.mxu0 %v663
  %1114 = vmatpush.bf16.msra.mxu0 %v655
  %1115 = vmatpush.bf16.msra.mxu0 %v647
  %1116 = vmatpush.bf16.msra.mxu0 %v639
  %1117 = vmatmul.bf16.gmra.mxu0 %v177
  %v1118 = vpop.f32.mrf.mxu0
  %v1119 = vadd.f32 %v1100, %v1118
  %v1120 = vpop.f32.mrf.mxu0
  %v1121 = vadd.f32 %v1102, %v1120
  %1122 = vmatmul.bf16.gmra.mxu0 %v179
  %v1123 = vpop.f32.mrf.mxu0
  %v1124 = vadd.f32 %v1105, %v1123
  %v1125 = vpop.f32.mrf.mxu0
  %v1126 = vadd.f32 %v1107, %v1125
  %1127 = vdwg.mxu0
  %1128 = vst [vmem:[%s3] sm:$0xff] %v853
  %1129 = vst [vmem:[%s3 + $0x8] sm:$0xff] %v891
  %1130 = vst [vmem:[%s3 + $0x10] sm:$0xff] %v929
  %1131 = vst [vmem:[%s3 + $0x18] sm:$0xff] %v967
  %1132 = vst [vmem:[%s3 + $0x20] sm:$0xff] %v1005
  %1133 = vst [vmem:[%s3 + $0x28] sm:$0xff] %v1043
  %1134 = vst [vmem:[%s3 + $0x30] sm:$0xff] %v1081
  %1135 = vst [vmem:[%s3 + $0x38] sm:$0xff] %v1119
  %1136 = vst [vmem:[%s3 + $0x40] sm:$0xff] %v855
  %1137 = vst [vmem:[%s3 + $0x48] sm:$0xff] %v893
  %1138 = vst [vmem:[%s3 + $0x50] sm:$0xff] %v931
  %1139 = vst [vmem:[%s3 + $0x58] sm:$0xff] %v969
  %1140 = vst [vmem:[%s3 + $0x60] sm:$0xff] %v1007
  %1141 = vst [vmem:[%s3 + $0x68] sm:$0xff] %v1045
  %1142 = vst [vmem:[%s3 + $0x70] sm:$0xff] %v1083
  %1143 = vst [vmem:[%s3 + $0x78] sm:$0xff] %v1121
  %1144 = vst [vmem:[%s3 + $0x80] sm:$0xff] %v858
  %1145 = vst [vmem:[%s3 + $0x88] sm:$0xff] %v896
  %1146 = vst [vmem:[%s3 + $0x90] sm:$0xff] %v934
  %1147 = vst [vmem:[%s3 + $0x98] sm:$0xff] %v972
  %1148 = vst [vmem:[%s3 + $0xa0] sm:$0xff] %v1010
  %1149 = vst [vmem:[%s3 + $0xa8] sm:$0xff] %v1048
  %1150 = vst [vmem:[%s3 + $0xb0] sm:$0xff] %v1086
  %1151 = vst [vmem:[%s3 + $0xb8] sm:$0xff] %v1124
  %1152 = vst [vmem:[%s3 + $0xc0] sm:$0xff] %v860
  %1153 = vst [vmem:[%s3 + $0xc8] sm:$0xff] %v898
  %1154 = vst [vmem:[%s3 + $0xd0] sm:$0xff] %v936
  %1155 = vst [vmem:[%s3 + $0xd8] sm:$0xff] %v974
  %1156 = vst [vmem:[%s3 + $0xe0] sm:$0xff] %v1012
  %1157 = vst [vmem:[%s3 + $0xe8] sm:$0xff] %v1050
  %1158 = vst [vmem:[%s3 + $0xf0] sm:$0xff] %v1088
  %1159 = vst [vmem:[%s3 + $0xf8] sm:$0xff] %v1126
  // Predicated region
  $region14: #{resblock_decoder_forward.8} parent=0 // pred_check
    _
  $region15: #{resblock_decoder_forward.8} parent=0 // pred_check_branch
    %1161 = sbr.rel (0) target = $region17
  $region16: #{resblock_decoder_forward.8} parent=0 // pred_region
    _
  $region17: #{resblock_decoder_forward.8} parent=0 // pred_fallthru
    _
  // Predicated region
  $region18: #{resblock_decoder_forward.8} parent=0 // pred_check
    _
  $region19: #{resblock_decoder_forward.8} parent=0 // pred_check_branch
    %1163 = sbr.rel (0) target = $region21
  $region20: #{resblock_decoder_forward.8} parent=0 // pred_region
    _
  $region21: #{resblock_decoder_forward.8} parent=0 // pred_fallthru
    _

// kernel: resblock_decoder_forward.6
$region0: #{resblock_decoder_forward.6}
  #allocation0 [shape = 'u32[]', space=smem, size = 0x4, offset = 0x4, fixed_abs, tag = 'smem constant byte address 0x4 - core index']
  #allocation1 [shape = 'u32[72,128]{1,0:T(1,128)}', space=vmem, size = 0x9000, scoped, tag = 'internal scratch']
  %s0 = inlined_call_operand.vmem [shape: bf16[8,512], index: 0, kind: input, shape index: {}]
  %s1 = inlined_call_operand.vmem [shape: bf16[512,2048], index: 1, kind: input, shape index: {}]
  %s2 = inlined_call_operand.vmem [shape: f32[1,2048], index: 2, kind: input, shape index: {}]
  %s3 = inlined_call_operand.vmem [shape: f32[8,2048], index: 3, kind: output, shape index: {}]
  %s4 = sld [smem:[#allocation0]]
  $region68: #{resblock_decoder_forward.6} parent=0
    _
  %s6 = ssub.s32 1, %s4
  %s7 = scalar_select 0, %s6, %s4
  $region1: #{resblock_decoder_forward.6} parent=0
    #allocation2 [shape = 'u8[2097152]{0}', space=vmem, size = 0x200000, scoped, tag = 'input window, operand 1']
    loop: start=0, step=1, limit=4
    $region2: #{resblock_decoder_forward.6} parent=1 // loop_pre_header
      _
    $region3: #{resblock_decoder_forward.6} parent=1 // loop_header
      %s9 = sphi 0, %s13
      %p10 = scmp.ge.s32.totalorder %s9, 4
      %s16 = sphi 0, %s28
      %s17 = sphi 0, %s24
      %s18 = sphi 0, %s16
      %s19 = sphi 0, %s17
      %s20 = sphi 0, %s18
      %s21 = sphi 0, %s19
      %s31 = sphi 0, %s33
      %s34 = sphi 0, %s31
      %s35 = sphi 0, %s34
      %s51 = sphi 0, %s35
      %s57 = sphi 0, %s59
      %s60 = sphi 0, %s57
      %s61 = sphi 0, %s60
      %s77 = sphi 0, %s61
      %s83 = sphi 0, %s85
      %s86 = sphi 0, %s83
      %s87 = sphi 0, %s86
      %s103 = sphi 0, %s87
      %s111 = sphi 0, %s113
      %s114 = sphi 0, %s111
      %s115 = sphi 0, %s114
      %s131 = sphi 0, %s115
    $region4: #{resblock_decoder_forward.6} parent=1 // loop_header_branch
      %12 = sbr.rel (%p10) target = $region8
    $region5: #{resblock_decoder_forward.6} parent=1 // loop_body
      %s14 = ssub.s32 %s9, 1
      %s15 = ssub.s32 %s9, 2
      %s22 = sadd.s32 1, %s17
      %p23 = scmp.ge.s32.totalorder %s22, 2
      %s24 = scalar_select %p23, 0, %s22
      %s25 = sadd.s32 1, %s16
      %s26 = scalar_select %p23, %s25, %s16
      %p27 = scmp.ge.s32.totalorder %s26, 1
      %s28 = scalar_select %p27, 0, %s26
      %s29 = ssub.s32 %s16, %s28
      %p30 = scmp.eq.s32.totalorder %s29, 0
      %s32 = sadd.s32 %s31, 1
      %s33 = scalar_select %p30, %s31, %s32
      %p36 = pneg %p30
      %p37 = scmp.eq.s32.totalorder %s9, 1
      %p38 = por %p36, %p37
      %p39 = scmp.ne.s32.totalorder %s31, %s34
      %p40 = scmp.eq.s32.totalorder %s9, 0
      %p41 = por %p39, %p40
      %p42 = scmp.ne.s32.totalorder %s31, %s34
      %p43 = scmp.eq.s32.totalorder %s14, 1
      %p44 = por %p42, %p43
      %p45 = scmp.ne.s32.totalorder %s34, %s35
      %p46 = scmp.eq.s32.totalorder %s14, 0
      %p47 = por %p45, %p46
      %p48 = scmp.ne.s32.totalorder %s34, %s35
      %p49 = scmp.eq.s32.totalorder %s15, 1
      %p50 = por %p48, %p49
      %p52 = scmp.ne.s32.totalorder %s35, %s51
      %p53 = scmp.eq.s32.totalorder %s15, 0
      %p54 = por %p52, %p53
      %s55 = ssub.s32 %s17, %s24
      %p56 = scmp.eq.s32.totalorder %s55, 0
      %s58 = sadd.s32 %s57, 1
      %s59 = scalar_select %p56, %s57, %s58
      %p62 = pneg %p56
      %p63 = scmp.eq.s32.totalorder %s9, 1
      %p64 = por %p62, %p63
      %p65 = scmp.ne.s32.totalorder %s57, %s60
      %p66 = scmp.eq.s32.totalorder %s9, 0
      %p67 = por %p65, %p66
      %p68 = scmp.ne.s32.totalorder %s57, %s60
      %p69 = scmp.eq.s32.totalorder %s14, 1
      %p70 = por %p68, %p69
      %p71 = scmp.ne.s32.totalorder %s60, %s61
      %p72 = scmp.eq.s32.totalorder %s14, 0
      %p73 = por %p71, %p72
      %p74 = scmp.ne.s32.totalorder %s60, %s61
      %p75 = scmp.eq.s32.totalorder %s15, 1
      %p76 = por %p74, %p75
      %p78 = scmp.ne.s32.totalorder %s61, %s77
      %p79 = scmp.eq.s32.totalorder %s15, 0
      %p80 = por %p78, %p79
      %s81 = ssub.s32 %s17, %s24
      %p82 = scmp.eq.s32.totalorder %s81, 0
      %s84 = sadd.s32 %s83, 1
      %s85 = scalar_select %p82, %s83, %s84
      %p88 = pneg %p82
      %p89 = scmp.eq.s32.totalorder %s9, 1
      %p90 = por %p88, %p89
      %p91 = scmp.ne.s32.totalorder %s83, %s86
      %p92 = scmp.eq.s32.totalorder %s9, 0
      %p93 = por %p91, %p92
      %p94 = scmp.ne.s32.totalorder %s83, %s86
      %p95 = scmp.eq.s32.totalorder %s14, 1
      %p96 = por %p94, %p95
      %p97 = scmp.ne.s32.totalorder %s86, %s87
      %p98 = scmp.eq.s32.totalorder %s14, 0
      %p99 = por %p97, %p98
      %p100 = scmp.ne.s32.totalorder %s86, %s87
      %p101 = scmp.eq.s32.totalorder %s15, 1
      %p102 = por %p100, %p101
      %p104 = scmp.ne.s32.totalorder %s87, %s103
      %p105 = scmp.eq.s32.totalorder %s15, 0
      %p106 = por %p104, %p105
      %s107 = ssub.s32 %s16, %s28
      %s108 = ssub.s32 %s17, %s24
      %s109 = sor.u32 %s107, %s108
      %p110 = scmp.eq.s32.totalorder %s109, 0
      %s112 = sadd.s32 %s111, 1
      %s113 = scalar_select %p110, %s111, %s112
      %p116 = pneg %p110
      %p117 = scmp.eq.s32.totalorder %s9, 1
      %p118 = por %p116, %p117
      %p119 = scmp.ne.s32.totalorder %s111, %s114
      %p120 = scmp.eq.s32.totalorder %s9, 0
      %p121 = por %p119, %p120
      %p122 = scmp.ne.s32.totalorder %s111, %s114
      %p123 = scmp.eq.s32.totalorder %s14, 1
      %p124 = por %p122, %p123
      %p125 = scmp.ne.s32.totalorder %s114, %s115
      %p126 = scmp.eq.s32.totalorder %s14, 0
      %p127 = por %p125, %p126
      %p128 = scmp.ne.s32.totalorder %s114, %s115
      %p129 = scmp.eq.s32.totalorder %s15, 1
      %p130 = por %p128, %p129
      %p132 = scmp.ne.s32.totalorder %s115, %s131
      %p133 = scmp.eq.s32.totalorder %s15, 0
      %p134 = por %p132, %p133
      %p135 = scmp.le.s32.totalorder 1, %s9
      %p136 = scmp.lt.s32.totalorder %s9, 3
      %p137 = pnand %p135, %p136
      %p138 = pneg %p137
      // Predicated region
      $region9: #{resblock_decoder_forward.6} parent=5 // pred_check
        _
      $region10: #{resblock_decoder_forward.6} parent=5 // pred_check_branch
        %140 = sbr.rel (%p137) target = $region12
      $region11: #{resblock_decoder_forward.6} parent=5 // pred_region
        %s141 = ssub.s32 %s9, 1
        // Predicated region
        $region13: #{resblock_decoder_forward.6} parent=11 // pred_check
          %p142 = pneg %p47
        $region14: #{resblock_decoder_forward.6} parent=11 // pred_check_branch
          %144 = sbr.rel (%p142) target = $region16
        $region15: #{resblock_decoder_forward.6} parent=11 // pred_region
          %p145 = scmp.lt.s32.totalorder %s18, 0
          %s146 = scalar_select %p145, %s18, 0
          %s147 = smul.addr %s146, 4
          %s148 = smul.addr %s147, 4
          %s149 = scalar_lea.vmem %s0, %s148
        $region16: #{resblock_decoder_forward.6} parent=11 // pred_fallthru
          _
      $region12: #{resblock_decoder_forward.6} parent=5 // pred_fallthru
        _
      %p150 = scmp.lt.s32.totalorder %s9, 2
      // Predicated region
      $region17: #{resblock_decoder_forward.6} parent=5 // pred_check
        %p151 = pneg %p150
      $region18: #{resblock_decoder_forward.6} parent=5 // pred_check_branch
        %153 = sbr.rel (%p151) target = $region20
      $region19: #{resblock_decoder_forward.6} parent=5 // pred_region
        // Predicated region
        $region21: #{resblock_decoder_forward.6} parent=19 // pred_check
          %p154 = pneg %p67
        $region22: #{resblock_decoder_forward.6} parent=19 // pred_check_branch
          %156 = sbr.rel (%p154) target = $region24
        $region23: #{resblock_decoder_forward.6} parent=19 // pred_region
          %s157 = sand.u32 %s57, 1
          %s158 = sand.u32 %s57, 1
          %s159 = smul.addr %s158, 2048
          %s160 = scalar_lea.vmem [#allocation2], %s159
          %s161 = smul.u32 8, %s17
          %s162 = smul.addr %s161, 4
          %s163 = scalar_lea.vmem %s1, %s162
          // Predicated region
          $region25: #{resblock_decoder_forward.6} parent=23 // pred_check
            _
          $region26: #{resblock_decoder_forward.6} parent=23 // pred_check_branch
            %165 = sbr.rel (0) target = $region28
          $region27: #{resblock_decoder_forward.6} parent=23 // pred_region
            // Predicated region
            $region29: #{resblock_decoder_forward.6} parent=27 // pred_check
              _
            $region30: #{resblock_decoder_forward.6} parent=27 // pred_check_branch
              %167 = sbr.rel (0) target = $region32
            $region31: #{resblock_decoder_forward.6} parent=27 // pred_region
              loop: start=0, step=1, limit=1
              $region33: #{resblock_decoder_forward.6} parent=31 // loop_pre_header
                _
              $region34: #{resblock_decoder_forward.6} parent=31 // loop_header
                %s169 = sphi 0, %s173
                %p170 = scmp.ge.s32.totalorder %s169, 1
                %s174 = sphi %s163, %s163
                %s175 = sphi %s160, %s160
              $region35: #{resblock_decoder_forward.6} parent=31 // loop_header_branch
                %172 = sbr.rel (%p170) target = $region39
              $region36: #{resblock_decoder_forward.6} parent=31 // loop_body
                %v176 = vld [vmem:[%s174] sm:$0xff]
                %177 = vst [vmem:[%s175] sm:$0xff] %v176
                %v178 = vld [vmem:[%s174 + $0x8] sm:$0xff]
                %179 = vst [vmem:[%s175 + $0x8] sm:$0xff] %v178
                %v180 = vld [vmem:[%s174 + $0x10] sm:$0xff]
                %181 = vst [vmem:[%s175 + $0x10] sm:$0xff] %v180
                %v182 = vld [vmem:[%s174 + $0x18] sm:$0xff]
                %183 = vst [vmem:[%s175 + $0x18] sm:$0xff] %v182
                %v184 = vld [vmem:[%s174 + $0x40] sm:$0xff]
                %185 = vst [vmem:[%s175 + $0x20] sm:$0xff] %v184
                %v186 = vld [vmem:[%s174 + $0x48] sm:$0xff]
                %187 = vst [vmem:[%s175 + $0x28] sm:$0xff] %v186
                %v188 = vld [vmem:[%s174 + $0x50] sm:$0xff]
                %189 = vst [vmem:[%s175 + $0x30] sm:$0xff] %v188
                %v190 = vld [vmem:[%s174 + $0x58] sm:$0xff]
                %191 = vst [vmem:[%s175 + $0x38] sm:$0xff] %v190
                %v192 = vld [vmem:[%s174 + $0x80] sm:$0xff]
                %193 = vst [vmem:[%s175 + $0x40] sm:$0xff] %v192
                %v194 = vld [vmem:[%s174 + $0x88] sm:$0xff]
                %195 = vst [vmem:[%s175 + $0x48] sm:$0xff] %v194
                %v196 = vld [vmem:[%s174 + $0x90] sm:$0xff]
                %197 = vst [vmem:[%s175 + $0x50] sm:$0xff] %v196
                %v198 = vld [vmem:[%s174 + $0x98] sm:$0xff]
                %199 = vst [vmem:[%s175 + $0x58] sm:$0xff] %v198
                %v200 = vld [vmem:[%s174 + $0xc0] sm:$0xff]
                %201 = vst [vmem:[%s175 + $0x60] sm:$0xff] %v200
                %v202 = vld [vmem:[%s174 + $0xc8] sm:$0xff]
                %203 = vst [vmem:[%s175 + $0x68] sm:$0xff] %v202
                %v204 = vld [vmem:[%s174 + $0xd0] sm:$0xff]
                %205 = vst [vmem:[%s175 + $0x70] sm:$0xff] %v204
                %v206 = vld [vmem:[%s174 + $0xd8] sm:$0xff]
                %207 = vst [vmem:[%s175 + $0x78] sm:$0xff] %v206
                %v208 = vld [vmem:[%s174 + $0x100] sm:$0xff]
                %209 = vst [vmem:[%s175 + $0x80] sm:$0xff] %v208
                %v210 = vld [vmem:[%s174 + $0x108] sm:$0xff]
                %211 = vst [vmem:[%s175 + $0x88] sm:$0xff] %v210
                %v212 = vld [vmem:[%s174 + $0x110] sm:$0xff]
                %213 = vst [vmem:[%s175 + $0x90] sm:$0xff] %v212
                %v214 = vld [vmem:[%s174 + $0x118] sm:$0xff]
                %215 = vst [vmem:[%s175 + $0x98] sm:$0xff] %v214
                %v216 = vld [vmem:[%s174 + $0x140] sm:$0xff]
                %217 = vst [vmem:[%s175 + $0xa0] sm:$0xff] %v216
                %v218 = vld [vmem:[%s174 + $0x148] sm:$0xff]
                %219 = vst [vmem:[%s175 + $0xa8] sm:$0xff] %v218
                %v220 = vld [vmem:[%s174 + $0x150] sm:$0xff]
                %221 = vst [vmem:[%s175 + $0xb0] sm:$0xff] %v220
                %v222 = vld [vmem:[%s174 + $0x158] sm:$0xff]
                %223 = vst [vmem:[%s175 + $0xb8] sm:$0xff] %v222
                %v224 = vld [vmem:[%s174 + $0x180] sm:$0xff]
                %225 = vst [vmem:[%s175 + $0xc0] sm:$0xff] %v224
                %v226 = vld [vmem:[%s174 + $0x188] sm:$0xff]
                %227 = vst [vmem:[%s175 + $0xc8] sm:$0xff] %v226
                %v228 = vld [vmem:[%s174 + $0x190] sm:$0xff]
                %229 = vst [vmem:[%s175 + $0xd0] sm:$0xff] %v228
                %v230 = vld [vmem:[%s174 + $0x198] sm:$0xff]
                %231 = vst [vmem:[%s175 + $0xd8] sm:$0xff] %v230
                %v232 = vld [vmem:[%s174 + $0x1c0] sm:$0xff]
                %233 = vst [vmem:[%s175 + $0xe0] sm:$0xff] %v232
                %v234 = vld [vmem:[%s174 + $0x1c8] sm:$0xff]
                %235 = vst [vmem:[%s175 + $0xe8] sm:$0xff] %v234
                %v236 = vld [vmem:[%s174 + $0x1d0] sm:$0xff]
                %237 = vst [vmem:[%s175 + $0xf0] sm:$0xff] %v236
                %v238 = vld [vmem:[%s174 + $0x1d8] sm:$0xff]
                %239 = vst [vmem:[%s175 + $0xf8] sm:$0xff] %v238
                %v240 = vld [vmem:[%s174 + $0x200] sm:$0xff]
                %241 = vst [vmem:[%s175 + $0x100] sm:$0xff] %v240
                %v242 = vld [vmem:[%s174 + $0x208] sm:$0xff]
                %243 = vst [vmem:[%s175 + $0x108] sm:$0xff] %v242
                %v244 = vld [vmem:[%s174 + $0x210] sm:$0xff]
                %245 = vst [vmem:[%s175 + $0x110] sm:$0xff] %v244
                %v246 = vld [vmem:[%s174 + $0x218] sm:$0xff]
                %247 = vst [vmem:[%s175 + $0x118] sm:$0xff] %v246
                %v248 = vld [vmem:[%s174 + $0x240] sm:$0xff]
                %249 = vst [vmem:[%s175 + $0x120] sm:$0xff] %v248
                %v250 = vld [vmem:[%s174 + $0x248] sm:$0xff]
                %251 = vst [vmem:[%s175 + $0x128] sm:$0xff] %v250
                %v252 = vld [vmem:[%s174 + $0x250] sm:$0xff]
                %253 = vst [vmem:[%s175 + $0x130] sm:$0xff] %v252
                %v254 = vld [vmem:[%s174 + $0x258] sm:$0xff]
                %255 = vst [vmem:[%s175 + $0x138] sm:$0xff] %v254
                %v256 = vld [vmem:[%s174 + $0x280] sm:$0xff]
                %257 = vst [vmem:[%s175 + $0x140] sm:$0xff] %v256
                %v258 = vld [vmem:[%s174 + $0x288] sm:$0xff]
                %259 = vst [vmem:[%s175 + $0x148] sm:$0xff] %v258
                %v260 = vld [vmem:[%s174 + $0x290] sm:$0xff]
                %261 = vst [vmem:[%s175 + $0x150] sm:$0xff] %v260
                %v262 = vld [vmem:[%s174 + $0x298] sm:$0xff]
                %263 = vst [vmem:[%s175 + $0x158] sm:$0xff] %v262
                %v264 = vld [vmem:[%s174 + $0x2c0] sm:$0xff]
                %265 = vst [vmem:[%s175 + $0x160] sm:$0xff] %v264
                %v266 = vld [vmem:[%s174 + $0x2c8] sm:$0xff]
                %267 = vst [vmem:[%s175 + $0x168] sm:$0xff] %v266
                %v268 = vld [vmem:[%s174 + $0x2d0] sm:$0xff]
                %269 = vst [vmem:[%s175 + $0x170] sm:$0xff] %v268
                %v270 = vld [vmem:[%s174 + $0x2d8] sm:$0xff]
                %271 = vst [vmem:[%s175 + $0x178] sm:$0xff] %v270
                %v272 = vld [vmem:[%s174 + $0x300] sm:$0xff]
                %273 = vst [vmem:[%s175 + $0x180] sm:$0xff] %v272
                %v274 = vld [vmem:[%s174 + $0x308] sm:$0xff]
                %275 = vst [vmem:[%s175 + $0x188] sm:$0xff] %v274
                %v276 = vld [vmem:[%s174 + $0x310] sm:$0xff]
                %277 = vst [vmem:[%s175 + $0x190] sm:$0xff] %v276
                %v278 = vld [vmem:[%s174 + $0x318] sm:$0xff]
                %279 = vst [vmem:[%s175 + $0x198] sm:$0xff] %v278
                %v280 = vld [vmem:[%s174 + $0x340] sm:$0xff]
                %281 = vst [vmem:[%s175 + $0x1a0] sm:$0xff] %v280
                %v282 = vld [vmem:[%s174 + $0x348] sm:$0xff]
                %283 = vst [vmem:[%s175 + $0x1a8] sm:$0xff] %v282
                %v284 = vld [vmem:[%s174 + $0x350] sm:$0xff]
                %285 = vst [vmem:[%s175 + $0x1b0] sm:$0xff] %v284
                %v286 = vld [vmem:[%s174 + $0x358] sm:$0xff]
                %287 = vst [vmem:[%s175 + $0x1b8] sm:$0xff] %v286
                %v288 = vld [vmem:[%s174 + $0x380] sm:$0xff]
                %289 = vst [vmem:[%s175 + $0x1c0] sm:$0xff] %v288
                %v290 = vld [vmem:[%s174 + $0x388] sm:$0xff]
                %291 = vst [vmem:[%s175 + $0x1c8] sm:$0xff] %v290
                %v292 = vld [vmem:[%s174 + $0x390] sm:$0xff]
                %293 = vst [vmem:[%s175 + $0x1d0] sm:$0xff] %v292
                %v294 = vld [vmem:[%s174 + $0x398] sm:$0xff]
                %295 = vst [vmem:[%s175 + $0x1d8] sm:$0xff] %v294
                %v296 = vld [vmem:[%s174 + $0x3c0] sm:$0xff]
                %297 = vst [vmem:[%s175 + $0x1e0] sm:$0xff] %v296
                %v298 = vld [vmem:[%s174 + $0x3c8] sm:$0xff]
                %299 = vst [vmem:[%s175 + $0x1e8] sm:$0xff] %v298
                %v300 = vld [vmem:[%s174 + $0x3d0] sm:$0xff]
                %301 = vst [vmem:[%s175 + $0x1f0] sm:$0xff] %v300
                %v302 = vld [vmem:[%s174 + $0x3d8] sm:$0xff]
                %303 = vst [vmem:[%s175 + $0x1f8] sm:$0xff] %v302
                %v304 = vld [vmem:[%s174 + $0x400] sm:$0xff]
                %305 = vst [vmem:[%s175 + $0x200] sm:$0xff] %v304
                %v306 = vld [vmem:[%s174 + $0x408] sm:$0xff]
                %307 = vst [vmem:[%s175 + $0x208] sm:$0xff] %v306
                %v308 = vld [vmem:[%s174 + $0x410] sm:$0xff]
                %309 = vst [vmem:[%s175 + $0x210] sm:$0xff] %v308
                %v310 = vld [vmem:[%s174 + $0x418] sm:$0xff]
                %311 = vst [vmem:[%s175 + $0x218] sm:$0xff] %v310
                %v312 = vld [vmem:[%s174 + $0x440] sm:$0xff]
                %313 = vst [vmem:[%s175 + $0x220] sm:$0xff] %v312
                %v314 = vld [vmem:[%s174 + $0x448] sm:$0xff]
                %315 = vst [vmem:[%s175 + $0x228] sm:$0xff] %v314
                %v316 = vld [vmem:[%s174 + $0x450] sm:$0xff]
                %317 = vst [vmem:[%s175 + $0x230] sm:$0xff] %v316
                %v318 = vld [vmem:[%s174 + $0x458] sm:$0xff]
                %319 = vst [vmem:[%s175 + $0x238] sm:$0xff] %v318
                %v320 = vld [vmem:[%s174 + $0x480] sm:$0xff]
                %321 = vst [vmem:[%s175 + $0x240] sm:$0xff] %v320
                %v322 = vld [vmem:[%s174 + $0x488] sm:$0xff]
                %323 = vst [vmem:[%s175 + $0x248] sm:$0xff] %v322
                %v324 = vld [vmem:[%s174 + $0x490] sm:$0xff]
                %325 = vst [vmem:[%s175 + $0x250] sm:$0xff] %v324
                %v326 = vld [vmem:[%s174 + $0x498] sm:$0xff]
                %327 = vst [vmem:[%s175 + $0x258] sm:$0xff] %v326
                %v328 = vld [vmem:[%s174 + $0x4c0] sm:$0xff]
                %329 = vst [vmem:[%s175 + $0x260] sm:$0xff] %v328
                %v330 = vld [vmem:[%s174 + $0x4c8] sm:$0xff]
                %331 = vst [vmem:[%s175 + $0x268] sm:$0xff] %v330
                %v332 = vld [vmem:[%s174 + $0x4d0] sm:$0xff]
                %333 = vst [vmem:[%s175 + $0x270] sm:$0xff] %v332
                %v334 = vld [vmem:[%s174 + $0x4d8] sm:$0xff]
                %335 = vst [vmem:[%s175 + $0x278] sm:$0xff] %v334
                %v336 = vld [vmem:[%s174 + $0x500] sm:$0xff]
                %337 = vst [vmem:[%s175 + $0x280] sm:$0xff] %v336
                %v338 = vld [vmem:[%s174 + $0x508] sm:$0xff]
                %339 = vst [vmem:[%s175 + $0x288] sm:$0xff] %v338
                %v340 = vld [vmem:[%s174 + $0x510] sm:$0xff]
                %341 = vst [vmem:[%s175 + $0x290] sm:$0xff] %v340
                %v342 = vld [vmem:[%s174 + $0x518] sm:$0xff]
                %343 = vst [vmem:[%s175 + $0x298] sm:$0xff] %v342
                %v344 = vld [vmem:[%s174 + $0x540] sm:$0xff]
                %345 = vst [vmem:[%s175 + $0x2a0] sm:$0xff] %v344
                %v346 = vld [vmem:[%s174 + $0x548] sm:$0xff]
                %347 = vst [vmem:[%s175 + $0x2a8] sm:$0xff] %v346
                %v348 = vld [vmem:[%s174 + $0x550] sm:$0xff]
                %349 = vst [vmem:[%s175 + $0x2b0] sm:$0xff] %v348
                %v350 = vld [vmem:[%s174 + $0x558] sm:$0xff]
                %351 = vst [vmem:[%s175 + $0x2b8] sm:$0xff] %v350
                %v352 = vld [vmem:[%s174 + $0x580] sm:$0xff]
                %353 = vst [vmem:[%s175 + $0x2c0] sm:$0xff] %v352
                %v354 = vld [vmem:[%s174 + $0x588] sm:$0xff]
                %355 = vst [vmem:[%s175 + $0x2c8] sm:$0xff] %v354
                %v356 = vld [vmem:[%s174 + $0x590] sm:$0xff]
                %357 = vst [vmem:[%s175 + $0x2d0] sm:$0xff] %v356
                %v358 = vld [vmem:[%s174 + $0x598] sm:$0xff]
                %359 = vst [vmem:[%s175 + $0x2d8] sm:$0xff] %v358
                %v360 = vld [vmem:[%s174 + $0x5c0] sm:$0xff]
                %361 = vst [vmem:[%s175 + $0x2e0] sm:$0xff] %v360
                %v362 = vld [vmem:[%s174 + $0x5c8] sm:$0xff]
                %363 = vst [vmem:[%s175 + $0x2e8] sm:$0xff] %v362
                %v364 = vld [vmem:[%s174 + $0x5d0] sm:$0xff]
                %365 = vst [vmem:[%s175 + $0x2f0] sm:$0xff] %v364
                %v366 = vld [vmem:[%s174 + $0x5d8] sm:$0xff]
                %367 = vst [vmem:[%s175 + $0x2f8] sm:$0xff] %v366
                %v368 = vld [vmem:[%s174 + $0x600] sm:$0xff]
                %369 = vst [vmem:[%s175 + $0x300] sm:$0xff] %v368
                %v370 = vld [vmem:[%s174 + $0x608] sm:$0xff]
                %371 = vst [vmem:[%s175 + $0x308] sm:$0xff] %v370
                %v372 = vld [vmem:[%s174 + $0x610] sm:$0xff]
                %373 = vst [vmem:[%s175 + $0x310] sm:$0xff] %v372
                %v374 = vld [vmem:[%s174 + $0x618] sm:$0xff]
                %375 = vst [vmem:[%s175 + $0x318] sm:$0xff] %v374
                %v376 = vld [vmem:[%s174 + $0x640] sm:$0xff]
                %377 = vst [vmem:[%s175 + $0x320] sm:$0xff] %v376
                %v378 = vld [vmem:[%s174 + $0x648] sm:$0xff]
                %379 = vst [vmem:[%s175 + $0x328] sm:$0xff] %v378
                %v380 = vld [vmem:[%s174 + $0x650] sm:$0xff]
                %381 = vst [vmem:[%s175 + $0x330] sm:$0xff] %v380
                %v382 = vld [vmem:[%s174 + $0x658] sm:$0xff]
                %383 = vst [vmem:[%s175 + $0x338] sm:$0xff] %v382
                %v384 = vld [vmem:[%s174 + $0x680] sm:$0xff]
                %385 = vst [vmem:[%s175 + $0x340] sm:$0xff] %v384
                %v386 = vld [vmem:[%s174 + $0x688] sm:$0xff]
                %387 = vst [vmem:[%s175 + $0x348] sm:$0xff] %v386
                %v388 = vld [vmem:[%s174 + $0x690] sm:$0xff]
                %389 = vst [vmem:[%s175 + $0x350] sm:$0xff] %v388
                %v390 = vld [vmem:[%s174 + $0x698] sm:$0xff]
                %391 = vst [vmem:[%s175 + $0x358] sm:$0xff] %v390
                %v392 = vld [vmem:[%s174 + $0x6c0] sm:$0xff]
                %393 = vst [vmem:[%s175 + $0x360] sm:$0xff] %v392
                %v394 = vld [vmem:[%s174 + $0x6c8] sm:$0xff]
                %395 = vst [vmem:[%s175 + $0x368] sm:$0xff] %v394
                %v396 = vld [vmem:[%s174 + $0x6d0] sm:$0xff]
                %397 = vst [vmem:[%s175 + $0x370] sm:$0xff] %v396
                %v398 = vld [vmem:[%s174 + $0x6d8] sm:$0xff]
                %399 = vst [vmem:[%s175 + $0x378] sm:$0xff] %v398
                %v400 = vld [vmem:[%s174 + $0x700] sm:$0xff]
                %401 = vst [vmem:[%s175 + $0x380] sm:$0xff] %v400
                %v402 = vld [vmem:[%s174 + $0x708] sm:$0xff]
                %403 = vst [vmem:[%s175 + $0x388] sm:$0xff] %v402
                %v404 = vld [vmem:[%s174 + $0x710] sm:$0xff]
                %405 = vst [vmem:[%s175 + $0x390] sm:$0xff] %v404
                %v406 = vld [vmem:[%s174 + $0x718] sm:$0xff]
                %407 = vst [vmem:[%s175 + $0x398] sm:$0xff] %v406
                %v408 = vld [vmem:[%s174 + $0x740] sm:$0xff]
                %409 = vst [vmem:[%s175 + $0x3a0] sm:$0xff] %v408
                %v410 = vld [vmem:[%s174 + $0x748] sm:$0xff]
                %411 = vst [vmem:[%s175 + $0x3a8] sm:$0xff] %v410
                %v412 = vld [vmem:[%s174 + $0x750] sm:$0xff]
                %413 = vst [vmem:[%s175 + $0x3b0] sm:$0xff] %v412
                %v414 = vld [vmem:[%s174 + $0x758] sm:$0xff]
                %415 = vst [vmem:[%s175 + $0x3b8] sm:$0xff] %v414
                %v416 = vld [vmem:[%s174 + $0x780] sm:$0xff]
                %417 = vst [vmem:[%s175 + $0x3c0] sm:$0xff] %v416
                %v418 = vld [vmem:[%s174 + $0x788] sm:$0xff]
                %419 = vst [vmem:[%s175 + $0x3c8] sm:$0xff] %v418
                %v420 = vld [vmem:[%s174 + $0x790] sm:$0xff]
                %421 = vst [vmem:[%s175 + $0x3d0] sm:$0xff] %v420
                %v422 = vld [vmem:[%s174 + $0x798] sm:$0xff]
                %423 = vst [vmem:[%s175 + $0x3d8] sm:$0xff] %v422
                %v424 = vld [vmem:[%s174 + $0x7c0] sm:$0xff]
                %425 = vst [vmem:[%s175 + $0x3e0] sm:$0xff] %v424
                %v426 = vld [vmem:[%s174 + $0x7c8] sm:$0xff]
                %427 = vst [vmem:[%s175 + $0x3e8] sm:$0xff] %v426
                %v428 = vld [vmem:[%s174 + $0x7d0] sm:$0xff]
                %429 = vst [vmem:[%s175 + $0x3f0] sm:$0xff] %v428
                %v430 = vld [vmem:[%s174 + $0x7d8] sm:$0xff]
                %431 = vst [vmem:[%s175 + $0x3f8] sm:$0xff] %v430
                %v432 = vld [vmem:[%s174 + $0x800] sm:$0xff]
                %433 = vst [vmem:[%s175 + $0x400] sm:$0xff] %v432
                %v434 = vld [vmem:[%s174 + $0x808] sm:$0xff]
                %435 = vst [vmem:[%s175 + $0x408] sm:$0xff] %v434
                %v436 = vld [vmem:[%s174 + $0x810] sm:$0xff]
                %437 = vst [vmem:[%s175 + $0x410] sm:$0xff] %v436
                %v438 = vld [vmem:[%s174 + $0x818] sm:$0xff]
                %439 = vst [vmem:[%s175 + $0x418] sm:$0xff] %v438
                %v440 = vld [vmem:[%s174 + $0x840] sm:$0xff]
                %441 = vst [vmem:[%s175 + $0x420] sm:$0xff] %v440
                %v442 = vld [vmem:[%s174 + $0x848] sm:$0xff]
                %443 = vst [vmem:[%s175 + $0x428] sm:$0xff] %v442
                %v444 = vld [vmem:[%s174 + $0x850] sm:$0xff]
                %445 = vst [vmem:[%s175 + $0x430] sm:$0xff] %v444
                %v446 = vld [vmem:[%s174 + $0x858] sm:$0xff]
                %447 = vst [vmem:[%s175 + $0x438] sm:$0xff] %v446
                %v448 = vld [vmem:[%s174 + $0x880] sm:$0xff]
                %449 = vst [vmem:[%s175 + $0x440] sm:$0xff] %v448
                %v450 = vld [vmem:[%s174 + $0x888] sm:$0xff]
                %451 = vst [vmem:[%s175 + $0x448] sm:$0xff] %v450
                %v452 = vld [vmem:[%s174 + $0x890] sm:$0xff]
                %453 = vst [vmem:[%s175 + $0x450] sm:$0xff] %v452
                %v454 = vld [vmem:[%s174 + $0x898] sm:$0xff]
                %455 = vst [vmem:[%s175 + $0x458] sm:$0xff] %v454
                %v456 = vld [vmem:[%s174 + $0x8c0] sm:$0xff]
                %457 = vst [vmem:[%s175 + $0x460] sm:$0xff] %v456
                %v458 = vld [vmem:[%s174 + $0x8c8] sm:$0xff]
                %459 = vst [vmem:[%s175 + $0x468] sm:$0xff] %v458
                %v460 = vld [vmem:[%s174 + $0x8d0] sm:$0xff]
                %461 = vst [vmem:[%s175 + $0x470] sm:$0xff] %v460
                %v462 = vld [vmem:[%s174 + $0x8d8] sm:$0xff]
                %463 = vst [vmem:[%s175 + $0x478] sm:$0xff] %v462
                %v464 = vld [vmem:[%s174 + $0x900] sm:$0xff]
                %465 = vst [vmem:[%s175 + $0x480] sm:$0xff] %v464
                %v466 = vld [vmem:[%s174 + $0x908] sm:$0xff]
                %467 = vst [vmem:[%s175 + $0x488] sm:$0xff] %v466
                %v468 = vld [vmem:[%s174 + $0x910] sm:$0xff]
                %469 = vst [vmem:[%s175 + $0x490] sm:$0xff] %v468
                %v470 = vld [vmem:[%s174 + $0x918] sm:$0xff]
                %471 = vst [vmem:[%s175 + $0x498] sm:$0xff] %v470
                %v472 = vld [vmem:[%s174 + $0x940] sm:$0xff]
                %473 = vst [vmem:[%s175 + $0x4a0] sm:$0xff] %v472
                %v474 = vld [vmem:[%s174 + $0x948] sm:$0xff]
                %475 = vst [vmem:[%s175 + $0x4a8] sm:$0xff] %v474
                %v476 = vld [vmem:[%s174 + $0x950] sm:$0xff]
                %477 = vst [vmem:[%s175 + $0x4b0] sm:$0xff] %v476
                %v478 = vld [vmem:[%s174 + $0x958] sm:$0xff]
                %479 = vst [vmem:[%s175 + $0x4b8] sm:$0xff] %v478
                %v480 = vld [vmem:[%s174 + $0x980] sm:$0xff]
                %481 = vst [vmem:[%s175 + $0x4c0] sm:$0xff] %v480
                %v482 = vld [vmem:[%s174 + $0x988] sm:$0xff]
                %483 = vst [vmem:[%s175 + $0x4c8] sm:$0xff] %v482
                %v484 = vld [vmem:[%s174 + $0x990] sm:$0xff]
                %485 = vst [vmem:[%s175 + $0x4d0] sm:$0xff] %v484
                %v486 = vld [vmem:[%s174 + $0x998] sm:$0xff]
                %487 = vst [vmem:[%s175 + $0x4d8] sm:$0xff] %v486
                %v488 = vld [vmem:[%s174 + $0x9c0] sm:$0xff]
                %489 = vst [vmem:[%s175 + $0x4e0] sm:$0xff] %v488
                %v490 = vld [vmem:[%s174 + $0x9c8] sm:$0xff]
                %491 = vst [vmem:[%s175 + $0x4e8] sm:$0xff] %v490
                %v492 = vld [vmem:[%s174 + $0x9d0] sm:$0xff]
                %493 = vst [vmem:[%s175 + $0x4f0] sm:$0xff] %v492
                %v494 = vld [vmem:[%s174 + $0x9d8] sm:$0xff]
                %495 = vst [vmem:[%s175 + $0x4f8] sm:$0xff] %v494
                %v496 = vld [vmem:[%s174 + $0xa00] sm:$0xff]
                %497 = vst [vmem:[%s175 + $0x500] sm:$0xff] %v496
                %v498 = vld [vmem:[%s174 + $0xa08] sm:$0xff]
                %499 = vst [vmem:[%s175 + $0x508] sm:$0xff] %v498
                %v500 = vld [vmem:[%s174 + $0xa10] sm:$0xff]
                %501 = vst [vmem:[%s175 + $0x510] sm:$0xff] %v500
                %v502 = vld [vmem:[%s174 + $0xa18] sm:$0xff]
                %503 = vst [vmem:[%s175 + $0x518] sm:$0xff] %v502
                %v504 = vld [vmem:[%s174 + $0xa40] sm:$0xff]
                %505 = vst [vmem:[%s175 + $0x520] sm:$0xff] %v504
                %v506 = vld [vmem:[%s174 + $0xa48] sm:$0xff]
                %507 = vst [vmem:[%s175 + $0x528] sm:$0xff] %v506
                %v508 = vld [vmem:[%s174 + $0xa50] sm:$0xff]
                %509 = vst [vmem:[%s175 + $0x530] sm:$0xff] %v508
                %v510 = vld [vmem:[%s174 + $0xa58] sm:$0xff]
                %511 = vst [vmem:[%s175 + $0x538] sm:$0xff] %v510
                %v512 = vld [vmem:[%s174 + $0xa80] sm:$0xff]
                %513 = vst [vmem:[%s175 + $0x540] sm:$0xff] %v512
                %v514 = vld [vmem:[%s174 + $0xa88] sm:$0xff]
                %515 = vst [vmem:[%s175 + $0x548] sm:$0xff] %v514
                %v516 = vld [vmem:[%s174 + $0xa90] sm:$0xff]
                %517 = vst [vmem:[%s175 + $0x550] sm:$0xff] %v516
                %v518 = vld [vmem:[%s174 + $0xa98] sm:$0xff]
                %519 = vst [vmem:[%s175 + $0x558] sm:$0xff] %v518
                %v520 = vld [vmem:[%s174 + $0xac0] sm:$0xff]
                %521 = vst [vmem:[%s175 + $0x560] sm:$0xff] %v520
                %v522 = vld [vmem:[%s174 + $0xac8] sm:$0xff]
                %523 = vst [vmem:[%s175 + $0x568] sm:$0xff] %v522
                %v524 = vld [vmem:[%s174 + $0xad0] sm:$0xff]
                %525 = vst [vmem:[%s175 + $0x570] sm:$0xff] %v524
                %v526 = vld [vmem:[%s174 + $0xad8] sm:$0xff]
                %527 = vst [vmem:[%s175 + $0x578] sm:$0xff] %v526
                %v528 = vld [vmem:[%s174 + $0xb00] sm:$0xff]
                %529 = vst [vmem:[%s175 + $0x580] sm:$0xff] %v528
                %v530 = vld [vmem:[%s174 + $0xb08] sm:$0xff]
                %531 = vst [vmem:[%s175 + $0x588] sm:$0xff] %v530
                %v532 = vld [vmem:[%s174 + $0xb10] sm:$0xff]
                %533 = vst [vmem:[%s175 + $0x590] sm:$0xff] %v532
                %v534 = vld [vmem:[%s174 + $0xb18] sm:$0xff]
                %535 = vst [vmem:[%s175 + $0x598] sm:$0xff] %v534
                %v536 = vld [vmem:[%s174 + $0xb40] sm:$0xff]
                %537 = vst [vmem:[%s175 + $0x5a0] sm:$0xff] %v536
                %v538 = vld [vmem:[%s174 + $0xb48] sm:$0xff]
                %539 = vst [vmem:[%s175 + $0x5a8] sm:$0xff] %v538
                %v540 = vld [vmem:[%s174 + $0xb50] sm:$0xff]
                %541 = vst [vmem:[%s175 + $0x5b0] sm:$0xff] %v540
                %v542 = vld [vmem:[%s174 + $0xb58] sm:$0xff]
                %543 = vst [vmem:[%s175 + $0x5b8] sm:$0xff] %v542
                %v544 = vld [vmem:[%s174 + $0xb80] sm:$0xff]
                %545 = vst [vmem:[%s175 + $0x5c0] sm:$0xff] %v544
                %v546 = vld [vmem:[%s174 + $0xb88] sm:$0xff]
                %547 = vst [vmem:[%s175 + $0x5c8] sm:$0xff] %v546
                %v548 = vld [vmem:[%s174 + $0xb90] sm:$0xff]
                %549 = vst [vmem:[%s175 + $0x5d0] sm:$0xff] %v548
                %v550 = vld [vmem:[%s174 + $0xb98] sm:$0xff]
                %551 = vst [vmem:[%s175 + $0x5d8] sm:$0xff] %v550
                %v552 = vld [vmem:[%s174 + $0xbc0] sm:$0xff]
                %553 = vst [vmem:[%s175 + $0x5e0] sm:$0xff] %v552
                %v554 = vld [vmem:[%s174 + $0xbc8] sm:$0xff]
                %555 = vst [vmem:[%s175 + $0x5e8] sm:$0xff] %v554
                %v556 = vld [vmem:[%s174 + $0xbd0] sm:$0xff]
                %557 = vst [vmem:[%s175 + $0x5f0] sm:$0xff] %v556
                %v558 = vld [vmem:[%s174 + $0xbd8] sm:$0xff]
                %559 = vst [vmem:[%s175 + $0x5f8] sm:$0xff] %v558
                %v560 = vld [vmem:[%s174 + $0xc00] sm:$0xff]
                %561 = vst [vmem:[%s175 + $0x600] sm:$0xff] %v560
                %v562 = vld [vmem:[%s174 + $0xc08] sm:$0xff]
                %563 = vst [vmem:[%s175 + $0x608] sm:$0xff] %v562
                %v564 = vld [vmem:[%s174 + $0xc10] sm:$0xff]
                %565 = vst [vmem:[%s175 + $0x610] sm:$0xff] %v564
                %v566 = vld [vmem:[%s174 + $0xc18] sm:$0xff]
                %567 = vst [vmem:[%s175 + $0x618] sm:$0xff] %v566
                %v568 = vld [vmem:[%s174 + $0xc40] sm:$0xff]
                %569 = vst [vmem:[%s175 + $0x620] sm:$0xff] %v568
                %v570 = vld [vmem:[%s174 + $0xc48] sm:$0xff]
                %571 = vst [vmem:[%s175 + $0x628] sm:$0xff] %v570
                %v572 = vld [vmem:[%s174 + $0xc50] sm:$0xff]
                %573 = vst [vmem:[%s175 + $0x630] sm:$0xff] %v572
                %v574 = vld [vmem:[%s174 + $0xc58] sm:$0xff]
                %575 = vst [vmem:[%s175 + $0x638] sm:$0xff] %v574
                %v576 = vld [vmem:[%s174 + $0xc80] sm:$0xff]
                %577 = vst [vmem:[%s175 + $0x640] sm:$0xff] %v576
                %v578 = vld [vmem:[%s174 + $0xc88] sm:$0xff]
                %579 = vst [vmem:[%s175 + $0x648] sm:$0xff] %v578
                %v580 = vld [vmem:[%s174 + $0xc90] sm:$0xff]
                %581 = vst [vmem:[%s175 + $0x650] sm:$0xff] %v580
                %v582 = vld [vmem:[%s174 + $0xc98] sm:$0xff]
                %583 = vst [vmem:[%s175 + $0x658] sm:$0xff] %v582
                %v584 = vld [vmem:[%s174 + $0xcc0] sm:$0xff]
                %585 = vst [vmem:[%s175 + $0x660] sm:$0xff] %v584
                %v586 = vld [vmem:[%s174 + $0xcc8] sm:$0xff]
                %587 = vst [vmem:[%s175 + $0x668] sm:$0xff] %v586
                %v588 = vld [vmem:[%s174 + $0xcd0] sm:$0xff]
                %589 = vst [vmem:[%s175 + $0x670] sm:$0xff] %v588
                %v590 = vld [vmem:[%s174 + $0xcd8] sm:$0xff]
                %591 = vst [vmem:[%s175 + $0x678] sm:$0xff] %v590
                %v592 = vld [vmem:[%s174 + $0xd00] sm:$0xff]
                %593 = vst [vmem:[%s175 + $0x680] sm:$0xff] %v592
                %v594 = vld [vmem:[%s174 + $0xd08] sm:$0xff]
                %595 = vst [vmem:[%s175 + $0x688] sm:$0xff] %v594
                %v596 = vld [vmem:[%s174 + $0xd10] sm:$0xff]
                %597 = vst [vmem:[%s175 + $0x690] sm:$0xff] %v596
                %v598 = vld [vmem:[%s174 + $0xd18] sm:$0xff]
                %599 = vst [vmem:[%s175 + $0x698] sm:$0xff] %v598
                %v600 = vld [vmem:[%s174 + $0xd40] sm:$0xff]
                %601 = vst [vmem:[%s175 + $0x6a0] sm:$0xff] %v600
                %v602 = vld [vmem:[%s174 + $0xd48] sm:$0xff]
                %603 = vst [vmem:[%s175 + $0x6a8] sm:$0xff] %v602
                %v604 = vld [vmem:[%s174 + $0xd50] sm:$0xff]
                %605 = vst [vmem:[%s175 + $0x6b0] sm:$0xff] %v604
                %v606 = vld [vmem:[%s174 + $0xd58] sm:$0xff]
                %607 = vst [vmem:[%s175 + $0x6b8] sm:$0xff] %v606
                %v608 = vld [vmem:[%s174 + $0xd80] sm:$0xff]
                %609 = vst [vmem:[%s175 + $0x6c0] sm:$0xff] %v608
                %v610 = vld [vmem:[%s174 + $0xd88] sm:$0xff]
                %611 = vst [vmem:[%s175 + $0x6c8] sm:$0xff] %v610
                %v612 = vld [vmem:[%s174 + $0xd90] sm:$0xff]
                %613 = vst [vmem:[%s175 + $0x6d0] sm:$0xff] %v612
                %v614 = vld [vmem:[%s174 + $0xd98] sm:$0xff]
                %615 = vst [vmem:[%s175 + $0x6d8] sm:$0xff] %v614
                %v616 = vld [vmem:[%s174 + $0xdc0] sm:$0xff]
                %617 = vst [vmem:[%s175 + $0x6e0] sm:$0xff] %v616
                %v618 = vld [vmem:[%s174 + $0xdc8] sm:$0xff]
                %619 = vst [vmem:[%s175 + $0x6e8] sm:$0xff] %v618
                %v620 = vld [vmem:[%s174 + $0xdd0] sm:$0xff]
                %621 = vst [vmem:[%s175 + $0x6f0] sm:$0xff] %v620
                %v622 = vld [vmem:[%s174 + $0xdd8] sm:$0xff]
                %623 = vst [vmem:[%s175 + $0x6f8] sm:$0xff] %v622
                %v624 = vld [vmem:[%s174 + $0xe00] sm:$0xff]
                %625 = vst [vmem:[%s175 + $0x700] sm:$0xff] %v624
                %v626 = vld [vmem:[%s174 + $0xe08] sm:$0xff]
                %627 = vst [vmem:[%s175 + $0x708] sm:$0xff] %v626
                %v628 = vld [vmem:[%s174 + $0xe10] sm:$0xff]
                %629 = vst [vmem:[%s175 + $0x710] sm:$0xff] %v628
                %v630 = vld [vmem:[%s174 + $0xe18] sm:$0xff]
                %631 = vst [vmem:[%s175 + $0x718] sm:$0xff] %v630
                %v632 = vld [vmem:[%s174 + $0xe40] sm:$0xff]
                %633 = vst [vmem:[%s175 + $0x720] sm:$0xff] %v632
                %v634 = vld [vmem:[%s174 + $0xe48] sm:$0xff]
                %635 = vst [vmem:[%s175 + $0x728] sm:$0xff] %v634
                %v636 = vld [vmem:[%s174 + $0xe50] sm:$0xff]
                %637 = vst [vmem:[%s175 + $0x730] sm:$0xff] %v636
                %v638 = vld [vmem:[%s174 + $0xe58] sm:$0xff]
                %639 = vst [vmem:[%s175 + $0x738] sm:$0xff] %v638
                %v640 = vld [vmem:[%s174 + $0xe80] sm:$0xff]
                %641 = vst [vmem:[%s175 + $0x740] sm:$0xff] %v640
                %v642 = vld [vmem:[%s174 + $0xe88] sm:$0xff]
                %643 = vst [vmem:[%s175 + $0x748] sm:$0xff] %v642
                %v644 = vld [vmem:[%s174 + $0xe90] sm:$0xff]
                %645 = vst [vmem:[%s175 + $0x750] sm:$0xff] %v644
                %v646 = vld [vmem:[%s174 + $0xe98] sm:$0xff]
                %647 = vst [vmem:[%s175 + $0x758] sm:$0xff] %v646
                %v648 = vld [vmem:[%s174 + $0xec0] sm:$0xff]
                %649 = vst [vmem:[%s175 + $0x760] sm:$0xff] %v648
                %v650 = vld [vmem:[%s174 + $0xec8] sm:$0xff]
                %651 = vst [vmem:[%s175 + $0x768] sm:$0xff] %v650
                %v652 = vld [vmem:[%s174 + $0xed0] sm:$0xff]
                %653 = vst [vmem:[%s175 + $0x770] sm:$0xff] %v652
                %v654 = vld [vmem:[%s174 + $0xed8] sm:$0xff]
                %655 = vst [vmem:[%s175 + $0x778] sm:$0xff] %v654
                %v656 = vld [vmem:[%s174 + $0xf00] sm:$0xff]
                %657 = vst [vmem:[%s175 + $0x780] sm:$0xff] %v656
                %v658 = vld [vmem:[%s174 + $0xf08] sm:$0xff]
                %659 = vst [vmem:[%s175 + $0x788] sm:$0xff] %v658
                %v660 = vld [vmem:[%s174 + $0xf10] sm:$0xff]
                %661 = vst [vmem:[%s175 + $0x790] sm:$0xff] %v660
                %v662 = vld [vmem:[%s174 + $0xf18] sm:$0xff]
                %663 = vst [vmem:[%s175 + $0x798] sm:$0xff] %v662
                %v664 = vld [vmem:[%s174 + $0xf40] sm:$0xff]
                %665 = vst [vmem:[%s175 + $0x7a0] sm:$0xff] %v664
                %v666 = vld [vmem:[%s174 + $0xf48] sm:$0xff]
                %667 = vst [vmem:[%s175 + $0x7a8] sm:$0xff] %v666
                %v668 = vld [vmem:[%s174 + $0xf50] sm:$0xff]
                %669 = vst [vmem:[%s175 + $0x7b0] sm:$0xff] %v668
                %v670 = vld [vmem:[%s174 + $0xf58] sm:$0xff]
                %671 = vst [vmem:[%s175 + $0x7b8] sm:$0xff] %v670
                %v672 = vld [vmem:[%s174 + $0xf80] sm:$0xff]
                %673 = vst [vmem:[%s175 + $0x7c0] sm:$0xff] %v672
                %v674 = vld [vmem:[%s174 + $0xf88] sm:$0xff]
                %675 = vst [vmem:[%s175 + $0x7c8] sm:$0xff] %v674
                %v676 = vld [vmem:[%s174 + $0xf90] sm:$0xff]
                %677 = vst [vmem:[%s175 + $0x7d0] sm:$0xff] %v676
                %v678 = vld [vmem:[%s174 + $0xf98] sm:$0xff]
                %679 = vst [vmem:[%s175 + $0x7d8] sm:$0xff] %v678
                %v680 = vld [vmem:[%s174 + $0xfc0] sm:$0xff]
                %681 = vst [vmem:[%s175 + $0x7e0] sm:$0xff] %v680
                %v682 = vld [vmem:[%s174 + $0xfc8] sm:$0xff]
                %683 = vst [vmem:[%s175 + $0x7e8] sm:$0xff] %v682
                %v684 = vld [vmem:[%s174 + $0xfd0] sm:$0xff]
                %685 = vst [vmem:[%s175 + $0x7f0] sm:$0xff] %v684
                %v686 = vld [vmem:[%s174 + $0xfd8] sm:$0xff]
                %687 = vst [vmem:[%s175 + $0x7f8] sm:$0xff] %v686
              $region37: #{resblock_decoder_forward.6} parent=31 // loop_footer
                %s173 = sadd.s32 1, %s169
              $region38: #{resblock_decoder_forward.6} parent=31 // loop_footer_branch
                %168 = sbr.rel target = $region34
              $region39: #{resblock_decoder_forward.6} parent=31 // loop_exit
                _
            $region32: #{resblock_decoder_forward.6} parent=27 // pred_fallthru
              _
            // Predicated region
            $region40: #{resblock_decoder_forward.6} parent=27 // pred_check
              _
            $region41: #{resblock_decoder_forward.6} parent=27 // pred_check_branch
              %689 = sbr.rel target = $region43
            $region42: #{resblock_decoder_forward.6} parent=27 // pred_region
              _
            $region43: #{resblock_decoder_forward.6} parent=27 // pred_fallthru
              _
          $region28: #{resblock_decoder_forward.6} parent=23 // pred_fallthru
            _
          %690 = vnop
        $region24: #{resblock_decoder_forward.6} parent=19 // pred_fallthru
          _
        // Predicated region
        $region44: #{resblock_decoder_forward.6} parent=19 // pred_check
          %p691 = pneg %p93
        $region45: #{resblock_decoder_forward.6} parent=19 // pred_check_branch
          %693 = sbr.rel (%p691) target = $region47
        $region46: #{resblock_decoder_forward.6} parent=19 // pred_region
          %s694 = smul.u32 8, %s17
          %p695 = scmp.lt.s32.totalorder %s694, 15
          %s696 = scalar_select %p695, %s694, 15
          %s697 = scalar_lea.vmem %s2, %s696
          %s698 = smul.u32 8, %s17
        $region47: #{resblock_decoder_forward.6} parent=19 // pred_fallthru
          _
      $region20: #{resblock_decoder_forward.6} parent=5 // pred_fallthru
        _
      %p699 = scmp.le.s32.totalorder 1, %s9
      %p700 = scmp.lt.s32.totalorder %s9, 3
      %p701 = pnand %p699, %p700
      %p702 = pneg %p701
      // Predicated region
      $region48: #{resblock_decoder_forward.6} parent=5 // pred_check
        _
      $region49: #{resblock_decoder_forward.6} parent=5 // pred_check_branch
        %704 = sbr.rel (%p701) target = $region51
      $region50: #{resblock_decoder_forward.6} parent=5 // pred_region
        %s705 = ssub.s32 %s9, 1
        %s706 = sand.u32 %s60, 1
        %s707 = sand.u32 %s60, 1
        %s708 = smul.addr %s707, 2048
        %s709 = scalar_lea.vmem [#allocation2], %s708
        // Predicated region
        $region52: #{resblock_decoder_forward.6} parent=50 // pred_check
          %p710 = pneg %p73
        $region53: #{resblock_decoder_forward.6} parent=50 // pred_check_branch
          %712 = sbr.rel (%p710) target = $region55
        $region54: #{resblock_decoder_forward.6} parent=50 // pred_region
          _
        $region55: #{resblock_decoder_forward.6} parent=50 // pred_fallthru
          _
        %p713 = scmp.lt.s32.totalorder %s18, 0
        %s714 = scalar_select %p713, %s18, 0
        %s715 = smul.addr %s714, 4
        %s716 = smul.addr %s715, 4
        %s717 = scalar_lea.vmem %s0, %s716
        %p718 = pneg %p47
        %p719 = pneg %p44
        %s720 = sand.u32 %s60, 1
        %s721 = sand.u32 %s60, 1
        %s722 = smul.addr %s721, 2048
        %s723 = scalar_lea.vmem [#allocation2], %s722
        %p724 = pneg %p73
        %p725 = pneg %p70
        %s726 = smul.u32 8, %s19
        %p727 = scmp.lt.s32.totalorder %s726, 15
        %s728 = scalar_select %p727, %s726, 15
        %s729 = scalar_lea.vmem %s2, %s728
        %p730 = pneg %p99
        %p731 = pneg %p96
        %p732 = pneg %p127
        %p733 = pneg %p124
        %s734 = smul.u32 8, %s19
        %p735 = scmp.lt.s32.totalorder %s18, 0
        %s736 = scalar_select %p735, %s18, 0
        %p737 = scmp.lt.s32.totalorder %s734, 15
        %s738 = scalar_select %p737, %s734, 15
        %s739 = smul.addr %s736, 16
        %s740 = sadd.s32 %s738, %s739
        %s741 = smul.addr %s740, 8
        %s742 = scalar_lea.vmem %s3, %s741
        %p743 = scmp.lt.s32.totalorder %s18, 0
        %s744 = scalar_select %p743, %s18, 0
        %s745 = smul.addr %s744, 4
        %s746 = smul.addr %s745, 4
        %s747 = scalar_lea.vmem %s0, %s746
        %s748 = smul.u32 8, %s19
        %s749 = smul.u32 8, %s19
        %p750 = scmp.lt.s32.totalorder %s749, 15
        %s751 = scalar_select %p750, %s749, 15
        %s752 = scalar_lea.vmem %s2, %s751
        %s753 = smul.u32 8, %s19
        %s754 = smul.u32 8, %s19
        %p755 = scmp.lt.s32.totalorder %s18, 0
        %s756 = scalar_select %p755, %s18, 0
        %p757 = scmp.lt.s32.totalorder %s754, 15
        %s758 = scalar_select %p757, %s754, 15
        %s759 = smul.addr %s756, 16
        %s760 = sadd.s32 %s758, %s759
        %s761 = smul.addr %s760, 8
        %s762 = scalar_lea.vmem %s3, %s761
        %s763 = smul.u32 8, %s19
        %v764 = vld [vmem:[%s747] sm:$0xff]
        %v765 = vld [vmem:[%s747 + $0x8] sm:$0xff]
        %v766 = vld [vmem:[%s709] sm:$0xff]
        %v767 = vld [vmem:[%s709 + $0x8] sm:$0xff]
        %v768 = vld [vmem:[%s709 + $0x10] sm:$0xff]
        %v769 = vld [vmem:[%s709 + $0x18] sm:$0xff]
        %v770 = vld [vmem:[%s709 + $0x20] sm:$0xff]
        %v771 = vld [vmem:[%s709 + $0x28] sm:$0xff]
        %v772 = vld [vmem:[%s709 + $0x30] sm:$0xff]
        %v773 = vld [vmem:[%s709 + $0x38] sm:$0xff]
        %v774 = vld [vmem:[%s709 + $0x40] sm:$0xff]
        %v775 = vld [vmem:[%s709 + $0x48] sm:$0xff]
        %v776 = vld [vmem:[%s709 + $0x50] sm:$0xff]
        %v777 = vld [vmem:[%s709 + $0x58] sm:$0xff]
        %v778 = vld [vmem:[%s709 + $0x60] sm:$0xff]
        %v779 = vld [vmem:[%s709 + $0x68] sm:$0xff]
        %v780 = vld [vmem:[%s709 + $0x70] sm:$0xff]
        %v781 = vld [vmem:[%s709 + $0x78] sm:$0xff]
        %v782 = vld [vmem:[%s709 + $0x80] sm:$0xff]
        %v783 = vld [vmem:[%s709 + $0x88] sm:$0xff]
        %v784 = vld [vmem:[%s709 + $0x90] sm:$0xff]
        %v785 = vld [vmem:[%s709 + $0x98] sm:$0xff]
        %v786 = vld [vmem:[%s709 + $0xa0] sm:$0xff]
        %v787 = vld [vmem:[%s709 + $0xa8] sm:$0xff]
        %v788 = vld [vmem:[%s709 + $0xb0] sm:$0xff]
        %v789 = vld [vmem:[%s709 + $0xb8] sm:$0xff]
        %v790 = vld [vmem:[%s709 + $0xc0] sm:$0xff]
        %v791 = vld [vmem:[%s709 + $0xc8] sm:$0xff]
        %v792 = vld [vmem:[%s709 + $0xd0] sm:$0xff]
        %v793 = vld [vmem:[%s709 + $0xd8] sm:$0xff]
        %v794 = vld [vmem:[%s709 + $0xe0] sm:$0xff]
        %v795 = vld [vmem:[%s709 + $0xe8] sm:$0xff]
        %v796 = vld [vmem:[%s709 + $0xf0] sm:$0xff]
        %v797 = vld [vmem:[%s709 + $0xf8] sm:$0xff]
        %v798 = vld [vmem:[%s709 + $0x100] sm:$0xff]
        %v799 = vld [vmem:[%s709 + $0x108] sm:$0xff]
        %v800 = vld [vmem:[%s709 + $0x110] sm:$0xff]
        %v801 = vld [vmem:[%s709 + $0x118] sm:$0xff]
        %v802 = vld [vmem:[%s709 + $0x120] sm:$0xff]
        %v803 = vld [vmem:[%s709 + $0x128] sm:$0xff]
        %v804 = vld [vmem:[%s709 + $0x130] sm:$0xff]
        %v805 = vld [vmem:[%s709 + $0x138] sm:$0xff]
        %v806 = vld [vmem:[%s709 + $0x140] sm:$0xff]
        %v807 = vld [vmem:[%s709 + $0x148] sm:$0xff]
        %v808 = vld [vmem:[%s709 + $0x150] sm:$0xff]
        %v809 = vld [vmem:[%s709 + $0x158] sm:$0xff]
        %v810 = vld [vmem:[%s709 + $0x160] sm:$0xff]
        %v811 = vld [vmem:[%s709 + $0x168] sm:$0xff]
        %v812 = vld [vmem:[%s709 + $0x170] sm:$0xff]
        %v813 = vld [vmem:[%s709 + $0x178] sm:$0xff]
        %v814 = vld [vmem:[%s709 + $0x180] sm:$0xff]
        %v815 = vld [vmem:[%s709 + $0x188] sm:$0xff]
        %v816 = vld [vmem:[%s709 + $0x190] sm:$0xff]
        %v817 = vld [vmem:[%s709 + $0x198] sm:$0xff]
        %v818 = vld [vmem:[%s709 + $0x1a0] sm:$0xff]
        %v819 = vld [vmem:[%s709 + $0x1a8] sm:$0xff]
        %v820 = vld [vmem:[%s709 + $0x1b0] sm:$0xff]
        %v821 = vld [vmem:[%s709 + $0x1b8] sm:$0xff]
        %v822 = vld [vmem:[%s709 + $0x1c0] sm:$0xff]
        %v823 = vld [vmem:[%s709 + $0x1c8] sm:$0xff]
        %v824 = vld [vmem:[%s709 + $0x1d0] sm:$0xff]
        %v825 = vld [vmem:[%s709 + $0x1d8] sm:$0xff]
        %v826 = vld [vmem:[%s709 + $0x1e0] sm:$0xff]
        %v827 = vld [vmem:[%s709 + $0x1e8] sm:$0xff]
        %v828 = vld [vmem:[%s709 + $0x1f0] sm:$0xff]
        %v829 = vld [vmem:[%s709 + $0x1f8] sm:$0xff]
        %v830 = vld [vmem:[%s709 + $0x200] sm:$0xff]
        %v831 = vld [vmem:[%s709 + $0x208] sm:$0xff]
        %v832 = vld [vmem:[%s709 + $0x210] sm:$0xff]
        %v833 = vld [vmem:[%s709 + $0x218] sm:$0xff]
        %v834 = vld [vmem:[%s709 + $0x220] sm:$0xff]
        %v835 = vld [vmem:[%s709 + $0x228] sm:$0xff]
        %v836 = vld [vmem:[%s709 + $0x230] sm:$0xff]
        %v837 = vld [vmem:[%s709 + $0x238] sm:$0xff]
        %v838 = vld [vmem:[%s709 + $0x240] sm:$0xff]
        %v839 = vld [vmem:[%s709 + $0x248] sm:$0xff]
        %v840 = vld [vmem:[%s709 + $0x250] sm:$0xff]
        %v841 = vld [vmem:[%s709 + $0x258] sm:$0xff]
        %v842 = vld [vmem:[%s709 + $0x260] sm:$0xff]
        %v843 = vld [vmem:[%s709 + $0x268] sm:$0xff]
        %v844 = vld [vmem:[%s709 + $0x270] sm:$0xff]
        %v845 = vld [vmem:[%s709 + $0x278] sm:$0xff]
        %v846 = vld [vmem:[%s709 + $0x280] sm:$0xff]
        %v847 = vld [vmem:[%s709 + $0x288] sm:$0xff]
        %v848 = vld [vmem:[%s709 + $0x290] sm:$0xff]
        %v849 = vld [vmem:[%s709 + $0x298] sm:$0xff]
        %v850 = vld [vmem:[%s709 + $0x2a0] sm:$0xff]
        %v851 = vld [vmem:[%s709 + $0x2a8] sm:$0xff]
        %v852 = vld [vmem:[%s709 + $0x2b0] sm:$0xff]
        %v853 = vld [vmem:[%s709 + $0x2b8] sm:$0xff]
        %v854 = vld [vmem:[%s709 + $0x2c0] sm:$0xff]
        %v855 = vld [vmem:[%s709 + $0x2c8] sm:$0xff]
        %v856 = vld [vmem:[%s709 + $0x2d0] sm:$0xff]
        %v857 = vld [vmem:[%s709 + $0x2d8] sm:$0xff]
        %v858 = vld [vmem:[%s709 + $0x2e0] sm:$0xff]
        %v859 = vld [vmem:[%s709 + $0x2e8] sm:$0xff]
        %v860 = vld [vmem:[%s709 + $0x2f0] sm:$0xff]
        %v861 = vld [vmem:[%s709 + $0x2f8] sm:$0xff]
        %v862 = vld [vmem:[%s709 + $0x300] sm:$0xff]
        %v863 = vld [vmem:[%s709 + $0x308] sm:$0xff]
        %v864 = vld [vmem:[%s709 + $0x310] sm:$0xff]
        %v865 = vld [vmem:[%s709 + $0x318] sm:$0xff]
        %v866 = vld [vmem:[%s709 + $0x320] sm:$0xff]
        %v867 = vld [vmem:[%s709 + $0x328] sm:$0xff]
        %v868 = vld [vmem:[%s709 + $0x330] sm:$0xff]
        %v869 = vld [vmem:[%s709 + $0x338] sm:$0xff]
        %v870 = vld [vmem:[%s709 + $0x340] sm:$0xff]
        %v871 = vld [vmem:[%s709 + $0x348] sm:$0xff]
        %v872 = vld [vmem:[%s709 + $0x350] sm:$0xff]
        %v873 = vld [vmem:[%s709 + $0x358] sm:$0xff]
        %v874 = vld [vmem:[%s709 + $0x360] sm:$0xff]
        %v875 = vld [vmem:[%s709 + $0x368] sm:$0xff]
        %v876 = vld [vmem:[%s709 + $0x370] sm:$0xff]
        %v877 = vld [vmem:[%s709 + $0x378] sm:$0xff]
        %v878 = vld [vmem:[%s709 + $0x380] sm:$0xff]
        %v879 = vld [vmem:[%s709 + $0x388] sm:$0xff]
        %v880 = vld [vmem:[%s709 + $0x390] sm:$0xff]
        %v881 = vld [vmem:[%s709 + $0x398] sm:$0xff]
        %v882 = vld [vmem:[%s709 + $0x3a0] sm:$0xff]
        %v883 = vld [vmem:[%s709 + $0x3a8] sm:$0xff]
        %v884 = vld [vmem:[%s709 + $0x3b0] sm:$0xff]
        %v885 = vld [vmem:[%s709 + $0x3b8] sm:$0xff]
        %v886 = vld [vmem:[%s709 + $0x3c0] sm:$0xff]
        %v887 = vld [vmem:[%s709 + $0x3c8] sm:$0xff]
        %v888 = vld [vmem:[%s709 + $0x3d0] sm:$0xff]
        %v889 = vld [vmem:[%s709 + $0x3d8] sm:$0xff]
        %v890 = vld [vmem:[%s709 + $0x3e0] sm:$0xff]
        %v891 = vld [vmem:[%s709 + $0x3e8] sm:$0xff]
        %v892 = vld [vmem:[%s709 + $0x3f0] sm:$0xff]
        %v893 = vld [vmem:[%s709 + $0x3f8] sm:$0xff]
        %v894 = vld [vmem:[%s709 + $0x400] sm:$0xff]
        %v895 = vld [vmem:[%s709 + $0x408] sm:$0xff]
        %v896 = vld [vmem:[%s709 + $0x410] sm:$0xff]
        %v897 = vld [vmem:[%s709 + $0x418] sm:$0xff]
        %v898 = vld [vmem:[%s709 + $0x420] sm:$0xff]
        %v899 = vld [vmem:[%s709 + $0x428] sm:$0xff]
        %v900 = vld [vmem:[%s709 + $0x430] sm:$0xff]
        %v901 = vld [vmem:[%s709 + $0x438] sm:$0xff]
        %v902 = vld [vmem:[%s709 + $0x440] sm:$0xff]
        %v903 = vld [vmem:[%s709 + $0x448] sm:$0xff]
        %v904 = vld [vmem:[%s709 + $0x450] sm:$0xff]
        %v905 = vld [vmem:[%s709 + $0x458] sm:$0xff]
        %v906 = vld [vmem:[%s709 + $0x460] sm:$0xff]
        %v907 = vld [vmem:[%s709 + $0x468] sm:$0xff]
        %v908 = vld [vmem:[%s709 + $0x470] sm:$0xff]
        %v909 = vld [vmem:[%s709 + $0x478] sm:$0xff]
        %v910 = vld [vmem:[%s709 + $0x480] sm:$0xff]
        %v911 = vld [vmem:[%s709 + $0x488] sm:$0xff]
        %v912 = vld [vmem:[%s709 + $0x490] sm:$0xff]
        %v913 = vld [vmem:[%s709 + $0x498] sm:$0xff]
        %v914 = vld [vmem:[%s709 + $0x4a0] sm:$0xff]
        %v915 = vld [vmem:[%s709 + $0x4a8] sm:$0xff]
        %v916 = vld [vmem:[%s709 + $0x4b0] sm:$0xff]
        %v917 = vld [vmem:[%s709 + $0x4b8] sm:$0xff]
        %v918 = vld [vmem:[%s709 + $0x4c0] sm:$0xff]
        %v919 = vld [vmem:[%s709 + $0x4c8] sm:$0xff]
        %v920 = vld [vmem:[%s709 + $0x4d0] sm:$0xff]
        %v921 = vld [vmem:[%s709 + $0x4d8] sm:$0xff]
        %v922 = vld [vmem:[%s709 + $0x4e0] sm:$0xff]
        %v923 = vld [vmem:[%s709 + $0x4e8] sm:$0xff]
        %v924 = vld [vmem:[%s709 + $0x4f0] sm:$0xff]
        %v925 = vld [vmem:[%s709 + $0x4f8] sm:$0xff]
        %v926 = vld [vmem:[%s709 + $0x500] sm:$0xff]
        %v927 = vld [vmem:[%s709 + $0x508] sm:$0xff]
        %v928 = vld [vmem:[%s709 + $0x510] sm:$0xff]
        %v929 = vld [vmem:[%s709 + $0x518] sm:$0xff]
        %v930 = vld [vmem:[%s709 + $0x520] sm:$0xff]
        %v931 = vld [vmem:[%s709 + $0x528] sm:$0xff]
        %v932 = vld [vmem:[%s709 + $0x530] sm:$0xff]
        %v933 = vld [vmem:[%s709 + $0x538] sm:$0xff]
        %v934 = vld [vmem:[%s709 + $0x540] sm:$0xff]
        %v935 = vld [vmem:[%s709 + $0x548] sm:$0xff]
        %v936 = vld [vmem:[%s709 + $0x550] sm:$0xff]
        %v937 = vld [vmem:[%s709 + $0x558] sm:$0xff]
        %v938 = vld [vmem:[%s709 + $0x560] sm:$0xff]
        %v939 = vld [vmem:[%s709 + $0x568] sm:$0xff]
        %v940 = vld [vmem:[%s709 + $0x570] sm:$0xff]
        %v941 = vld [vmem:[%s709 + $0x578] sm:$0xff]
        %v942 = vld [vmem:[%s709 + $0x580] sm:$0xff]
        %v943 = vld [vmem:[%s709 + $0x588] sm:$0xff]
        %v944 = vld [vmem:[%s709 + $0x590] sm:$0xff]
        %v945 = vld [vmem:[%s709 + $0x598] sm:$0xff]
        %v946 = vld [vmem:[%s709 + $0x5a0] sm:$0xff]
        %v947 = vld [vmem:[%s709 + $0x5a8] sm:$0xff]
        %v948 = vld [vmem:[%s709 + $0x5b0] sm:$0xff]
        %v949 = vld [vmem:[%s709 + $0x5b8] sm:$0xff]
        %v950 = vld [vmem:[%s709 + $0x5c0] sm:$0xff]
        %v951 = vld [vmem:[%s709 + $0x5c8] sm:$0xff]
        %v952 = vld [vmem:[%s709 + $0x5d0] sm:$0xff]
        %v953 = vld [vmem:[%s709 + $0x5d8] sm:$0xff]
        %v954 = vld [vmem:[%s709 + $0x5e0] sm:$0xff]
        %v955 = vld [vmem:[%s709 + $0x5e8] sm:$0xff]
        %v956 = vld [vmem:[%s709 + $0x5f0] sm:$0xff]
        %v957 = vld [vmem:[%s709 + $0x5f8] sm:$0xff]
        %v958 = vld [vmem:[%s709 + $0x600] sm:$0xff]
        %v959 = vld [vmem:[%s709 + $0x608] sm:$0xff]
        %v960 = vld [vmem:[%s709 + $0x610] sm:$0xff]
        %v961 = vld [vmem:[%s709 + $0x618] sm:$0xff]
        %v962 = vld [vmem:[%s709 + $0x620] sm:$0xff]
        %v963 = vld [vmem:[%s709 + $0x628] sm:$0xff]
        %v964 = vld [vmem:[%s709 + $0x630] sm:$0xff]
        %v965 = vld [vmem:[%s709 + $0x638] sm:$0xff]
        %v966 = vld [vmem:[%s709 + $0x640] sm:$0xff]
        %v967 = vld [vmem:[%s709 + $0x648] sm:$0xff]
        %v968 = vld [vmem:[%s709 + $0x650] sm:$0xff]
        %v969 = vld [vmem:[%s709 + $0x658] sm:$0xff]
        %v970 = vld [vmem:[%s709 + $0x660] sm:$0xff]
        %v971 = vld [vmem:[%s709 + $0x668] sm:$0xff]
        %v972 = vld [vmem:[%s709 + $0x670] sm:$0xff]
        %v973 = vld [vmem:[%s709 + $0x678] sm:$0xff]
        %v974 = vld [vmem:[%s709 + $0x680] sm:$0xff]
        %v975 = vld [vmem:[%s709 + $0x688] sm:$0xff]
        %v976 = vld [vmem:[%s709 + $0x690] sm:$0xff]
        %v977 = vld [vmem:[%s709 + $0x698] sm:$0xff]
        %v978 = vld [vmem:[%s709 + $0x6a0] sm:$0xff]
        %v979 = vld [vmem:[%s709 + $0x6a8] sm:$0xff]
        %v980 = vld [vmem:[%s709 + $0x6b0] sm:$0xff]
        %v981 = vld [vmem:[%s709 + $0x6b8] sm:$0xff]
        %v982 = vld [vmem:[%s709 + $0x6c0] sm:$0xff]
        %v983 = vld [vmem:[%s709 + $0x6c8] sm:$0xff]
        %v984 = vld [vmem:[%s709 + $0x6d0] sm:$0xff]
        %v985 = vld [vmem:[%s709 + $0x6d8] sm:$0xff]
        %v986 = vld [vmem:[%s709 + $0x6e0] sm:$0xff]
        %v987 = vld [vmem:[%s709 + $0x6e8] sm:$0xff]
        %v988 = vld [vmem:[%s709 + $0x6f0] sm:$0xff]
        %v989 = vld [vmem:[%s709 + $0x6f8] sm:$0xff]
        %v990 = vld [vmem:[%s709 + $0x700] sm:$0xff]
        %v991 = vld [vmem:[%s709 + $0x708] sm:$0xff]
        %v992 = vld [vmem:[%s709 + $0x710] sm:$0xff]
        %v993 = vld [vmem:[%s709 + $0x718] sm:$0xff]
        %v994 = vld [vmem:[%s709 + $0x720] sm:$0xff]
        %v995 = vld [vmem:[%s709 + $0x728] sm:$0xff]
        %v996 = vld [vmem:[%s709 + $0x730] sm:$0xff]
        %v997 = vld [vmem:[%s709 + $0x738] sm:$0xff]
        %v998 = vld [vmem:[%s709 + $0x740] sm:$0xff]
        %v999 = vld [vmem:[%s709 + $0x748] sm:$0xff]
        %v1000 = vld [vmem:[%s709 + $0x750] sm:$0xff]
        %v1001 = vld [vmem:[%s709 + $0x758] sm:$0xff]
        %v1002 = vld [vmem:[%s709 + $0x760] sm:$0xff]
        %v1003 = vld [vmem:[%s709 + $0x768] sm:$0xff]
        %v1004 = vld [vmem:[%s709 + $0x770] sm:$0xff]
        %v1005 = vld [vmem:[%s709 + $0x778] sm:$0xff]
        %v1006 = vld [vmem:[%s709 + $0x780] sm:$0xff]
        %v1007 = vld [vmem:[%s709 + $0x788] sm:$0xff]
        %v1008 = vld [vmem:[%s709 + $0x790] sm:$0xff]
        %v1009 = vld [vmem:[%s709 + $0x798] sm:$0xff]
        %v1010 = vld [vmem:[%s709 + $0x7a0] sm:$0xff]
        %v1011 = vld [vmem:[%s709 + $0x7a8] sm:$0xff]
        %v1012 = vld [vmem:[%s709 + $0x7b0] sm:$0xff]
        %v1013 = vld [vmem:[%s709 + $0x7b8] sm:$0xff]
        %v1014 = vld [vmem:[%s709 + $0x7c0] sm:$0xff]
        %v1015 = vld [vmem:[%s709 + $0x7c8] sm:$0xff]
        %v1016 = vld [vmem:[%s709 + $0x7d0] sm:$0xff]
        %v1017 = vld [vmem:[%s709 + $0x7d8] sm:$0xff]
        %v1018 = vld [vmem:[%s709 + $0x7e0] sm:$0xff]
        %v1019 = vld [vmem:[%s709 + $0x7e8] sm:$0xff]
        %v1020 = vld [vmem:[%s709 + $0x7f0] sm:$0xff]
        %v1021 = vld [vmem:[%s709 + $0x7f8] sm:$0xff]
        %v1022 = vld [vmem:[%s752] sm:$0xff]
        %v1024 = vperm.slane %v1022, 0
        %v1025 = vperm.slane %v1022, 1
        %v1026 = vperm.slane %v1022, 2
        %v1027 = vperm.slane %v1022, 3
        %v1028 = vperm.slane %v1022, 4
        %v1029 = vperm.slane %v1022, 5
        %v1030 = vperm.slane %v1022, 6
        %v1031 = vperm.slane %v1022, 7
        %v1042 = vunpack.c.l.b16 %v764
        %v1043 = vunpack.c.h.b16 %v764
        %v1044 = vunpack.c.l.b16 %v765
        %v1045 = vunpack.c.h.b16 %v765
        %v1046 = vpack.c.b16 %v1042, %v1042
        %v1047 = vpack.c.b16 %v1043, %v1043
        %v1048 = vpack.c.b16 %v1044, %v1044
        %v1049 = vpack.c.b16 %v1045, %v1045
        %v1310 = vunpack.c.l.b16 %v766
        %v1311 = vunpack.c.h.b16 %v766
        %v1312 = vunpack.c.l.b16 %v767
        %v1313 = vunpack.c.h.b16 %v767
        %v1314 = vunpack.c.l.b16 %v768
        %v1315 = vunpack.c.h.b16 %v768
        %v1316 = vunpack.c.l.b16 %v769
        %v1317 = vunpack.c.h.b16 %v769
        %v1318 = vunpack.c.l.b16 %v770
        %v1319 = vunpack.c.h.b16 %v770
        %v1320 = vunpack.c.l.b16 %v771
        %v1321 = vunpack.c.h.b16 %v771
        %v1322 = vunpack.c.l.b16 %v772
        %v1323 = vunpack.c.h.b16 %v772
        %v1324 = vunpack.c.l.b16 %v773
        %v1325 = vunpack.c.h.b16 %v773
        %v1326 = vunpack.c.l.b16 %v774
        %v1327 = vunpack.c.h.b16 %v774
        %v1328 = vunpack.c.l.b16 %v775
        %v1329 = vunpack.c.h.b16 %v775
        %v1330 = vunpack.c.l.b16 %v776
        %v1331 = vunpack.c.h.b16 %v776
        %v1332 = vunpack.c.l.b16 %v777
        %v1333 = vunpack.c.h.b16 %v777
        %v1334 = vunpack.c.l.b16 %v778
        %v1335 = vunpack.c.h.b16 %v778
        %v1336 = vunpack.c.l.b16 %v779
        %v1337 = vunpack.c.h.b16 %v779
        %v1338 = vunpack.c.l.b16 %v780
        %v1339 = vunpack.c.h.b16 %v780
        %v1340 = vunpack.c.l.b16 %v781
        %v1341 = vunpack.c.h.b16 %v781
        %v1342 = vunpack.c.l.b16 %v782
        %v1343 = vunpack.c.h.b16 %v782
        %v1344 = vunpack.c.l.b16 %v783
        %v1345 = vunpack.c.h.b16 %v783
        %v1346 = vunpack.c.l.b16 %v784
        %v1347 = vunpack.c.h.b16 %v784
        %v1348 = vunpack.c.l.b16 %v785
        %v1349 = vunpack.c.h.b16 %v785
        %v1350 = vunpack.c.l.b16 %v786
        %v1351 = vunpack.c.h.b16 %v786
        %v1352 = vunpack.c.l.b16 %v787
        %v1353 = vunpack.c.h.b16 %v787
        %v1354 = vunpack.c.l.b16 %v788
        %v1355 = vunpack.c.h.b16 %v788
        %v1356 = vunpack.c.l.b16 %v789
        %v1357 = vunpack.c.h.b16 %v789
        %v1358 = vunpack.c.l.b16 %v790
        %v1359 = vunpack.c.h.b16 %v790
        %v1360 = vunpack.c.l.b16 %v791
        %v1361 = vunpack.c.h.b16 %v791
        %v1362 = vunpack.c.l.b16 %v792
        %v1363 = vunpack.c.h.b16 %v792
        %v1364 = vunpack.c.l.b16 %v793
        %v1365 = vunpack.c.h.b16 %v793
        %v1366 = vunpack.c.l.b16 %v794
        %v1367 = vunpack.c.h.b16 %v794
        %v1368 = vunpack.c.l.b16 %v795
        %v1369 = vunpack.c.h.b16 %v795
        %v1370 = vunpack.c.l.b16 %v796
        %v1371 = vunpack.c.h.b16 %v796
        %v1372 = vunpack.c.l.b16 %v797
        %v1373 = vunpack.c.h.b16 %v797
        %v1374 = vunpack.c.l.b16 %v798
        %v1375 = vunpack.c.h.b16 %v798
        %v1376 = vunpack.c.l.b16 %v799
        %v1377 = vunpack.c.h.b16 %v799
        %v1378 = vunpack.c.l.b16 %v800
        %v1379 = vunpack.c.h.b16 %v800
        %v1380 = vunpack.c.l.b16 %v801
        %v1381 = vunpack.c.h.b16 %v801
        %v1382 = vunpack.c.l.b16 %v802
        %v1383 = vunpack.c.h.b16 %v802
        %v1384 = vunpack.c.l.b16 %v803
        %v1385 = vunpack.c.h.b16 %v803
        %v1386 = vunpack.c.l.b16 %v804
        %v1387 = vunpack.c.h.b16 %v804
        %v1388 = vunpack.c.l.b16 %v805
        %v1389 = vunpack.c.h.b16 %v805
        %v1390 = vunpack.c.l.b16 %v806
        %v1391 = vunpack.c.h.b16 %v806
        %v1392 = vunpack.c.l.b16 %v807
        %v1393 = vunpack.c.h.b16 %v807
        %v1394 = vunpack.c.l.b16 %v808
        %v1395 = vunpack.c.h.b16 %v808
        %v1396 = vunpack.c.l.b16 %v809
        %v1397 = vunpack.c.h.b16 %v809
        %v1398 = vunpack.c.l.b16 %v810
        %v1399 = vunpack.c.h.b16 %v810
        %v1400 = vunpack.c.l.b16 %v811
        %v1401 = vunpack.c.h.b16 %v811
        %v1402 = vunpack.c.l.b16 %v812
        %v1403 = vunpack.c.h.b16 %v812
        %v1404 = vunpack.c.l.b16 %v813
        %v1405 = vunpack.c.h.b16 %v813
        %v1406 = vunpack.c.l.b16 %v814
        %v1407 = vunpack.c.h.b16 %v814
        %v1408 = vunpack.c.l.b16 %v815
        %v1409 = vunpack.c.h.b16 %v815
        %v1410 = vunpack.c.l.b16 %v816
        %v1411 = vunpack.c.h.b16 %v816
        %v1412 = vunpack.c.l.b16 %v817
        %v1413 = vunpack.c.h.b16 %v817
        %v1414 = vunpack.c.l.b16 %v818
        %v1415 = vunpack.c.h.b16 %v818
        %v1416 = vunpack.c.l.b16 %v819
        %v1417 = vunpack.c.h.b16 %v819
        %v1418 = vunpack.c.l.b16 %v820
        %v1419 = vunpack.c.h.b16 %v820
        %v1420 = vunpack.c.l.b16 %v821
        %v1421 = vunpack.c.h.b16 %v821
        %v1422 = vunpack.c.l.b16 %v822
        %v1423 = vunpack.c.h.b16 %v822
        %v1424 = vunpack.c.l.b16 %v823
        %v1425 = vunpack.c.h.b16 %v823
        %v1426 = vunpack.c.l.b16 %v824
        %v1427 = vunpack.c.h.b16 %v824
        %v1428 = vunpack.c.l.b16 %v825
        %v1429 = vunpack.c.h.b16 %v825
        %v1430 = vunpack.c.l.b16 %v826
        %v1431 = vunpack.c.h.b16 %v826
        %v1432 = vunpack.c.l.b16 %v827
        %v1433 = vunpack.c.h.b16 %v827
        %v1434 = vunpack.c.l.b16 %v828
        %v1435 = vunpack.c.h.b16 %v828
        %v1436 = vunpack.c.l.b16 %v829
        %v1437 = vunpack.c.h.b16 %v829
        %v1438 = vunpack.c.l.b16 %v830
        %v1439 = vunpack.c.h.b16 %v830
        %v1440 = vunpack.c.l.b16 %v831
        %v1441 = vunpack.c.h.b16 %v831
        %v1442 = vunpack.c.l.b16 %v832
        %v1443 = vunpack.c.h.b16 %v832
        %v1444 = vunpack.c.l.b16 %v833
        %v1445 = vunpack.c.h.b16 %v833
        %v1446 = vunpack.c.l.b16 %v834
        %v1447 = vunpack.c.h.b16 %v834
        %v1448 = vunpack.c.l.b16 %v835
        %v1449 = vunpack.c.h.b16 %v835
        %v1450 = vunpack.c.l.b16 %v836
        %v1451 = vunpack.c.h.b16 %v836
        %v1452 = vunpack.c.l.b16 %v837
        %v1453 = vunpack.c.h.b16 %v837
        %v1454 = vunpack.c.l.b16 %v838
        %v1455 = vunpack.c.h.b16 %v838
        %v1456 = vunpack.c.l.b16 %v839
        %v1457 = vunpack.c.h.b16 %v839
        %v1458 = vunpack.c.l.b16 %v840
        %v1459 = vunpack.c.h.b16 %v840
        %v1460 = vunpack.c.l.b16 %v841
        %v1461 = vunpack.c.h.b16 %v841
        %v1462 = vunpack.c.l.b16 %v842
        %v1463 = vunpack.c.h.b16 %v842
        %v1464 = vunpack.c.l.b16 %v843
        %v1465 = vunpack.c.h.b16 %v843
        %v1466 = vunpack.c.l.b16 %v844
        %v1467 = vunpack.c.h.b16 %v844
        %v1468 = vunpack.c.l.b16 %v845
        %v1469 = vunpack.c.h.b16 %v845
        %v1470 = vunpack.c.l.b16 %v846
        %v1471 = vunpack.c.h.b16 %v846
        %v1472 = vunpack.c.l.b16 %v847
        %v1473 = vunpack.c.h.b16 %v847
        %v1474 = vunpack.c.l.b16 %v848
        %v1475 = vunpack.c.h.b16 %v848
        %v1476 = vunpack.c.l.b16 %v849
        %v1477 = vunpack.c.h.b16 %v849
        %v1478 = vunpack.c.l.b16 %v850
        %v1479 = vunpack.c.h.b16 %v850
        %v1480 = vunpack.c.l.b16 %v851
        %v1481 = vunpack.c.h.b16 %v851
        %v1482 = vunpack.c.l.b16 %v852
        %v1483 = vunpack.c.h.b16 %v852
        %v1484 = vunpack.c.l.b16 %v853
        %v1485 = vunpack.c.h.b16 %v853
        %v1486 = vunpack.c.l.b16 %v854
        %v1487 = vunpack.c.h.b16 %v854
        %v1488 = vunpack.c.l.b16 %v855
        %v1489 = vunpack.c.h.b16 %v855
        %v1490 = vunpack.c.l.b16 %v856
        %v1491 = vunpack.c.h.b16 %v856
        %v1492 = vunpack.c.l.b16 %v857
        %v1493 = vunpack.c.h.b16 %v857
        %v1494 = vunpack.c.l.b16 %v858
        %v1495 = vunpack.c.h.b16 %v858
        %v1496 = vunpack.c.l.b16 %v859
        %v1497 = vunpack.c.h.b16 %v859
        %v1498 = vunpack.c.l.b16 %v860
        %v1499 = vunpack.c.h.b16 %v860
        %v1500 = vunpack.c.l.b16 %v861
        %v1501 = vunpack.c.h.b16 %v861
        %v1502 = vunpack.c.l.b16 %v862
        %v1503 = vunpack.c.h.b16 %v862
        %v1504 = vunpack.c.l.b16 %v863
        %v1505 = vunpack.c.h.b16 %v863
        %v1506 = vunpack.c.l.b16 %v864
        %v1507 = vunpack.c.h.b16 %v864
        %v1508 = vunpack.c.l.b16 %v865
        %v1509 = vunpack.c.h.b16 %v865
        %v1510 = vunpack.c.l.b16 %v866
        %v1511 = vunpack.c.h.b16 %v866
        %v1512 = vunpack.c.l.b16 %v867
        %v1513 = vunpack.c.h.b16 %v867
        %v1514 = vunpack.c.l.b16 %v868
        %v1515 = vunpack.c.h.b16 %v868
        %v1516 = vunpack.c.l.b16 %v869
        %v1517 = vunpack.c.h.b16 %v869
        %v1518 = vunpack.c.l.b16 %v870
        %v1519 = vunpack.c.h.b16 %v870
        %v1520 = vunpack.c.l.b16 %v871
        %v1521 = vunpack.c.h.b16 %v871
        %v1522 = vunpack.c.l.b16 %v872
        %v1523 = vunpack.c.h.b16 %v872
        %v1524 = vunpack.c.l.b16 %v873
        %v1525 = vunpack.c.h.b16 %v873
        %v1526 = vunpack.c.l.b16 %v874
        %v1527 = vunpack.c.h.b16 %v874
        %v1528 = vunpack.c.l.b16 %v875
        %v1529 = vunpack.c.h.b16 %v875
        %v1530 = vunpack.c.l.b16 %v876
        %v1531 = vunpack.c.h.b16 %v876
        %v1532 = vunpack.c.l.b16 %v877
        %v1533 = vunpack.c.h.b16 %v877
        %v1534 = vunpack.c.l.b16 %v878
        %v1535 = vunpack.c.h.b16 %v878
        %v1536 = vunpack.c.l.b16 %v879
        %v1537 = vunpack.c.h.b16 %v879
        %v1538 = vunpack.c.l.b16 %v880
        %v1539 = vunpack.c.h.b16 %v880
        %v1540 = vunpack.c.l.b16 %v881
        %v1541 = vunpack.c.h.b16 %v881
        %v1542 = vunpack.c.l.b16 %v882
        %v1543 = vunpack.c.h.b16 %v882
        %v1544 = vunpack.c.l.b16 %v883
        %v1545 = vunpack.c.h.b16 %v883
        %v1546 = vunpack.c.l.b16 %v884
        %v1547 = vunpack.c.h.b16 %v884
        %v1548 = vunpack.c.l.b16 %v885
        %v1549 = vunpack.c.h.b16 %v885
        %v1550 = vunpack.c.l.b16 %v886
        %v1551 = vunpack.c.h.b16 %v886
        %v1552 = vunpack.c.l.b16 %v887
        %v1553 = vunpack.c.h.b16 %v887
        %v1554 = vunpack.c.l.b16 %v888
        %v1555 = vunpack.c.h.b16 %v888
        %v1556 = vunpack.c.l.b16 %v889
        %v1557 = vunpack.c.h.b16 %v889
        %v1558 = vunpack.c.l.b16 %v890
        %v1559 = vunpack.c.h.b16 %v890
        %v1560 = vunpack.c.l.b16 %v891
        %v1561 = vunpack.c.h.b16 %v891
        %v1562 = vunpack.c.l.b16 %v892
        %v1563 = vunpack.c.h.b16 %v892
        %v1564 = vunpack.c.l.b16 %v893
        %v1565 = vunpack.c.h.b16 %v893
        %v1566 = vunpack.c.l.b16 %v894
        %v1567 = vunpack.c.h.b16 %v894
        %v1568 = vunpack.c.l.b16 %v895
        %v1569 = vunpack.c.h.b16 %v895
        %v1570 = vunpack.c.l.b16 %v896
        %v1571 = vunpack.c.h.b16 %v896
        %v1572 = vunpack.c.l.b16 %v897
        %v1573 = vunpack.c.h.b16 %v897
        %v1574 = vunpack.c.l.b16 %v898
        %v1575 = vunpack.c.h.b16 %v898
        %v1576 = vunpack.c.l.b16 %v899
        %v1577 = vunpack.c.h.b16 %v899
        %v1578 = vunpack.c.l.b16 %v900
        %v1579 = vunpack.c.h.b16 %v900
        %v1580 = vunpack.c.l.b16 %v901
        %v1581 = vunpack.c.h.b16 %v901
        %v1582 = vunpack.c.l.b16 %v902
        %v1583 = vunpack.c.h.b16 %v902
        %v1584 = vunpack.c.l.b16 %v903
        %v1585 = vunpack.c.h.b16 %v903
        %v1586 = vunpack.c.l.b16 %v904
        %v1587 = vunpack.c.h.b16 %v904
        %v1588 = vunpack.c.l.b16 %v905
        %v1589 = vunpack.c.h.b16 %v905
        %v1590 = vunpack.c.l.b16 %v906
        %v1591 = vunpack.c.h.b16 %v906
        %v1592 = vunpack.c.l.b16 %v907
        %v1593 = vunpack.c.h.b16 %v907
        %v1594 = vunpack.c.l.b16 %v908
        %v1595 = vunpack.c.h.b16 %v908
        %v1596 = vunpack.c.l.b16 %v909
        %v1597 = vunpack.c.h.b16 %v909
        %v1598 = vunpack.c.l.b16 %v910
        %v1599 = vunpack.c.h.b16 %v910
        %v1600 = vunpack.c.l.b16 %v911
        %v1601 = vunpack.c.h.b16 %v911
        %v1602 = vunpack.c.l.b16 %v912
        %v1603 = vunpack.c.h.b16 %v912
        %v1604 = vunpack.c.l.b16 %v913
        %v1605 = vunpack.c.h.b16 %v913
        %v1606 = vunpack.c.l.b16 %v914
        %v1607 = vunpack.c.h.b16 %v914
        %v1608 = vunpack.c.l.b16 %v915
        %v1609 = vunpack.c.h.b16 %v915
        %v1610 = vunpack.c.l.b16 %v916
        %v1611 = vunpack.c.h.b16 %v916
        %v1612 = vunpack.c.l.b16 %v917
        %v1613 = vunpack.c.h.b16 %v917
        %v1614 = vunpack.c.l.b16 %v918
        %v1615 = vunpack.c.h.b16 %v918
        %v1616 = vunpack.c.l.b16 %v919
        %v1617 = vunpack.c.h.b16 %v919
        %v1618 = vunpack.c.l.b16 %v920
        %v1619 = vunpack.c.h.b16 %v920
        %v1620 = vunpack.c.l.b16 %v921
        %v1621 = vunpack.c.h.b16 %v921
        %v1622 = vunpack.c.l.b16 %v922
        %v1623 = vunpack.c.h.b16 %v922
        %v1624 = vunpack.c.l.b16 %v923
        %v1625 = vunpack.c.h.b16 %v923
        %v1626 = vunpack.c.l.b16 %v924
        %v1627 = vunpack.c.h.b16 %v924
        %v1628 = vunpack.c.l.b16 %v925
        %v1629 = vunpack.c.h.b16 %v925
        %v1630 = vunpack.c.l.b16 %v926
        %v1631 = vunpack.c.h.b16 %v926
        %v1632 = vunpack.c.l.b16 %v927
        %v1633 = vunpack.c.h.b16 %v927
        %v1634 = vunpack.c.l.b16 %v928
        %v1635 = vunpack.c.h.b16 %v928
        %v1636 = vunpack.c.l.b16 %v929
        %v1637 = vunpack.c.h.b16 %v929
        %v1638 = vunpack.c.l.b16 %v930
        %v1639 = vunpack.c.h.b16 %v930
        %v1640 = vunpack.c.l.b16 %v931
        %v1641 = vunpack.c.h.b16 %v931
        %v1642 = vunpack.c.l.b16 %v932
        %v1643 = vunpack.c.h.b16 %v932
        %v1644 = vunpack.c.l.b16 %v933
        %v1645 = vunpack.c.h.b16 %v933
        %v1646 = vunpack.c.l.b16 %v934
        %v1647 = vunpack.c.h.b16 %v934
        %v1648 = vunpack.c.l.b16 %v935
        %v1649 = vunpack.c.h.b16 %v935
        %v1650 = vunpack.c.l.b16 %v936
        %v1651 = vunpack.c.h.b16 %v936
        %v1652 = vunpack.c.l.b16 %v937
        %v1653 = vunpack.c.h.b16 %v937
        %v1654 = vunpack.c.l.b16 %v938
        %v1655 = vunpack.c.h.b16 %v938
        %v1656 = vunpack.c.l.b16 %v939
        %v1657 = vunpack.c.h.b16 %v939
        %v1658 = vunpack.c.l.b16 %v940
        %v1659 = vunpack.c.h.b16 %v940
        %v1660 = vunpack.c.l.b16 %v941
        %v1661 = vunpack.c.h.b16 %v941
        %v1662 = vunpack.c.l.b16 %v942
        %v1663 = vunpack.c.h.b16 %v942
        %v1664 = vunpack.c.l.b16 %v943
        %v1665 = vunpack.c.h.b16 %v943
        %v1666 = vunpack.c.l.b16 %v944
        %v1667 = vunpack.c.h.b16 %v944
        %v1668 = vunpack.c.l.b16 %v945
        %v1669 = vunpack.c.h.b16 %v945
        %v1670 = vunpack.c.l.b16 %v946
        %v1671 = vunpack.c.h.b16 %v946
        %v1672 = vunpack.c.l.b16 %v947
        %v1673 = vunpack.c.h.b16 %v947
        %v1674 = vunpack.c.l.b16 %v948
        %v1675 = vunpack.c.h.b16 %v948
        %v1676 = vunpack.c.l.b16 %v949
        %v1677 = vunpack.c.h.b16 %v949
        %v1678 = vunpack.c.l.b16 %v950
        %v1679 = vunpack.c.h.b16 %v950
        %v1680 = vunpack.c.l.b16 %v951
        %v1681 = vunpack.c.h.b16 %v951
        %v1682 = vunpack.c.l.b16 %v952
        %v1683 = vunpack.c.h.b16 %v952
        %v1684 = vunpack.c.l.b16 %v953
        %v1685 = vunpack.c.h.b16 %v953
        %v1686 = vunpack.c.l.b16 %v954
        %v1687 = vunpack.c.h.b16 %v954
        %v1688 = vunpack.c.l.b16 %v955
        %v1689 = vunpack.c.h.b16 %v955
        %v1690 = vunpack.c.l.b16 %v956
        %v1691 = vunpack.c.h.b16 %v956
        %v1692 = vunpack.c.l.b16 %v957
        %v1693 = vunpack.c.h.b16 %v957
        %v1694 = vunpack.c.l.b16 %v958
        %v1695 = vunpack.c.h.b16 %v958
        %v1696 = vunpack.c.l.b16 %v959
        %v1697 = vunpack.c.h.b16 %v959
        %v1698 = vunpack.c.l.b16 %v960
        %v1699 = vunpack.c.h.b16 %v960
        %v1700 = vunpack.c.l.b16 %v961
        %v1701 = vunpack.c.h.b16 %v961
        %v1702 = vunpack.c.l.b16 %v962
        %v1703 = vunpack.c.h.b16 %v962
        %v1704 = vunpack.c.l.b16 %v963
        %v1705 = vunpack.c.h.b16 %v963
        %v1706 = vunpack.c.l.b16 %v964
        %v1707 = vunpack.c.h.b16 %v964
        %v1708 = vunpack.c.l.b16 %v965
        %v1709 = vunpack.c.h.b16 %v965
        %v1710 = vunpack.c.l.b16 %v966
        %v1711 = vunpack.c.h.b16 %v966
        %v1712 = vunpack.c.l.b16 %v967
        %v1713 = vunpack.c.h.b16 %v967
        %v1714 = vunpack.c.l.b16 %v968
        %v1715 = vunpack.c.h.b16 %v968
        %v1716 = vunpack.c.l.b16 %v969
        %v1717 = vunpack.c.h.b16 %v969
        %v1718 = vunpack.c.l.b16 %v970
        %v1719 = vunpack.c.h.b16 %v970
        %v1720 = vunpack.c.l.b16 %v971
        %v1721 = vunpack.c.h.b16 %v971
        %v1722 = vunpack.c.l.b16 %v972
        %v1723 = vunpack.c.h.b16 %v972
        %v1724 = vunpack.c.l.b16 %v973
        %v1725 = vunpack.c.h.b16 %v973
        %v1726 = vunpack.c.l.b16 %v974
        %v1727 = vunpack.c.h.b16 %v974
        %v1728 = vunpack.c.l.b16 %v975
        %v1729 = vunpack.c.h.b16 %v975
        %v1730 = vunpack.c.l.b16 %v976
        %v1731 = vunpack.c.h.b16 %v976
        %v1732 = vunpack.c.l.b16 %v977
        %v1733 = vunpack.c.h.b16 %v977
        %v1734 = vunpack.c.l.b16 %v978
        %v1735 = vunpack.c.h.b16 %v978
        %v1736 = vunpack.c.l.b16 %v979
        %v1737 = vunpack.c.h.b16 %v979
        %v1738 = vunpack.c.l.b16 %v980
        %v1739 = vunpack.c.h.b16 %v980
        %v1740 = vunpack.c.l.b16 %v981
        %v1741 = vunpack.c.h.b16 %v981
        %v1742 = vunpack.c.l.b16 %v982
        %v1743 = vunpack.c.h.b16 %v982
        %v1744 = vunpack.c.l.b16 %v983
        %v1745 = vunpack.c.h.b16 %v983
        %v1746 = vunpack.c.l.b16 %v984
        %v1747 = vunpack.c.h.b16 %v984
        %v1748 = vunpack.c.l.b16 %v985
        %v1749 = vunpack.c.h.b16 %v985
        %v1750 = vunpack.c.l.b16 %v986
        %v1751 = vunpack.c.h.b16 %v986
        %v1752 = vunpack.c.l.b16 %v987
        %v1753 = vunpack.c.h.b16 %v987
        %v1754 = vunpack.c.l.b16 %v988
        %v1755 = vunpack.c.h.b16 %v988
        %v1756 = vunpack.c.l.b16 %v989
        %v1757 = vunpack.c.h.b16 %v989
        %v1758 = vunpack.c.l.b16 %v990
        %v1759 = vunpack.c.h.b16 %v990
        %v1760 = vunpack.c.l.b16 %v991
        %v1761 = vunpack.c.h.b16 %v991
        %v1762 = vunpack.c.l.b16 %v992
        %v1763 = vunpack.c.h.b16 %v992
        %v1764 = vunpack.c.l.b16 %v993
        %v1765 = vunpack.c.h.b16 %v993
        %v1766 = vunpack.c.l.b16 %v994
        %v1767 = vunpack.c.h.b16 %v994
        %v1768 = vunpack.c.l.b16 %v995
        %v1769 = vunpack.c.h.b16 %v995
        %v1770 = vunpack.c.l.b16 %v996
        %v1771 = vunpack.c.h.b16 %v996
        %v1772 = vunpack.c.l.b16 %v997
        %v1773 = vunpack.c.h.b16 %v997
        %v1774 = vunpack.c.l.b16 %v998
        %v1775 = vunpack.c.h.b16 %v998
        %v1776 = vunpack.c.l.b16 %v999
        %v1777 = vunpack.c.h.b16 %v999
        %v1778 = vunpack.c.l.b16 %v1000
        %v1779 = vunpack.c.h.b16 %v1000
        %v1780 = vunpack.c.l.b16 %v1001
        %v1781 = vunpack.c.h.b16 %v1001
        %v1782 = vunpack.c.l.b16 %v1002
        %v1783 = vunpack.c.h.b16 %v1002
        %v1784 = vunpack.c.l.b16 %v1003
        %v1785 = vunpack.c.h.b16 %v1003
        %v1786 = vunpack.c.l.b16 %v1004
        %v1787 = vunpack.c.h.b16 %v1004
        %v1788 = vunpack.c.l.b16 %v1005
        %v1789 = vunpack.c.h.b16 %v1005
        %v1790 = vunpack.c.l.b16 %v1006
        %v1791 = vunpack.c.h.b16 %v1006
        %v1792 = vunpack.c.l.b16 %v1007
        %v1793 = vunpack.c.h.b16 %v1007
        %v1794 = vunpack.c.l.b16 %v1008
        %v1795 = vunpack.c.h.b16 %v1008
        %v1796 = vunpack.c.l.b16 %v1009
        %v1797 = vunpack.c.h.b16 %v1009
        %v1798 = vunpack.c.l.b16 %v1010
        %v1799 = vunpack.c.h.b16 %v1010
        %v1800 = vunpack.c.l.b16 %v1011
        %v1801 = vunpack.c.h.b16 %v1011
        %v1802 = vunpack.c.l.b16 %v1012
        %v1803 = vunpack.c.h.b16 %v1012
        %v1804 = vunpack.c.l.b16 %v1013
        %v1805 = vunpack.c.h.b16 %v1013
        %v1806 = vunpack.c.l.b16 %v1014
        %v1807 = vunpack.c.h.b16 %v1014
        %v1808 = vunpack.c.l.b16 %v1015
        %v1809 = vunpack.c.h.b16 %v1015
        %v1810 = vunpack.c.l.b16 %v1016
        %v1811 = vunpack.c.h.b16 %v1016
        %v1812 = vunpack.c.l.b16 %v1017
        %v1813 = vunpack.c.h.b16 %v1017
        %v1814 = vunpack.c.l.b16 %v1018
        %v1815 = vunpack.c.h.b16 %v1018
        %v1816 = vunpack.c.l.b16 %v1019
        %v1817 = vunpack.c.h.b16 %v1019
        %v1818 = vunpack.c.l.b16 %v1020
        %v1819 = vunpack.c.h.b16 %v1020
        %v1820 = vunpack.c.l.b16 %v1021
        %v1821 = vunpack.c.h.b16 %v1021
        %v1822 = vpack.c.b16 %v1318, %v1310
        %v1823 = vpack.c.b16 %v1319, %v1311
        %v1824 = vpack.c.b16 %v1320, %v1312
        %v1825 = vpack.c.b16 %v1321, %v1313
        %v1826 = vpack.c.b16 %v1322, %v1314
        %v1827 = vpack.c.b16 %v1323, %v1315
        %v1828 = vpack.c.b16 %v1324, %v1316
        %v1829 = vpack.c.b16 %v1325, %v1317
        %v1830 = vpack.c.b16 %v1334, %v1326
        %v1831 = vpack.c.b16 %v1335, %v1327
        %v1832 = vpack.c.b16 %v1336, %v1328
        %v1833 = vpack.c.b16 %v1337, %v1329
        %v1834 = vpack.c.b16 %v1338, %v1330
        %v1835 = vpack.c.b16 %v1339, %v1331
        %v1836 = vpack.c.b16 %v1340, %v1332
        %v1837 = vpack.c.b16 %v1341, %v1333
        %v1838 = vpack.c.b16 %v1350, %v1342
        %v1839 = vpack.c.b16 %v1351, %v1343
        %v1840 = vpack.c.b16 %v1352, %v1344
        %v1841 = vpack.c.b16 %v1353, %v1345
        %v1842 = vpack.c.b16 %v1354, %v1346
        %v1843 = vpack.c.b16 %v1355, %v1347
        %v1844 = vpack.c.b16 %v1356, %v1348
        %v1845 = vpack.c.b16 %v1357, %v1349
        %v1846 = vpack.c.b16 %v1366, %v1358
        %v1847 = vpack.c.b16 %v1367, %v1359
        %v1848 = vpack.c.b16 %v1368, %v1360
        %v1849 = vpack.c.b16 %v1369, %v1361
        %v1850 = vpack.c.b16 %v1370, %v1362
        %v1851 = vpack.c.b16 %v1371, %v1363
        %v1852 = vpack.c.b16 %v1372, %v1364
        %v1853 = vpack.c.b16 %v1373, %v1365
        %v1854 = vpack.c.b16 %v1382, %v1374
        %v1855 = vpack.c.b16 %v1383, %v1375
        %v1856 = vpack.c.b16 %v1384, %v1376
        %v1857 = vpack.c.b16 %v1385, %v1377
        %v1858 = vpack.c.b16 %v1386, %v1378
        %v1859 = vpack.c.b16 %v1387, %v1379
        %v1860 = vpack.c.b16 %v1388, %v1380
        %v1861 = vpack.c.b16 %v1389, %v1381
        %v1862 = vpack.c.b16 %v1398, %v1390
        %v1863 = vpack.c.b16 %v1399, %v1391
        %v1864 = vpack.c.b16 %v1400, %v1392
        %v1865 = vpack.c.b16 %v1401, %v1393
        %v1866 = vpack.c.b16 %v1402, %v1394
        %v1867 = vpack.c.b16 %v1403, %v1395
        %v1868 = vpack.c.b16 %v1404, %v1396
        %v1869 = vpack.c.b16 %v1405, %v1397
        %v1870 = vpack.c.b16 %v1414, %v1406
        %v1871 = vpack.c.b16 %v1415, %v1407
        %v1872 = vpack.c.b16 %v1416, %v1408
        %v1873 = vpack.c.b16 %v1417, %v1409
        %v1874 = vpack.c.b16 %v1418, %v1410
        %v1875 = vpack.c.b16 %v1419, %v1411
        %v1876 = vpack.c.b16 %v1420, %v1412
        %v1877 = vpack.c.b16 %v1421, %v1413
        %v1878 = vpack.c.b16 %v1430, %v1422
        %v1879 = vpack.c.b16 %v1431, %v1423
        %v1880 = vpack.c.b16 %v1432, %v1424
        %v1881 = vpack.c.b16 %v1433, %v1425
        %v1882 = vpack.c.b16 %v1434, %v1426
        %v1883 = vpack.c.b16 %v1435, %v1427
        %v1884 = vpack.c.b16 %v1436, %v1428
        %v1885 = vpack.c.b16 %v1437, %v1429
        %v1886 = vpack.c.b16 %v1446, %v1438
        %v1887 = vpack.c.b16 %v1447, %v1439
        %v1888 = vpack.c.b16 %v1448, %v1440
        %v1889 = vpack.c.b16 %v1449, %v1441
        %v1890 = vpack.c.b16 %v1450, %v1442
        %v1891 = vpack.c.b16 %v1451, %v1443
        %v1892 = vpack.c.b16 %v1452, %v1444
        %v1893 = vpack.c.b16 %v1453, %v1445
        %v1894 = vpack.c.b16 %v1462, %v1454
        %v1895 = vpack.c.b16 %v1463, %v1455
        %v1896 = vpack.c.b16 %v1464, %v1456
        %v1897 = vpack.c.b16 %v1465, %v1457
        %v1898 = vpack.c.b16 %v1466, %v1458
        %v1899 = vpack.c.b16 %v1467, %v1459
        %v1900 = vpack.c.b16 %v1468, %v1460
        %v1901 = vpack.c.b16 %v1469, %v1461
        %v1902 = vpack.c.b16 %v1478, %v1470
        %v1903 = vpack.c.b16 %v1479, %v1471
        %v1904 = vpack.c.b16 %v1480, %v1472
        %v1905 = vpack.c.b16 %v1481, %v1473
        %v1906 = vpack.c.b16 %v1482, %v1474
        %v1907 = vpack.c.b16 %v1483, %v1475
        %v1908 = vpack.c.b16 %v1484, %v1476
        %v1909 = vpack.c.b16 %v1485, %v1477
        %v1910 = vpack.c.b16 %v1494, %v1486
        %v1911 = vpack.c.b16 %v1495, %v1487
        %v1912 = vpack.c.b16 %v1496, %v1488
        %v1913 = vpack.c.b16 %v1497, %v1489
        %v1914 = vpack.c.b16 %v1498, %v1490
        %v1915 = vpack.c.b16 %v1499, %v1491
        %v1916 = vpack.c.b16 %v1500, %v1492
        %v1917 = vpack.c.b16 %v1501, %v1493
        %v1918 = vpack.c.b16 %v1510, %v1502
        %v1919 = vpack.c.b16 %v1511, %v1503
        %v1920 = vpack.c.b16 %v1512, %v1504
        %v1921 = vpack.c.b16 %v1513, %v1505
        %v1922 = vpack.c.b16 %v1514, %v1506
        %v1923 = vpack.c.b16 %v1515, %v1507
        %v1924 = vpack.c.b16 %v1516, %v1508
        %v1925 = vpack.c.b16 %v1517, %v1509
        %v1926 = vpack.c.b16 %v1526, %v1518
        %v1927 = vpack.c.b16 %v1527, %v1519
        %v1928 = vpack.c.b16 %v1528, %v1520
        %v1929 = vpack.c.b16 %v1529, %v1521
        %v1930 = vpack.c.b16 %v1530, %v1522
        %v1931 = vpack.c.b16 %v1531, %v1523
        %v1932 = vpack.c.b16 %v1532, %v1524
        %v1933 = vpack.c.b16 %v1533, %v1525
        %v1934 = vpack.c.b16 %v1542, %v1534
        %v1935 = vpack.c.b16 %v1543, %v1535
        %v1936 = vpack.c.b16 %v1544, %v1536
        %v1937 = vpack.c.b16 %v1545, %v1537
        %v1938 = vpack.c.b16 %v1546, %v1538
        %v1939 = vpack.c.b16 %v1547, %v1539
        %v1940 = vpack.c.b16 %v1548, %v1540
        %v1941 = vpack.c.b16 %v1549, %v1541
        %v1942 = vpack.c.b16 %v1558, %v1550
        %v1943 = vpack.c.b16 %v1559, %v1551
        %v1944 = vpack.c.b16 %v1560, %v1552
        %v1945 = vpack.c.b16 %v1561, %v1553
        %v1946 = vpack.c.b16 %v1562, %v1554
        %v1947 = vpack.c.b16 %v1563, %v1555
        %v1948 = vpack.c.b16 %v1564, %v1556
        %v1949 = vpack.c.b16 %v1565, %v1557
        %v1950 = vpack.c.b16 %v1574, %v1566
        %v1951 = vpack.c.b16 %v1575, %v1567
        %v1952 = vpack.c.b16 %v1576, %v1568
        %v1953 = vpack.c.b16 %v1577, %v1569
        %v1954 = vpack.c.b16 %v1578, %v1570
        %v1955 = vpack.c.b16 %v1579, %v1571
        %v1956 = vpack.c.b16 %v1580, %v1572
        %v1957 = vpack.c.b16 %v1581, %v1573
        %v1958 = vpack.c.b16 %v1590, %v1582
        %v1959 = vpack.c.b16 %v1591, %v1583
        %v1960 = vpack.c.b16 %v1592, %v1584
        %v1961 = vpack.c.b16 %v1593, %v1585
        %v1962 = vpack.c.b16 %v1594, %v1586
        %v1963 = vpack.c.b16 %v1595, %v1587
        %v1964 = vpack.c.b16 %v1596, %v1588
        %v1965 = vpack.c.b16 %v1597, %v1589
        %v1966 = vpack.c.b16 %v1606, %v1598
        %v1967 = vpack.c.b16 %v1607, %v1599
        %v1968 = vpack.c.b16 %v1608, %v1600
        %v1969 = vpack.c.b16 %v1609, %v1601
        %v1970 = vpack.c.b16 %v1610, %v1602
        %v1971 = vpack.c.b16 %v1611, %v1603
        %v1972 = vpack.c.b16 %v1612, %v1604
        %v1973 = vpack.c.b16 %v1613, %v1605
        %v1974 = vpack.c.b16 %v1622, %v1614
        %v1975 = vpack.c.b16 %v1623, %v1615
        %v1976 = vpack.c.b16 %v1624, %v1616
        %v1977 = vpack.c.b16 %v1625, %v1617
        %v1978 = vpack.c.b16 %v1626, %v1618
        %v1979 = vpack.c.b16 %v1627, %v1619
        %v1980 = vpack.c.b16 %v1628, %v1620
        %v1981 = vpack.c.b16 %v1629, %v1621
        %v1982 = vpack.c.b16 %v1638, %v1630
        %v1983 = vpack.c.b16 %v1639, %v1631
        %v1984 = vpack.c.b16 %v1640, %v1632
        %v1985 = vpack.c.b16 %v1641, %v1633
        %v1986 = vpack.c.b16 %v1642, %v1634
        %v1987 = vpack.c.b16 %v1643, %v1635
        %v1988 = vpack.c.b16 %v1644, %v1636
        %v1989 = vpack.c.b16 %v1645, %v1637
        %v1990 = vpack.c.b16 %v1654, %v1646
        %v1991 = vpack.c.b16 %v1655, %v1647
        %v1992 = vpack.c.b16 %v1656, %v1648
        %v1993 = vpack.c.b16 %v1657, %v1649
        %v1994 = vpack.c.b16 %v1658, %v1650
        %v1995 = vpack.c.b16 %v1659, %v1651
        %v1996 = vpack.c.b16 %v1660, %v1652
        %v1997 = vpack.c.b16 %v1661, %v1653
        %v1998 = vpack.c.b16 %v1670, %v1662
        %v1999 = vpack.c.b16 %v1671, %v1663
        %v2000 = vpack.c.b16 %v1672, %v1664
        %v2001 = vpack.c.b16 %v1673, %v1665
        %v2002 = vpack.c.b16 %v1674, %v1666
        %v2003 = vpack.c.b16 %v1675, %v1667
        %v2004 = vpack.c.b16 %v1676, %v1668
        %v2005 = vpack.c.b16 %v1677, %v1669
        %v2006 = vpack.c.b16 %v1686, %v1678
        %v2007 = vpack.c.b16 %v1687, %v1679
        %v2008 = vpack.c.b16 %v1688, %v1680
        %v2009 = vpack.c.b16 %v1689, %v1681
        %v2010 = vpack.c.b16 %v1690, %v1682
        %v2011 = vpack.c.b16 %v1691, %v1683
        %v2012 = vpack.c.b16 %v1692, %v1684
        %v2013 = vpack.c.b16 %v1693, %v1685
        %v2014 = vpack.c.b16 %v1702, %v1694
        %v2015 = vpack.c.b16 %v1703, %v1695
        %v2016 = vpack.c.b16 %v1704, %v1696
        %v2017 = vpack.c.b16 %v1705, %v1697
        %v2018 = vpack.c.b16 %v1706, %v1698
        %v2019 = vpack.c.b16 %v1707, %v1699
        %v2020 = vpack.c.b16 %v1708, %v1700
        %v2021 = vpack.c.b16 %v1709, %v1701
        %v2022 = vpack.c.b16 %v1718, %v1710
        %v2023 = vpack.c.b16 %v1719, %v1711
        %v2024 = vpack.c.b16 %v1720, %v1712
        %v2025 = vpack.c.b16 %v1721, %v1713
        %v2026 = vpack.c.b16 %v1722, %v1714
        %v2027 = vpack.c.b16 %v1723, %v1715
        %v2028 = vpack.c.b16 %v1724, %v1716
        %v2029 = vpack.c.b16 %v1725, %v1717
        %v2030 = vpack.c.b16 %v1734, %v1726
        %v2031 = vpack.c.b16 %v1735, %v1727
        %v2032 = vpack.c.b16 %v1736, %v1728
        %v2033 = vpack.c.b16 %v1737, %v1729
        %v2034 = vpack.c.b16 %v1738, %v1730
        %v2035 = vpack.c.b16 %v1739, %v1731
        %v2036 = vpack.c.b16 %v1740, %v1732
        %v2037 = vpack.c.b16 %v1741, %v1733
        %v2038 = vpack.c.b16 %v1750, %v1742
        %v2039 = vpack.c.b16 %v1751, %v1743
        %v2040 = vpack.c.b16 %v1752, %v1744
        %v2041 = vpack.c.b16 %v1753, %v1745
        %v2042 = vpack.c.b16 %v1754, %v1746
        %v2043 = vpack.c.b16 %v1755, %v1747
        %v2044 = vpack.c.b16 %v1756, %v1748
        %v2045 = vpack.c.b16 %v1757, %v1749
        %v2046 = vpack.c.b16 %v1766, %v1758
        %v2047 = vpack.c.b16 %v1767, %v1759
        %v2048 = vpack.c.b16 %v1768, %v1760
        %v2049 = vpack.c.b16 %v1769, %v1761
        %v2050 = vpack.c.b16 %v1770, %v1762
        %v2051 = vpack.c.b16 %v1771, %v1763
        %v2052 = vpack.c.b16 %v1772, %v1764
        %v2053 = vpack.c.b16 %v1773, %v1765
        %v2054 = vpack.c.b16 %v1782, %v1774
        %v2055 = vpack.c.b16 %v1783, %v1775
        %v2056 = vpack.c.b16 %v1784, %v1776
        %v2057 = vpack.c.b16 %v1785, %v1777
        %v2058 = vpack.c.b16 %v1786, %v1778
        %v2059 = vpack.c.b16 %v1787, %v1779
        %v2060 = vpack.c.b16 %v1788, %v1780
        %v2061 = vpack.c.b16 %v1789, %v1781
        %v2062 = vpack.c.b16 %v1798, %v1790
        %v2063 = vpack.c.b16 %v1799, %v1791
        %v2064 = vpack.c.b16 %v1800, %v1792
        %v2065 = vpack.c.b16 %v1801, %v1793
        %v2066 = vpack.c.b16 %v1802, %v1794
        %v2067 = vpack.c.b16 %v1803, %v1795
        %v2068 = vpack.c.b16 %v1804, %v1796
        %v2069 = vpack.c.b16 %v1805, %v1797
        %v2070 = vpack.c.b16 %v1814, %v1806
        %v2071 = vpack.c.b16 %v1815, %v1807
        %v2072 = vpack.c.b16 %v1816, %v1808
        %v2073 = vpack.c.b16 %v1817, %v1809
        %v2074 = vpack.c.b16 %v1818, %v1810
        %v2075 = vpack.c.b16 %v1819, %v1811
        %v2076 = vpack.c.b16 %v1820, %v1812
        %v2077 = vpack.c.b16 %v1821, %v1813
        %2334 = vmatpush.bf16.msra.mxu0 %v1878
        %2335 = vmatpush.bf16.msra.mxu0 %v1870
        %2336 = vmatpush.bf16.msra.mxu0 %v1862
        %2337 = vmatpush.bf16.msra.mxu0 %v1854
        %2338 = vmatpush.bf16.msra.mxu0 %v1846
        %2339 = vmatpush.bf16.msra.mxu0 %v1838
        %2340 = vmatpush.bf16.msra.mxu0 %v1830
        %2341 = vmatpush.bf16.msra.mxu0 %v1822
        %2342 = vmatmul.bf16.gmra.mxu0 %v1046
        %v2343 = vpop.f32.mrf.mxu0
        %v2344 = vadd.f32 %v1024, %v2343
        %v2345 = vpop.f32.mrf.mxu0
        %2346 = vdwg.mxu0
        %2347 = vmatpush.bf16.msra.mxu0 %v1942
        %2348 = vmatpush.bf16.msra.mxu0 %v1934
        %2349 = vmatpush.bf16.msra.mxu0 %v1926
        %2350 = vmatpush.bf16.msra.mxu0 %v1918
        %2351 = vmatpush.bf16.msra.mxu0 %v1910
        %2352 = vmatpush.bf16.msra.mxu0 %v1902
        %2353 = vmatpush.bf16.msra.mxu0 %v1894
        %2354 = vmatpush.bf16.msra.mxu0 %v1886
        %2355 = vmatmul.bf16.gmra.mxu0 %v1047
        %v2356 = vpop.f32.mrf.mxu0
        %v2357 = vadd.f32 %v2344, %v2356
        %v2358 = vpop.f32.mrf.mxu0
        %2359 = vdwg.mxu0
        %2360 = vmatpush.bf16.msra.mxu0 %v2006
        %2361 = vmatpush.bf16.msra.mxu0 %v1998
        %2362 = vmatpush.bf16.msra.mxu0 %v1990
        %2363 = vmatpush.bf16.msra.mxu0 %v1982
        %2364 = vmatpush.bf16.msra.mxu0 %v1974
        %2365 = vmatpush.bf16.msra.mxu0 %v1966
        %2366 = vmatpush.bf16.msra.mxu0 %v1958
        %2367 = vmatpush.bf16.msra.mxu0 %v1950
        %2368 = vmatmul.bf16.gmra.mxu0 %v1048
        %v2369 = vpop.f32.mrf.mxu0
        %v2370 = vadd.f32 %v2357, %v2369
        %v2371 = vpop.f32.mrf.mxu0
        %2372 = vdwg.mxu0
        %2373 = vmatpush.bf16.msra.mxu0 %v2070
        %2374 = vmatpush.bf16.msra.mxu0 %v2062
        %2375 = vmatpush.bf16.msra.mxu0 %v2054
        %2376 = vmatpush.bf16.msra.mxu0 %v2046
        %2377 = vmatpush.bf16.msra.mxu0 %v2038
        %2378 = vmatpush.bf16.msra.mxu0 %v2030
        %2379 = vmatpush.bf16.msra.mxu0 %v2022
        %2380 = vmatpush.bf16.msra.mxu0 %v2014
        %2381 = vmatmul.bf16.gmra.mxu0 %v1049
        %v2382 = vpop.f32.mrf.mxu0
        %v2383 = vadd.f32 %v2370, %v2382
        %v2384 = vpop.f32.mrf.mxu0
        %2385 = vdwg.mxu0
        %2386 = vmatpush.bf16.msra.mxu0 %v1879
        %2387 = vmatpush.bf16.msra.mxu0 %v1871
        %2388 = vmatpush.bf16.msra.mxu0 %v1863
        %2389 = vmatpush.bf16.msra.mxu0 %v1855
        %2390 = vmatpush.bf16.msra.mxu0 %v1847
        %2391 = vmatpush.bf16.msra.mxu0 %v1839
        %2392 = vmatpush.bf16.msra.mxu0 %v1831
        %2393 = vmatpush.bf16.msra.mxu0 %v1823
        %2394 = vmatmul.bf16.gmra.mxu0 %v1046
        %v2395 = vpop.f32.mrf.mxu0
        %v2396 = vadd.f32 %v1025, %v2395
        %v2397 = vpop.f32.mrf.mxu0
        %2398 = vdwg.mxu0
        %2399 = vmatpush.bf16.msra.mxu0 %v1943
        %2400 = vmatpush.bf16.msra.mxu0 %v1935
        %2401 = vmatpush.bf16.msra.mxu0 %v1927
        %2402 = vmatpush.bf16.msra.mxu0 %v1919
        %2403 = vmatpush.bf16.msra.mxu0 %v1911
        %2404 = vmatpush.bf16.msra.mxu0 %v1903
        %2405 = vmatpush.bf16.msra.mxu0 %v1895
        %2406 = vmatpush.bf16.msra.mxu0 %v1887
        %2407 = vmatmul.bf16.gmra.mxu0 %v1047
        %v2408 = vpop.f32.mrf.mxu0
        %v2409 = vadd.f32 %v2396, %v2408
        %v2410 = vpop.f32.mrf.mxu0
        %2411 = vdwg.mxu0
        %2412 = vmatpush.bf16.msra.mxu0 %v2007
        %2413 = vmatpush.bf16.msra.mxu0 %v1999
        %2414 = vmatpush.bf16.msra.mxu0 %v1991
        %2415 = vmatpush.bf16.msra.mxu0 %v1983
        %2416 = vmatpush.bf16.msra.mxu0 %v1975
        %2417 = vmatpush.bf16.msra.mxu0 %v1967
        %2418 = vmatpush.bf16.msra.mxu0 %v1959
        %2419 = vmatpush.bf16.msra.mxu0 %v1951
        %2420 = vmatmul.bf16.gmra.mxu0 %v1048
        %v2421 = vpop.f32.mrf.mxu0
        %v2422 = vadd.f32 %v2409, %v2421
        %v2423 = vpop.f32.mrf.mxu0
        %2424 = vdwg.mxu0
        %2425 = vmatpush.bf16.msra.mxu0 %v2071
        %2426 = vmatpush.bf16.msra.mxu0 %v2063
        %2427 = vmatpush.bf16.msra.mxu0 %v2055
        %2428 = vmatpush.bf16.msra.mxu0 %v2047
        %2429 = vmatpush.bf16.msra.mxu0 %v2039
        %2430 = vmatpush.bf16.msra.mxu0 %v2031
        %2431 = vmatpush.bf16.msra.mxu0 %v2023
        %2432 = vmatpush.bf16.msra.mxu0 %v2015
        %2433 = vmatmul.bf16.gmra.mxu0 %v1049
        %v2434 = vpop.f32.mrf.mxu0
        %v2435 = vadd.f32 %v2422, %v2434
        %v2436 = vpop.f32.mrf.mxu0
        %2437 = vdwg.mxu0
        %2438 = vmatpush.bf16.msra.mxu0 %v1880
        %2439 = vmatpush.bf16.msra.mxu0 %v1872
        %2440 = vmatpush.bf16.msra.mxu0 %v1864
        %2441 = vmatpush.bf16.msra.mxu0 %v1856
        %2442 = vmatpush.bf16.msra.mxu0 %v1848
        %2443 = vmatpush.bf16.msra.mxu0 %v1840
        %2444 = vmatpush.bf16.msra.mxu0 %v1832
        %2445 = vmatpush.bf16.msra.mxu0 %v1824
        %2446 = vmatmul.bf16.gmra.mxu0 %v1046
        %v2447 = vpop.f32.mrf.mxu0
        %v2448 = vadd.f32 %v1026, %v2447
        %v2449 = vpop.f32.mrf.mxu0
        %2450 = vdwg.mxu0
        %2451 = vmatpush.bf16.msra.mxu0 %v1944
        %2452 = vmatpush.bf16.msra.mxu0 %v1936
        %2453 = vmatpush.bf16.msra.mxu0 %v1928
        %2454 = vmatpush.bf16.msra.mxu0 %v1920
        %2455 = vmatpush.bf16.msra.mxu0 %v1912
        %2456 = vmatpush.bf16.msra.mxu0 %v1904
        %2457 = vmatpush.bf16.msra.mxu0 %v1896
        %2458 = vmatpush.bf16.msra.mxu0 %v1888
        %2459 = vmatmul.bf16.gmra.mxu0 %v1047
        %v2460 = vpop.f32.mrf.mxu0
        %v2461 = vadd.f32 %v2448, %v2460
        %v2462 = vpop.f32.mrf.mxu0
        %2463 = vdwg.mxu0
        %2464 = vmatpush.bf16.msra.mxu0 %v2008
        %2465 = vmatpush.bf16.msra.mxu0 %v2000
        %2466 = vmatpush.bf16.msra.mxu0 %v1992
        %2467 = vmatpush.bf16.msra.mxu0 %v1984
        %2468 = vmatpush.bf16.msra.mxu0 %v1976
        %2469 = vmatpush.bf16.msra.mxu0 %v1968
        %2470 = vmatpush.bf16.msra.mxu0 %v1960
        %2471 = vmatpush.bf16.msra.mxu0 %v1952
        %2472 = vmatmul.bf16.gmra.mxu0 %v1048
        %v2473 = vpop.f32.mrf.mxu0
        %v2474 = vadd.f32 %v2461, %v2473
        %v2475 = vpop.f32.mrf.mxu0
        %2476 = vdwg.mxu0
        %2477 = vmatpush.bf16.msra.mxu0 %v2072
        %2478 = vmatpush.bf16.msra.mxu0 %v2064
        %2479 = vmatpush.bf16.msra.mxu0 %v2056
        %2480 = vmatpush.bf16.msra.mxu0 %v2048
        %2481 = vmatpush.bf16.msra.mxu0 %v2040
        %2482 = vmatpush.bf16.msra.mxu0 %v2032
        %2483 = vmatpush.bf16.msra.mxu0 %v2024
        %2484 = vmatpush.bf16.msra.mxu0 %v2016
        %2485 = vmatmul.bf16.gmra.mxu0 %v1049
        %v2486 = vpop.f32.mrf.mxu0
        %v2487 = vadd.f32 %v2474, %v2486
        %v2488 = vpop.f32.mrf.mxu0
        %2489 = vdwg.mxu0
        %2490 = vmatpush.bf16.msra.mxu0 %v1881
        %2491 = vmatpush.bf16.msra.mxu0 %v1873
        %2492 = vmatpush.bf16.msra.mxu0 %v1865
        %2493 = vmatpush.bf16.msra.mxu0 %v1857
        %2494 = vmatpush.bf16.msra.mxu0 %v1849
        %2495 = vmatpush.bf16.msra.mxu0 %v1841
        %2496 = vmatpush.bf16.msra.mxu0 %v1833
        %2497 = vmatpush.bf16.msra.mxu0 %v1825
        %2498 = vmatmul.bf16.gmra.mxu0 %v1046
        %v2499 = vpop.f32.mrf.mxu0
        %v2500 = vadd.f32 %v1027, %v2499
        %v2501 = vpop.f32.mrf.mxu0
        %2502 = vdwg.mxu0
        %2503 = vmatpush.bf16.msra.mxu0 %v1945
        %2504 = vmatpush.bf16.msra.mxu0 %v1937
        %2505 = vmatpush.bf16.msra.mxu0 %v1929
        %2506 = vmatpush.bf16.msra.mxu0 %v1921
        %2507 = vmatpush.bf16.msra.mxu0 %v1913
        %2508 = vmatpush.bf16.msra.mxu0 %v1905
        %2509 = vmatpush.bf16.msra.mxu0 %v1897
        %2510 = vmatpush.bf16.msra.mxu0 %v1889
        %2511 = vmatmul.bf16.gmra.mxu0 %v1047
        %v2512 = vpop.f32.mrf.mxu0
        %v2513 = vadd.f32 %v2500, %v2512
        %v2514 = vpop.f32.mrf.mxu0
        %2515 = vdwg.mxu0
        %2516 = vmatpush.bf16.msra.mxu0 %v2009
        %2517 = vmatpush.bf16.msra.mxu0 %v2001
        %2518 = vmatpush.bf16.msra.mxu0 %v1993
        %2519 = vmatpush.bf16.msra.mxu0 %v1985
        %2520 = vmatpush.bf16.msra.mxu0 %v1977
        %2521 = vmatpush.bf16.msra.mxu0 %v1969
        %2522 = vmatpush.bf16.msra.mxu0 %v1961
        %2523 = vmatpush.bf16.msra.mxu0 %v1953
        %2524 = vmatmul.bf16.gmra.mxu0 %v1048
        %v2525 = vpop.f32.mrf.mxu0
        %v2526 = vadd.f32 %v2513, %v2525
        %v2527 = vpop.f32.mrf.mxu0
        %2528 = vdwg.mxu0
        %2529 = vmatpush.bf16.msra.mxu0 %v2073
        %2530 = vmatpush.bf16.msra.mxu0 %v2065
        %2531 = vmatpush.bf16.msra.mxu0 %v2057
        %2532 = vmatpush.bf16.msra.mxu0 %v2049
        %2533 = vmatpush.bf16.msra.mxu0 %v2041
        %2534 = vmatpush.bf16.msra.mxu0 %v2033
        %2535 = vmatpush.bf16.msra.mxu0 %v2025
        %2536 = vmatpush.bf16.msra.mxu0 %v2017
        %2537 = vmatmul.bf16.gmra.mxu0 %v1049
        %v2538 = vpop.f32.mrf.mxu0
        %v2539 = vadd.f32 %v2526, %v2538
        %v2540 = vpop.f32.mrf.mxu0
        %2541 = vdwg.mxu0
        %2542 = vmatpush.bf16.msra.mxu0 %v1882
        %2543 = vmatpush.bf16.msra.mxu0 %v1874
        %2544 = vmatpush.bf16.msra.mxu0 %v1866
        %2545 = vmatpush.bf16.msra.mxu0 %v1858
        %2546 = vmatpush.bf16.msra.mxu0 %v1850
        %2547 = vmatpush.bf16.msra.mxu0 %v1842
        %2548 = vmatpush.bf16.msra.mxu0 %v1834
        %2549 = vmatpush.bf16.msra.mxu0 %v1826
        %2550 = vmatmul.bf16.gmra.mxu0 %v1046
        %v2551 = vpop.f32.mrf.mxu0
        %v2552 = vadd.f32 %v1028, %v2551
        %v2553 = vpop.f32.mrf.mxu0
        %2554 = vdwg.mxu0
        %2555 = vmatpush.bf16.msra.mxu0 %v1946
        %2556 = vmatpush.bf16.msra.mxu0 %v1938
        %2557 = vmatpush.bf16.msra.mxu0 %v1930
        %2558 = vmatpush.bf16.msra.mxu0 %v1922
        %2559 = vmatpush.bf16.msra.mxu0 %v1914
        %2560 = vmatpush.bf16.msra.mxu0 %v1906
        %2561 = vmatpush.bf16.msra.mxu0 %v1898
        %2562 = vmatpush.bf16.msra.mxu0 %v1890
        %2563 = vmatmul.bf16.gmra.mxu0 %v1047
        %v2564 = vpop.f32.mrf.mxu0
        %v2565 = vadd.f32 %v2552, %v2564
        %v2566 = vpop.f32.mrf.mxu0
        %2567 = vdwg.mxu0
        %2568 = vmatpush.bf16.msra.mxu0 %v2010
        %2569 = vmatpush.bf16.msra.mxu0 %v2002
        %2570 = vmatpush.bf16.msra.mxu0 %v1994
        %2571 = vmatpush.bf16.msra.mxu0 %v1986
        %2572 = vmatpush.bf16.msra.mxu0 %v1978
        %2573 = vmatpush.bf16.msra.mxu0 %v1970
        %2574 = vmatpush.bf16.msra.mxu0 %v1962
        %2575 = vmatpush.bf16.msra.mxu0 %v1954
        %2576 = vmatmul.bf16.gmra.mxu0 %v1048
        %v2577 = vpop.f32.mrf.mxu0
        %v2578 = vadd.f32 %v2565, %v2577
        %v2579 = vpop.f32.mrf.mxu0
        %2580 = vdwg.mxu0
        %2581 = vmatpush.bf16.msra.mxu0 %v2074
        %2582 = vmatpush.bf16.msra.mxu0 %v2066
        %2583 = vmatpush.bf16.msra.mxu0 %v2058
        %2584 = vmatpush.bf16.msra.mxu0 %v2050
        %2585 = vmatpush.bf16.msra.mxu0 %v2042
        %2586 = vmatpush.bf16.msra.mxu0 %v2034
        %2587 = vmatpush.bf16.msra.mxu0 %v2026
        %2588 = vmatpush.bf16.msra.mxu0 %v2018
        %2589 = vmatmul.bf16.gmra.mxu0 %v1049
        %v2590 = vpop.f32.mrf.mxu0
        %v2591 = vadd.f32 %v2578, %v2590
        %v2592 = vpop.f32.mrf.mxu0
        %2593 = vdwg.mxu0
        %2594 = vmatpush.bf16.msra.mxu0 %v1883
        %2595 = vmatpush.bf16.msra.mxu0 %v1875
        %2596 = vmatpush.bf16.msra.mxu0 %v1867
        %2597 = vmatpush.bf16.msra.mxu0 %v1859
        %2598 = vmatpush.bf16.msra.mxu0 %v1851
        %2599 = vmatpush.bf16.msra.mxu0 %v1843
        %2600 = vmatpush.bf16.msra.mxu0 %v1835
        %2601 = vmatpush.bf16.msra.mxu0 %v1827
        %2602 = vmatmul.bf16.gmra.mxu0 %v1046
        %v2603 = vpop.f32.mrf.mxu0
        %v2604 = vadd.f32 %v1029, %v2603
        %v2605 = vpop.f32.mrf.mxu0
        %2606 = vdwg.mxu0
        %2607 = vmatpush.bf16.msra.mxu0 %v1947
        %2608 = vmatpush.bf16.msra.mxu0 %v1939
        %2609 = vmatpush.bf16.msra.mxu0 %v1931
        %2610 = vmatpush.bf16.msra.mxu0 %v1923
        %2611 = vmatpush.bf16.msra.mxu0 %v1915
        %2612 = vmatpush.bf16.msra.mxu0 %v1907
        %2613 = vmatpush.bf16.msra.mxu0 %v1899
        %2614 = vmatpush.bf16.msra.mxu0 %v1891
        %2615 = vmatmul.bf16.gmra.mxu0 %v1047
        %v2616 = vpop.f32.mrf.mxu0
        %v2617 = vadd.f32 %v2604, %v2616
        %v2618 = vpop.f32.mrf.mxu0
        %2619 = vdwg.mxu0
        %2620 = vmatpush.bf16.msra.mxu0 %v2011
        %2621 = vmatpush.bf16.msra.mxu0 %v2003
        %2622 = vmatpush.bf16.msra.mxu0 %v1995
        %2623 = vmatpush.bf16.msra.mxu0 %v1987
        %2624 = vmatpush.bf16.msra.mxu0 %v1979
        %2625 = vmatpush.bf16.msra.mxu0 %v1971
        %2626 = vmatpush.bf16.msra.mxu0 %v1963
        %2627 = vmatpush.bf16.msra.mxu0 %v1955
        %2628 = vmatmul.bf16.gmra.mxu0 %v1048
        %v2629 = vpop.f32.mrf.mxu0
        %v2630 = vadd.f32 %v2617, %v2629
        %v2631 = vpop.f32.mrf.mxu0
        %2632 = vdwg.mxu0
        %2633 = vmatpush.bf16.msra.mxu0 %v2075
        %2634 = vmatpush.bf16.msra.mxu0 %v2067
        %2635 = vmatpush.bf16.msra.mxu0 %v2059
        %2636 = vmatpush.bf16.msra.mxu0 %v2051
        %2637 = vmatpush.bf16.msra.mxu0 %v2043
        %2638 = vmatpush.bf16.msra.mxu0 %v2035
        %2639 = vmatpush.bf16.msra.mxu0 %v2027
        %2640 = vmatpush.bf16.msra.mxu0 %v2019
        %2641 = vmatmul.bf16.gmra.mxu0 %v1049
        %v2642 = vpop.f32.mrf.mxu0
        %v2643 = vadd.f32 %v2630, %v2642
        %v2644 = vpop.f32.mrf.mxu0
        %2645 = vdwg.mxu0
        %2646 = vmatpush.bf16.msra.mxu0 %v1884
        %2647 = vmatpush.bf16.msra.mxu0 %v1876
        %2648 = vmatpush.bf16.msra.mxu0 %v1868
        %2649 = vmatpush.bf16.msra.mxu0 %v1860
        %2650 = vmatpush.bf16.msra.mxu0 %v1852
        %2651 = vmatpush.bf16.msra.mxu0 %v1844
        %2652 = vmatpush.bf16.msra.mxu0 %v1836
        %2653 = vmatpush.bf16.msra.mxu0 %v1828
        %2654 = vmatmul.bf16.gmra.mxu0 %v1046
        %v2655 = vpop.f32.mrf.mxu0
        %v2656 = vadd.f32 %v1030, %v2655
        %v2657 = vpop.f32.mrf.mxu0
        %2658 = vdwg.mxu0
        %2659 = vmatpush.bf16.msra.mxu0 %v1948
        %2660 = vmatpush.bf16.msra.mxu0 %v1940
        %2661 = vmatpush.bf16.msra.mxu0 %v1932
        %2662 = vmatpush.bf16.msra.mxu0 %v1924
        %2663 = vmatpush.bf16.msra.mxu0 %v1916
        %2664 = vmatpush.bf16.msra.mxu0 %v1908
        %2665 = vmatpush.bf16.msra.mxu0 %v1900
        %2666 = vmatpush.bf16.msra.mxu0 %v1892
        %2667 = vmatmul.bf16.gmra.mxu0 %v1047
        %v2668 = vpop.f32.mrf.mxu0
        %v2669 = vadd.f32 %v2656, %v2668
        %v2670 = vpop.f32.mrf.mxu0
        %2671 = vdwg.mxu0
        %2672 = vmatpush.bf16.msra.mxu0 %v2012
        %2673 = vmatpush.bf16.msra.mxu0 %v2004
        %2674 = vmatpush.bf16.msra.mxu0 %v1996
        %2675 = vmatpush.bf16.msra.mxu0 %v1988
        %2676 = vmatpush.bf16.msra.mxu0 %v1980
        %2677 = vmatpush.bf16.msra.mxu0 %v1972
        %2678 = vmatpush.bf16.msra.mxu0 %v1964
        %2679 = vmatpush.bf16.msra.mxu0 %v1956
        %2680 = vmatmul.bf16.gmra.mxu0 %v1048
        %v2681 = vpop.f32.mrf.mxu0
        %v2682 = vadd.f32 %v2669, %v2681
        %v2683 = vpop.f32.mrf.mxu0
        %2684 = vdwg.mxu0
        %2685 = vmatpush.bf16.msra.mxu0 %v2076
        %2686 = vmatpush.bf16.msra.mxu0 %v2068
        %2687 = vmatpush.bf16.msra.mxu0 %v2060
        %2688 = vmatpush.bf16.msra.mxu0 %v2052
        %2689 = vmatpush.bf16.msra.mxu0 %v2044
        %2690 = vmatpush.bf16.msra.mxu0 %v2036
        %2691 = vmatpush.bf16.msra.mxu0 %v2028
        %2692 = vmatpush.bf16.msra.mxu0 %v2020
        %2693 = vmatmul.bf16.gmra.mxu0 %v1049
        %v2694 = vpop.f32.mrf.mxu0
        %v2695 = vadd.f32 %v2682, %v2694
        %v2696 = vpop.f32.mrf.mxu0
        %2697 = vdwg.mxu0
        %2698 = vmatpush.bf16.msra.mxu0 %v1885
        %2699 = vmatpush.bf16.msra.mxu0 %v1877
        %2700 = vmatpush.bf16.msra.mxu0 %v1869
        %2701 = vmatpush.bf16.msra.mxu0 %v1861
        %2702 = vmatpush.bf16.msra.mxu0 %v1853
        %2703 = vmatpush.bf16.msra.mxu0 %v1845
        %2704 = vmatpush.bf16.msra.mxu0 %v1837
        %2705 = vmatpush.bf16.msra.mxu0 %v1829
        %2706 = vmatmul.bf16.gmra.mxu0 %v1046
        %v2707 = vpop.f32.mrf.mxu0
        %v2708 = vadd.f32 %v1031, %v2707
        %v2709 = vpop.f32.mrf.mxu0
        %2710 = vdwg.mxu0
        %2711 = vmatpush.bf16.msra.mxu0 %v1949
        %2712 = vmatpush.bf16.msra.mxu0 %v1941
        %2713 = vmatpush.bf16.msra.mxu0 %v1933
        %2714 = vmatpush.bf16.msra.mxu0 %v1925
        %2715 = vmatpush.bf16.msra.mxu0 %v1917
        %2716 = vmatpush.bf16.msra.mxu0 %v1909
        %2717 = vmatpush.bf16.msra.mxu0 %v1901
        %2718 = vmatpush.bf16.msra.mxu0 %v1893
        %2719 = vmatmul.bf16.gmra.mxu0 %v1047
        %v2720 = vpop.f32.mrf.mxu0
        %v2721 = vadd.f32 %v2708, %v2720
        %v2722 = vpop.f32.mrf.mxu0
        %2723 = vdwg.mxu0
        %2724 = vmatpush.bf16.msra.mxu0 %v2013
        %2725 = vmatpush.bf16.msra.mxu0 %v2005
        %2726 = vmatpush.bf16.msra.mxu0 %v1997
        %2727 = vmatpush.bf16.msra.mxu0 %v1989
        %2728 = vmatpush.bf16.msra.mxu0 %v1981
        %2729 = vmatpush.bf16.msra.mxu0 %v1973
        %2730 = vmatpush.bf16.msra.mxu0 %v1965
        %2731 = vmatpush.bf16.msra.mxu0 %v1957
        %2732 = vmatmul.bf16.gmra.mxu0 %v1048
        %v2733 = vpop.f32.mrf.mxu0
        %v2734 = vadd.f32 %v2721, %v2733
        %v2735 = vpop.f32.mrf.mxu0
        %2736 = vdwg.mxu0
        %2737 = vmatpush.bf16.msra.mxu0 %v2077
        %2738 = vmatpush.bf16.msra.mxu0 %v2069
        %2739 = vmatpush.bf16.msra.mxu0 %v2061
        %2740 = vmatpush.bf16.msra.mxu0 %v2053
        %2741 = vmatpush.bf16.msra.mxu0 %v2045
        %2742 = vmatpush.bf16.msra.mxu0 %v2037
        %2743 = vmatpush.bf16.msra.mxu0 %v2029
        %2744 = vmatpush.bf16.msra.mxu0 %v2021
        %2745 = vmatmul.bf16.gmra.mxu0 %v1049
        %v2746 = vpop.f32.mrf.mxu0
        %v2747 = vadd.f32 %v2734, %v2746
        %v2748 = vpop.f32.mrf.mxu0
        %2749 = vdwg.mxu0
        %2750 = vst [vmem:[%s762] sm:$0xff] %v2383
        %2751 = vst [vmem:[%s762 + $0x8] sm:$0xff] %v2435
        %2752 = vst [vmem:[%s762 + $0x10] sm:$0xff] %v2487
        %2753 = vst [vmem:[%s762 + $0x18] sm:$0xff] %v2539
        %2754 = vst [vmem:[%s762 + $0x20] sm:$0xff] %v2591
        %2755 = vst [vmem:[%s762 + $0x28] sm:$0xff] %v2643
        %2756 = vst [vmem:[%s762 + $0x30] sm:$0xff] %v2695
        %2757 = vst [vmem:[%s762 + $0x38] sm:$0xff] %v2747
        %s2758 = smul.u32 8, %s19
        %p2759 = scmp.lt.s32.totalorder %s18, 0
        %s2760 = scalar_select %p2759, %s18, 0
        %p2761 = scmp.lt.s32.totalorder %s2758, 15
        %s2762 = scalar_select %p2761, %s2758, 15
        %s2763 = smul.addr %s2760, 16
        %s2764 = sadd.s32 %s2762, %s2763
        %s2765 = smul.addr %s2764, 8
        %s2766 = scalar_lea.vmem %s3, %s2765
        // Predicated region
        $region56: #{resblock_decoder_forward.6} parent=50 // pred_check
          %p2767 = pneg %p124
        $region57: #{resblock_decoder_forward.6} parent=50 // pred_check_branch
          %2769 = sbr.rel (%p2767) target = $region59
        $region58: #{resblock_decoder_forward.6} parent=50 // pred_region
          %s2770 = smul.u32 8, %s19
        $region59: #{resblock_decoder_forward.6} parent=50 // pred_fallthru
          _
      $region51: #{resblock_decoder_forward.6} parent=5 // pred_fallthru
        _
      %p2771 = scmp.le.s32.totalorder 2, %s9
      // Predicated region
      $region60: #{resblock_decoder_forward.6} parent=5 // pred_check
        %p2772 = pneg %p2771
      $region61: #{resblock_decoder_forward.6} parent=5 // pred_check_branch
        %2774 = sbr.rel (%p2772) target = $region63
      $region62: #{resblock_decoder_forward.6} parent=5 // pred_region
        %s2775 = ssub.s32 %s9, 2
        // Predicated region
        $region64: #{resblock_decoder_forward.6} parent=62 // pred_check
          %p2776 = pneg %p130
        $region65: #{resblock_decoder_forward.6} parent=62 // pred_check_branch
          %2778 = sbr.rel (%p2776) target = $region67
        $region66: #{resblock_decoder_forward.6} parent=62 // pred_region
          %s2779 = smul.u32 8, %s21
          %p2780 = scmp.lt.s32.totalorder %s20, 0
          %s2781 = scalar_select %p2780, %s20, 0
          %p2782 = scmp.lt.s32.totalorder %s2779, 15
          %s2783 = scalar_select %p2782, %s2779, 15
          %s2784 = smul.addr %s2781, 16
          %s2785 = sadd.s32 %s2783, %s2784
          %s2786 = smul.addr %s2785, 8
          %s2787 = scalar_lea.vmem %s3, %s2786
        $region67: #{resblock_decoder_forward.6} parent=62 // pred_fallthru
          _
      $region63: #{resblock_decoder_forward.6} parent=5 // pred_fallthru
        _
    $region6: #{resblock_decoder_forward.6} parent=1 // loop_footer
      %s13 = sadd.s32 1, %s9
    $region7: #{resblock_decoder_forward.6} parent=1 // loop_footer_branch
      %8 = sbr.rel target = $region3
    $region8: #{resblock_decoder_forward.6} parent=1 // loop_exit
      _

// kernel: resblock_decoder_forward.10
$region0: #{resblock_decoder_forward.10}
  #allocation0 [shape = 'u32[]', space=smem, size = 0x4, offset = 0x4, fixed_abs, tag = 'smem constant byte address 0x4 - core index']
  #allocation1 [shape = 'u32[72,128]{1,0:T(1,128)}', space=vmem, size = 0x9000, scoped, tag = 'internal scratch']
  %s0 = inlined_call_operand.vmem [shape: f32[32,1024], index: 0, kind: input, shape index: {}]
  %s1 = inlined_call_operand.vmem [shape: f32[32,1024], index: 1, kind: output, shape index: {}]
  %s2 = sld [smem:[#allocation0]]
  $region14: #{resblock_decoder_forward.10} parent=0
    _
  %s4 = ssub.s32 1, %s2
  %s5 = scalar_select 0, %s4, %s2
  // Predicated region
  $region2: #{resblock_decoder_forward.10} parent=0 // pred_check
    _
  $region3: #{resblock_decoder_forward.10} parent=0 // pred_check_branch
    %7 = sbr.rel (0) target = $region5
  $region4: #{resblock_decoder_forward.10} parent=0 // pred_region
    _
  $region5: #{resblock_decoder_forward.10} parent=0 // pred_fallthru
    _
  %v8 = vld [vmem:[%s0] sm:$0xff]
  %v9 = vld [vmem:[%s0 + $0x8] sm:$0xff]
  %v10 = vld [vmem:[%s0 + $0x10] sm:$0xff]
  %v11 = vld [vmem:[%s0 + $0x18] sm:$0xff]
  %v12 = vld [vmem:[%s0 + $0x20] sm:$0xff]
  %v13 = vld [vmem:[%s0 + $0x28] sm:$0xff]
  %v14 = vld [vmem:[%s0 + $0x30] sm:$0xff]
  %v15 = vld [vmem:[%s0 + $0x38] sm:$0xff]
  %v16 = vld [vmem:[%s0 + $0x40] sm:$0xff]
  %v17 = vld [vmem:[%s0 + $0x48] sm:$0xff]
  %v18 = vld [vmem:[%s0 + $0x50] sm:$0xff]
  %v19 = vld [vmem:[%s0 + $0x58] sm:$0xff]
  %v20 = vld [vmem:[%s0 + $0x60] sm:$0xff]
  %v21 = vld [vmem:[%s0 + $0x68] sm:$0xff]
  %v22 = vld [vmem:[%s0 + $0x70] sm:$0xff]
  %v23 = vld [vmem:[%s0 + $0x78] sm:$0xff]
  %v24 = vld [vmem:[%s0 + $0x80] sm:$0xff]
  %v25 = vld [vmem:[%s0 + $0x88] sm:$0xff]
  %v26 = vld [vmem:[%s0 + $0x90] sm:$0xff]
  %v27 = vld [vmem:[%s0 + $0x98] sm:$0xff]
  %v28 = vld [vmem:[%s0 + $0xa0] sm:$0xff]
  %v29 = vld [vmem:[%s0 + $0xa8] sm:$0xff]
  %v30 = vld [vmem:[%s0 + $0xb0] sm:$0xff]
  %v31 = vld [vmem:[%s0 + $0xb8] sm:$0xff]
  %v32 = vld [vmem:[%s0 + $0xc0] sm:$0xff]
  %v33 = vld [vmem:[%s0 + $0xc8] sm:$0xff]
  %v34 = vld [vmem:[%s0 + $0xd0] sm:$0xff]
  %v35 = vld [vmem:[%s0 + $0xd8] sm:$0xff]
  %v36 = vld [vmem:[%s0 + $0xe0] sm:$0xff]
  %v37 = vld [vmem:[%s0 + $0xe8] sm:$0xff]
  %v38 = vld [vmem:[%s0 + $0xf0] sm:$0xff]
  %v39 = vld [vmem:[%s0 + $0xf8] sm:$0xff]
  %v40 = vadd.f32 %v8, %v9
  %v41 = vadd.f32 %v40, %v10
  %v42 = vadd.f32 %v41, %v11
  %v43 = vadd.f32 %v42, %v12
  %v44 = vadd.f32 %v43, %v13
  %v45 = vadd.f32 %v44, %v14
  %v46 = vadd.f32 %v45, %v15
  %47 = vadd.xlane.f32.xlu0 %v46
  %v48 = vpop.xlane.xlu0 %47
  %v49 = vadd.f32 %v16, %v17
  %v50 = vadd.f32 %v49, %v18
  %v51 = vadd.f32 %v50, %v19
  %v52 = vadd.f32 %v51, %v20
  %v53 = vadd.f32 %v52, %v21
  %v54 = vadd.f32 %v53, %v22
  %v55 = vadd.f32 %v54, %v23
  %56 = vadd.xlane.f32.xlu0 %v55
  %v57 = vpop.xlane.xlu0 %56
  %v58 = vadd.f32 %v24, %v25
  %v59 = vadd.f32 %v58, %v26
  %v60 = vadd.f32 %v59, %v27
  %v61 = vadd.f32 %v60, %v28
  %v62 = vadd.f32 %v61, %v29
  %v63 = vadd.f32 %v62, %v30
  %v64 = vadd.f32 %v63, %v31
  %65 = vadd.xlane.f32.xlu0 %v64
  %v66 = vpop.xlane.xlu0 %65
  %v67 = vadd.f32 %v32, %v33
  %v68 = vadd.f32 %v67, %v34
  %v69 = vadd.f32 %v68, %v35
  %v70 = vadd.f32 %v69, %v36
  %v71 = vadd.f32 %v70, %v37
  %v72 = vadd.f32 %v71, %v38
  %v73 = vadd.f32 %v72, %v39
  %74 = vadd.xlane.f32.xlu0 %v73
  %v75 = vpop.xlane.xlu0 %74
  %v76 = vrcp.pop 1024.0
  %v77 = vmul.f32 1024.0, %v76
  %v78 = vsub.f32 1.0, %v77
  %v79 = vmul.f32 %v76, %v78
  %v80 = vadd.f32 %v76, %v79
  %vm81 = vweird.f32 %v76
  %v82 = vsel %vm81, %v76, %v80
  %v83 = vmul.f32 %v48, %v82
  %v84 = vmul.f32 %v57, %v82
  %v85 = vmul.f32 %v66, %v82
  %v86 = vmul.f32 %v75, %v82
  %v87 = vsub.f32 %v8, %v83
  %v88 = vsub.f32 %v9, %v83
  %v89 = vsub.f32 %v10, %v83
  %v90 = vsub.f32 %v11, %v83
  %v91 = vsub.f32 %v12, %v83
  %v92 = vsub.f32 %v13, %v83
  %v93 = vsub.f32 %v14, %v83
  %v94 = vsub.f32 %v15, %v83
  %v95 = vsub.f32 %v16, %v84
  %v96 = vsub.f32 %v17, %v84
  %v97 = vsub.f32 %v18, %v84
  %v98 = vsub.f32 %v19, %v84
  %v99 = vsub.f32 %v20, %v84
  %v100 = vsub.f32 %v21, %v84
  %v101 = vsub.f32 %v22, %v84
  %v102 = vsub.f32 %v23, %v84
  %v103 = vsub.f32 %v24, %v85
  %v104 = vsub.f32 %v25, %v85
  %v105 = vsub.f32 %v26, %v85
  %v106 = vsub.f32 %v27, %v85
  %v107 = vsub.f32 %v28, %v85
  %v108 = vsub.f32 %v29, %v85
  %v109 = vsub.f32 %v30, %v85
  %v110 = vsub.f32 %v31, %v85
  %v111 = vsub.f32 %v32, %v86
  %v112 = vsub.f32 %v33, %v86
  %v113 = vsub.f32 %v34, %v86
  %v114 = vsub.f32 %v35, %v86
  %v115 = vsub.f32 %v36, %v86
  %v116 = vsub.f32 %v37, %v86
  %v117 = vsub.f32 %v38, %v86
  %v118 = vsub.f32 %v39, %v86
  %v119 = vmul.f32 %v87, %v87
  %v120 = vmul.f32 %v88, %v88
  %v121 = vmul.f32 %v89, %v89
  %v122 = vmul.f32 %v90, %v90
  %v123 = vmul.f32 %v91, %v91
  %v124 = vmul.f32 %v92, %v92
  %v125 = vmul.f32 %v93, %v93
  %v126 = vmul.f32 %v94, %v94
  %v127 = vmul.f32 %v95, %v95
  %v128 = vmul.f32 %v96, %v96
  %v129 = vmul.f32 %v97, %v97
  %v130 = vmul.f32 %v98, %v98
  %v131 = vmul.f32 %v99, %v99
  %v132 = vmul.f32 %v100, %v100
  %v133 = vmul.f32 %v101, %v101
  %v134 = vmul.f32 %v102, %v102
  %v135 = vmul.f32 %v103, %v103
  %v136 = vmul.f32 %v104, %v104
  %v137 = vmul.f32 %v105, %v105
  %v138 = vmul.f32 %v106, %v106
  %v139 = vmul.f32 %v107, %v107
  %v140 = vmul.f32 %v108, %v108
  %v141 = vmul.f32 %v109, %v109
  %v142 = vmul.f32 %v110, %v110
  %v143 = vmul.f32 %v111, %v111
  %v144 = vmul.f32 %v112, %v112
  %v145 = vmul.f32 %v113, %v113
  %v146 = vmul.f32 %v114, %v114
  %v147 = vmul.f32 %v115, %v115
  %v148 = vmul.f32 %v116, %v116
  %v149 = vmul.f32 %v117, %v117
  %v150 = vmul.f32 %v118, %v118
  %v151 = vadd.f32 %v119, %v120
  %v152 = vadd.f32 %v151, %v121
  %v153 = vadd.f32 %v152, %v122
  %v154 = vadd.f32 %v153, %v123
  %v155 = vadd.f32 %v154, %v124
  %v156 = vadd.f32 %v155, %v125
  %v157 = vadd.f32 %v156, %v126
  %158 = vadd.xlane.f32.xlu0 %v157
  %v159 = vpop.xlane.xlu0 %158
  %v160 = vadd.f32 %v127, %v128
  %v161 = vadd.f32 %v160, %v129
  %v162 = vadd.f32 %v161, %v130
  %v163 = vadd.f32 %v162, %v131
  %v164 = vadd.f32 %v163, %v132
  %v165 = vadd.f32 %v164, %v133
  %v166 = vadd.f32 %v165, %v134
  %167 = vadd.xlane.f32.xlu0 %v166
  %v168 = vpop.xlane.xlu0 %167
  %v169 = vadd.f32 %v135, %v136
  %v170 = vadd.f32 %v169, %v137
  %v171 = vadd.f32 %v170, %v138
  %v172 = vadd.f32 %v171, %v139
  %v173 = vadd.f32 %v172, %v140
  %v174 = vadd.f32 %v173, %v141
  %v175 = vadd.f32 %v174, %v142
  %176 = vadd.xlane.f32.xlu0 %v175
  %v177 = vpop.xlane.xlu0 %176
  %v178 = vadd.f32 %v143, %v144
  %v179 = vadd.f32 %v178, %v145
  %v180 = vadd.f32 %v179, %v146
  %v181 = vadd.f32 %v180, %v147
  %v182 = vadd.f32 %v181, %v148
  %v183 = vadd.f32 %v182, %v149
  %v184 = vadd.f32 %v183, %v150
  %185 = vadd.xlane.f32.xlu0 %v184
  %v186 = vpop.xlane.xlu0 %185
  %v187 = vmul.f32 %v159, %v82
  %v188 = vmul.f32 %v168, %v82
  %v189 = vmul.f32 %v177, %v82
  %v190 = vmul.f32 %v186, %v82
  %v191 = vadd.f32 %v187, 1e-05
  %v192 = vadd.f32 %v188, 1e-05
  %v193 = vadd.f32 %v189, 1e-05
  %v194 = vadd.f32 %v190, 1e-05
  %v195 = vrsqrt.pop %v191
  %v196 = vmul.f32 %v195, %v191
  %v197 = vmul.f32 %v196, %v195
  %v198 = vmul.f32 0.5, %v197
  %v199 = vsub.f32 1.5, %v198
  %v200 = vmul.f32 %v195, %v199
  %vm201 = vweird.f32 %v191
  %vm202 = vweird.f32 %v195
  %vm203 = vmor %vm201, %vm202
  %v204 = vsel %vm203, %v195, %v200
  %v205 = vrsqrt.pop %v192
  %v206 = vmul.f32 %v205, %v192
  %v207 = vmul.f32 %v206, %v205
  %v208 = vmul.f32 0.5, %v207
  %v209 = vsub.f32 1.5, %v208
  %v210 = vmul.f32 %v205, %v209
  %vm211 = vweird.f32 %v192
  %vm212 = vweird.f32 %v205
  %vm213 = vmor %vm211, %vm212
  %v214 = vsel %vm213, %v205, %v210
  %v215 = vrsqrt.pop %v193
  %v216 = vmul.f32 %v215, %v193
  %v217 = vmul.f32 %v216, %v215
  %v218 = vmul.f32 0.5, %v217
  %v219 = vsub.f32 1.5, %v218
  %v220 = vmul.f32 %v215, %v219
  %vm221 = vweird.f32 %v193
  %vm222 = vweird.f32 %v215
  %vm223 = vmor %vm221, %vm222
  %v224 = vsel %vm223, %v215, %v220
  %v225 = vrsqrt.pop %v194
  %v226 = vmul.f32 %v225, %v194
  %v227 = vmul.f32 %v226, %v225
  %v228 = vmul.f32 0.5, %v227
  %v229 = vsub.f32 1.5, %v228
  %v230 = vmul.f32 %v225, %v229
  %vm231 = vweird.f32 %v194
  %vm232 = vweird.f32 %v225
  %vm233 = vmor %vm231, %vm232
  %v234 = vsel %vm233, %v225, %v230
  %v235 = vmul.f32 %v87, %v204
  %v236 = vmul.f32 %v88, %v204
  %v237 = vmul.f32 %v89, %v204
  %v238 = vmul.f32 %v90, %v204
  %v239 = vmul.f32 %v91, %v204
  %v240 = vmul.f32 %v92, %v204
  %v241 = vmul.f32 %v93, %v204
  %v242 = vmul.f32 %v94, %v204
  %v243 = vmul.f32 %v95, %v214
  %v244 = vmul.f32 %v96, %v214
  %v245 = vmul.f32 %v97, %v214
  %v246 = vmul.f32 %v98, %v214
  %v247 = vmul.f32 %v99, %v214
  %v248 = vmul.f32 %v100, %v214
  %v249 = vmul.f32 %v101, %v214
  %v250 = vmul.f32 %v102, %v214
  %v251 = vmul.f32 %v103, %v224
  %v252 = vmul.f32 %v104, %v224
  %v253 = vmul.f32 %v105, %v224
  %v254 = vmul.f32 %v106, %v224
  %v255 = vmul.f32 %v107, %v224
  %v256 = vmul.f32 %v108, %v224
  %v257 = vmul.f32 %v109, %v224
  %v258 = vmul.f32 %v110, %v224
  %v259 = vmul.f32 %v111, %v234
  %v260 = vmul.f32 %v112, %v234
  %v261 = vmul.f32 %v113, %v234
  %v262 = vmul.f32 %v114, %v234
  %v263 = vmul.f32 %v115, %v234
  %v264 = vmul.f32 %v116, %v234
  %v265 = vmul.f32 %v117, %v234
  %v266 = vmul.f32 %v118, %v234
  %vm267 = vcmp.ge.f32.partialorder %v235, 0.0
  %vm268 = vcmp.ge.f32.partialorder %v236, 0.0
  %vm269 = vcmp.ge.f32.partialorder %v237, 0.0
  %vm270 = vcmp.ge.f32.partialorder %v238, 0.0
  %vm271 = vcmp.ge.f32.partialorder %v239, 0.0
  %vm272 = vcmp.ge.f32.partialorder %v240, 0.0
  %vm273 = vcmp.ge.f32.partialorder %v241, 0.0
  %vm274 = vcmp.ge.f32.partialorder %v242, 0.0
  %vm275 = vcmp.ge.f32.partialorder %v243, 0.0
  %vm276 = vcmp.ge.f32.partialorder %v244, 0.0
  %vm277 = vcmp.ge.f32.partialorder %v245, 0.0
  %vm278 = vcmp.ge.f32.partialorder %v246, 0.0
  %vm279 = vcmp.ge.f32.partialorder %v247, 0.0
  %vm280 = vcmp.ge.f32.partialorder %v248, 0.0
  %vm281 = vcmp.ge.f32.partialorder %v249, 0.0
  %vm282 = vcmp.ge.f32.partialorder %v250, 0.0
  %vm283 = vcmp.ge.f32.partialorder %v251, 0.0
  %vm284 = vcmp.ge.f32.partialorder %v252, 0.0
  %vm285 = vcmp.ge.f32.partialorder %v253, 0.0
  %vm286 = vcmp.ge.f32.partialorder %v254, 0.0
  %vm287 = vcmp.ge.f32.partialorder %v255, 0.0
  %vm288 = vcmp.ge.f32.partialorder %v256, 0.0
  %vm289 = vcmp.ge.f32.partialorder %v257, 0.0
  %vm290 = vcmp.ge.f32.partialorder %v258, 0.0
  %vm291 = vcmp.ge.f32.partialorder %v259, 0.0
  %vm292 = vcmp.ge.f32.partialorder %v260, 0.0
  %vm293 = vcmp.ge.f32.partialorder %v261, 0.0
  %vm294 = vcmp.ge.f32.partialorder %v262, 0.0
  %vm295 = vcmp.ge.f32.partialorder %v263, 0.0
  %vm296 = vcmp.ge.f32.partialorder %v264, 0.0
  %vm297 = vcmp.ge.f32.partialorder %v265, 0.0
  %vm298 = vcmp.ge.f32.partialorder %v266, 0.0
  %v299 = vmul.f32 %v235, 0.1
  %v300 = vmul.f32 %v236, 0.1
  %v301 = vmul.f32 %v237, 0.1
  %v302 = vmul.f32 %v238, 0.1
  %v303 = vmul.f32 %v239, 0.1
  %v304 = vmul.f32 %v240, 0.1
  %v305 = vmul.f32 %v241, 0.1
  %v306 = vmul.f32 %v242, 0.1
  %v307 = vmul.f32 %v243, 0.1
  %v308 = vmul.f32 %v244, 0.1
  %v309 = vmul.f32 %v245, 0.1
  %v310 = vmul.f32 %v246, 0.1
  %v311 = vmul.f32 %v247, 0.1
  %v312 = vmul.f32 %v248, 0.1
  %v313 = vmul.f32 %v249, 0.1
  %v314 = vmul.f32 %v250, 0.1
  %v315 = vmul.f32 %v251, 0.1
  %v316 = vmul.f32 %v252, 0.1
  %v317 = vmul.f32 %v253, 0.1
  %v318 = vmul.f32 %v254, 0.1
  %v319 = vmul.f32 %v255, 0.1
  %v320 = vmul.f32 %v256, 0.1
  %v321 = vmul.f32 %v257, 0.1
  %v322 = vmul.f32 %v258, 0.1
  %v323 = vmul.f32 %v259, 0.1
  %v324 = vmul.f32 %v260, 0.1
  %v325 = vmul.f32 %v261, 0.1
  %v326 = vmul.f32 %v262, 0.1
  %v327 = vmul.f32 %v263, 0.1
  %v328 = vmul.f32 %v264, 0.1
  %v329 = vmul.f32 %v265, 0.1
  %v330 = vmul.f32 %v266, 0.1
  %v331 = vsel %vm267, %v235, %v299
  %v332 = vsel %vm268, %v236, %v300
  %v333 = vsel %vm269, %v237, %v301
  %v334 = vsel %vm270, %v238, %v302
  %v335 = vsel %vm271, %v239, %v303
  %v336 = vsel %vm272, %v240, %v304
  %v337 = vsel %vm273, %v241, %v305
  %v338 = vsel %vm274, %v242, %v306
  %v339 = vsel %vm275, %v243, %v307
  %v340 = vsel %vm276, %v244, %v308
  %v341 = vsel %vm277, %v245, %v309
  %v342 = vsel %vm278, %v246, %v310
  %v343 = vsel %vm279, %v247, %v311
  %v344 = vsel %vm280, %v248, %v312
  %v345 = vsel %vm281, %v249, %v313
  %v346 = vsel %vm282, %v250, %v314
  %v347 = vsel %vm283, %v251, %v315
  %v348 = vsel %vm284, %v252, %v316
  %v349 = vsel %vm285, %v253, %v317
  %v350 = vsel %vm286, %v254, %v318
  %v351 = vsel %vm287, %v255, %v319
  %v352 = vsel %vm288, %v256, %v320
  %v353 = vsel %vm289, %v257, %v321
  %v354 = vsel %vm290, %v258, %v322
  %v355 = vsel %vm291, %v259, %v323
  %v356 = vsel %vm292, %v260, %v324
  %v357 = vsel %vm293, %v261, %v325
  %v358 = vsel %vm294, %v262, %v326
  %v359 = vsel %vm295, %v263, %v327
  %v360 = vsel %vm296, %v264, %v328
  %v361 = vsel %vm297, %v265, %v329
  %v362 = vsel %vm298, %v266, %v330
  %363 = vst [vmem:[%s1] sm:$0xff] %v331
  %364 = vst [vmem:[%s1 + $0x8] sm:$0xff] %v332
  %365 = vst [vmem:[%s1 + $0x10] sm:$0xff] %v333
  %366 = vst [vmem:[%s1 + $0x18] sm:$0xff] %v334
  %367 = vst [vmem:[%s1 + $0x20] sm:$0xff] %v335
  %368 = vst [vmem:[%s1 + $0x28] sm:$0xff] %v336
  %369 = vst [vmem:[%s1 + $0x30] sm:$0xff] %v337
  %370 = vst [vmem:[%s1 + $0x38] sm:$0xff] %v338
  %371 = vst [vmem:[%s1 + $0x40] sm:$0xff] %v339
  %372 = vst [vmem:[%s1 + $0x48] sm:$0xff] %v340
  %373 = vst [vmem:[%s1 + $0x50] sm:$0xff] %v341
  %374 = vst [vmem:[%s1 + $0x58] sm:$0xff] %v342
  %375 = vst [vmem:[%s1 + $0x60] sm:$0xff] %v343
  %376 = vst [vmem:[%s1 + $0x68] sm:$0xff] %v344
  %377 = vst [vmem:[%s1 + $0x70] sm:$0xff] %v345
  %378 = vst [vmem:[%s1 + $0x78] sm:$0xff] %v346
  %379 = vst [vmem:[%s1 + $0x80] sm:$0xff] %v347
  %380 = vst [vmem:[%s1 + $0x88] sm:$0xff] %v348
  %381 = vst [vmem:[%s1 + $0x90] sm:$0xff] %v349
  %382 = vst [vmem:[%s1 + $0x98] sm:$0xff] %v350
  %383 = vst [vmem:[%s1 + $0xa0] sm:$0xff] %v351
  %384 = vst [vmem:[%s1 + $0xa8] sm:$0xff] %v352
  %385 = vst [vmem:[%s1 + $0xb0] sm:$0xff] %v353
  %386 = vst [vmem:[%s1 + $0xb8] sm:$0xff] %v354
  %387 = vst [vmem:[%s1 + $0xc0] sm:$0xff] %v355
  %388 = vst [vmem:[%s1 + $0xc8] sm:$0xff] %v356
  %389 = vst [vmem:[%s1 + $0xd0] sm:$0xff] %v357
  %390 = vst [vmem:[%s1 + $0xd8] sm:$0xff] %v358
  %391 = vst [vmem:[%s1 + $0xe0] sm:$0xff] %v359
  %392 = vst [vmem:[%s1 + $0xe8] sm:$0xff] %v360
  %393 = vst [vmem:[%s1 + $0xf0] sm:$0xff] %v361
  %394 = vst [vmem:[%s1 + $0xf8] sm:$0xff] %v362
  // Predicated region
  $region6: #{resblock_decoder_forward.10} parent=0 // pred_check
    _
  $region7: #{resblock_decoder_forward.10} parent=0 // pred_check_branch
    %396 = sbr.rel (0) target = $region9
  $region8: #{resblock_decoder_forward.10} parent=0 // pred_region
    _
  $region9: #{resblock_decoder_forward.10} parent=0 // pred_fallthru
    _
  // Predicated region
  $region10: #{resblock_decoder_forward.10} parent=0 // pred_check
    _
  $region11: #{resblock_decoder_forward.10} parent=0 // pred_check_branch
    %398 = sbr.rel (0) target = $region13
  $region12: #{resblock_decoder_forward.10} parent=0 // pred_region
    _
  $region13: #{resblock_decoder_forward.10} parent=0 // pred_fallthru
    _

// kernel: resblock_decoder_forward.9
$region0: #{resblock_decoder_forward.9}
  #allocation0 [shape = 'u32[]', space=smem, size = 0x4, offset = 0x4, fixed_abs, tag = 'smem constant byte address 0x4 - core index']
  #allocation1 [shape = 'u32[72,128]{1,0:T(1,128)}', space=vmem, size = 0x9000, scoped, tag = 'internal scratch']
  %s0 = inlined_call_operand.vmem [shape: bf16[16,144], index: 0, kind: input, shape index: {}]
  %s1 = inlined_call_operand.vmem [shape: bf16[2,144,1024], index: 1, kind: input, shape index: {}]
  %s2 = inlined_call_operand.vmem [shape: f32[16,1], index: 2, kind: input, shape index: {}]
  %s3 = inlined_call_operand.vmem [shape: f32[2,16,1024], index: 3, kind: output, shape index: {}]
  %s4 = sld [smem:[#allocation0]]
  $region45: #{resblock_decoder_forward.9} parent=0
    _
  %s6 = ssub.s32 1, %s4
  %s7 = scalar_select 0, %s6, %s4
  loop: start=0, step=1, limit=4
  $region2: #{resblock_decoder_forward.9} parent=0 // loop_pre_header
    _
  $region3: #{resblock_decoder_forward.9} parent=0 // loop_header
    %s9 = sphi 0, %s13
    %p10 = scmp.ge.s32.totalorder %s9, 4
    %s16 = sphi 0, %s28
    %s17 = sphi 0, %s24
    %s18 = sphi 0, %s16
    %s19 = sphi 0, %s17
    %s20 = sphi 0, %s18
    %s21 = sphi 0, %s19
    %s29 = sphi 0, %s29
    %s31 = sphi 0, %s29
    %s32 = sphi 0, %s31
    %s46 = sphi 0, %s32
    %s54 = sphi 0, %s56
    %s57 = sphi 0, %s54
    %s58 = sphi 0, %s57
    %s74 = sphi 0, %s58
    %s78 = sphi 0, %s78
    %s80 = sphi 0, %s78
    %s81 = sphi 0, %s80
    %s95 = sphi 0, %s81
    %s103 = sphi 0, %s105
    %s106 = sphi 0, %s103
    %s107 = sphi 0, %s106
    %s123 = sphi 0, %s107
  $region4: #{resblock_decoder_forward.9} parent=0 // loop_header_branch
    %12 = sbr.rel (%p10) target = $region8
  $region5: #{resblock_decoder_forward.9} parent=0 // loop_body
    %s14 = ssub.s32 %s9, 1
    %s15 = ssub.s32 %s9, 2
    %s22 = sadd.s32 1, %s17
    %p23 = scmp.ge.s32.totalorder %s22, 1
    %s24 = scalar_select %p23, 0, %s22
    %s25 = sadd.s32 1, %s16
    %s26 = scalar_select %p23, %s25, %s16
    %p27 = scmp.ge.s32.totalorder %s26, 2
    %s28 = scalar_select %p27, 0, %s26
    %s30 = sadd.s32 %s29, 1
    %p33 = scmp.eq.s32.totalorder %s9, 1
    %p34 = scmp.ne.s32.totalorder %s29, %s31
    %p35 = scmp.eq.s32.totalorder %s9, 0
    %p36 = por %p34, %p35
    %p37 = scmp.ne.s32.totalorder %s29, %s31
    %p38 = scmp.eq.s32.totalorder %s14, 1
    %p39 = por %p37, %p38
    %p40 = scmp.ne.s32.totalorder %s31, %s32
    %p41 = scmp.eq.s32.totalorder %s14, 0
    %p42 = por %p40, %p41
    %p43 = scmp.ne.s32.totalorder %s31, %s32
    %p44 = scmp.eq.s32.totalorder %s15, 1
    %p45 = por %p43, %p44
    %p47 = scmp.ne.s32.totalorder %s32, %s46
    %p48 = scmp.eq.s32.totalorder %s15, 0
    %p49 = por %p47, %p48
    %s50 = ssub.s32 %s16, %s28
    %s51 = ssub.s32 %s17, %s24
    %s52 = sor.u32 %s50, %s51
    %p53 = scmp.eq.s32.totalorder %s52, 0
    %s55 = sadd.s32 %s54, 1
    %s56 = scalar_select %p53, %s54, %s55
    %p59 = pneg %p53
    %p60 = scmp.eq.s32.totalorder %s9, 1
    %p61 = por %p59, %p60
    %p62 = scmp.ne.s32.totalorder %s54, %s57
    %p63 = scmp.eq.s32.totalorder %s9, 0
    %p64 = por %p62, %p63
    %p65 = scmp.ne.s32.totalorder %s54, %s57
    %p66 = scmp.eq.s32.totalorder %s14, 1
    %p67 = por %p65, %p66
    %p68 = scmp.ne.s32.totalorder %s57, %s58
    %p69 = scmp.eq.s32.totalorder %s14, 0
    %p70 = por %p68, %p69
    %p71 = scmp.ne.s32.totalorder %s57, %s58
    %p72 = scmp.eq.s32.totalorder %s15, 1
    %p73 = por %p71, %p72
    %p75 = scmp.ne.s32.totalorder %s58, %s74
    %p76 = scmp.eq.s32.totalorder %s15, 0
    %p77 = por %p75, %p76
    %s79 = sadd.s32 %s78, 1
    %p82 = scmp.eq.s32.totalorder %s9, 1
    %p83 = scmp.ne.s32.totalorder %s78, %s80
    %p84 = scmp.eq.s32.totalorder %s9, 0
    %p85 = por %p83, %p84
    %p86 = scmp.ne.s32.totalorder %s78, %s80
    %p87 = scmp.eq.s32.totalorder %s14, 1
    %p88 = por %p86, %p87
    %p89 = scmp.ne.s32.totalorder %s80, %s81
    %p90 = scmp.eq.s32.totalorder %s14, 0
    %p91 = por %p89, %p90
    %p92 = scmp.ne.s32.totalorder %s80, %s81
    %p93 = scmp.eq.s32.totalorder %s15, 1
    %p94 = por %p92, %p93
    %p96 = scmp.ne.s32.totalorder %s81, %s95
    %p97 = scmp.eq.s32.totalorder %s15, 0
    %p98 = por %p96, %p97
    %s99 = ssub.s32 %s16, %s28
    %s100 = ssub.s32 %s17, %s24
    %s101 = sor.u32 %s99, %s100
    %p102 = scmp.eq.s32.totalorder %s101, 0
    %s104 = sadd.s32 %s103, 1
    %s105 = scalar_select %p102, %s103, %s104
    %p108 = pneg %p102
    %p109 = scmp.eq.s32.totalorder %s9, 1
    %p110 = por %p108, %p109
    %p111 = scmp.ne.s32.totalorder %s103, %s106
    %p112 = scmp.eq.s32.totalorder %s9, 0
    %p113 = por %p111, %p112
    %p114 = scmp.ne.s32.totalorder %s103, %s106
    %p115 = scmp.eq.s32.totalorder %s14, 1
    %p116 = por %p114, %p115
    %p117 = scmp.ne.s32.totalorder %s106, %s107
    %p118 = scmp.eq.s32.totalorder %s14, 0
    %p119 = por %p117, %p118
    %p120 = scmp.ne.s32.totalorder %s106, %s107
    %p121 = scmp.eq.s32.totalorder %s15, 1
    %p122 = por %p120, %p121
    %p124 = scmp.ne.s32.totalorder %s107, %s123
    %p125 = scmp.eq.s32.totalorder %s15, 0
    %p126 = por %p124, %p125
    %p127 = scmp.le.s32.totalorder 1, %s9
    %p128 = scmp.lt.s32.totalorder %s9, 3
    %p129 = pnand %p127, %p128
    %p130 = pneg %p129
    // Predicated region
    $region9: #{resblock_decoder_forward.9} parent=5 // pred_check
      _
    $region10: #{resblock_decoder_forward.9} parent=5 // pred_check_branch
      %132 = sbr.rel (%p129) target = $region12
    $region11: #{resblock_decoder_forward.9} parent=5 // pred_region
      %s133 = ssub.s32 %s9, 1
      // Predicated region
      $region13: #{resblock_decoder_forward.9} parent=11 // pred_check
        %p134 = pneg %p42
      $region14: #{resblock_decoder_forward.9} parent=11 // pred_check_branch
        %136 = sbr.rel (%p134) target = $region16
      $region15: #{resblock_decoder_forward.9} parent=11 // pred_region
        _
      $region16: #{resblock_decoder_forward.9} parent=11 // pred_fallthru
        _
      // Predicated region
      $region17: #{resblock_decoder_forward.9} parent=11 // pred_check
        %p137 = pneg %p91
      $region18: #{resblock_decoder_forward.9} parent=11 // pred_check_branch
        %139 = sbr.rel (%p137) target = $region20
      $region19: #{resblock_decoder_forward.9} parent=11 // pred_region
        _
      $region20: #{resblock_decoder_forward.9} parent=11 // pred_fallthru
        _
    $region12: #{resblock_decoder_forward.9} parent=5 // pred_fallthru
      _
    %p140 = scmp.lt.s32.totalorder %s9, 2
    // Predicated region
    $region21: #{resblock_decoder_forward.9} parent=5 // pred_check
      %p141 = pneg %p140
    $region22: #{resblock_decoder_forward.9} parent=5 // pred_check_branch
      %143 = sbr.rel (%p141) target = $region24
    $region23: #{resblock_decoder_forward.9} parent=5 // pred_region
      // Predicated region
      $region25: #{resblock_decoder_forward.9} parent=23 // pred_check
        %p144 = pneg %p64
      $region26: #{resblock_decoder_forward.9} parent=23 // pred_check_branch
        %146 = sbr.rel (%p144) target = $region28
      $region27: #{resblock_decoder_forward.9} parent=23 // pred_region
        %s147 = smul.u32 8, %s17
        %p148 = scmp.lt.s32.totalorder %s16, 1
        %s149 = scalar_select %p148, %s16, 1
        %p150 = scmp.lt.s32.totalorder %s147, 7
        %s151 = scalar_select %p150, %s147, 7
        %s152 = smul.addr %s149, 144
        %s153 = sadd.s32 %s151, %s152
        %s154 = smul.addr %s153, 4
        %s155 = scalar_lea.vmem %s1, %s154
        %s156 = smul.u32 8, %s17
      $region28: #{resblock_decoder_forward.9} parent=23 // pred_fallthru
        _
    $region24: #{resblock_decoder_forward.9} parent=5 // pred_fallthru
      _
    %p157 = scmp.le.s32.totalorder 1, %s9
    %p158 = scmp.lt.s32.totalorder %s9, 3
    %p159 = pnand %p157, %p158
    %p160 = pneg %p159
    // Predicated region
    $region29: #{resblock_decoder_forward.9} parent=5 // pred_check
      _
    $region30: #{resblock_decoder_forward.9} parent=5 // pred_check_branch
      %162 = sbr.rel (%p159) target = $region32
    $region31: #{resblock_decoder_forward.9} parent=5 // pred_region
      %s163 = ssub.s32 %s9, 1
      %p164 = pneg %p42
      %p165 = pneg %p39
      %s166 = smul.u32 8, %s19
      %p167 = scmp.lt.s32.totalorder %s18, 1
      %s168 = scalar_select %p167, %s18, 1
      %p169 = scmp.lt.s32.totalorder %s166, 7
      %s170 = scalar_select %p169, %s166, 7
      %s171 = smul.addr %s168, 144
      %s172 = sadd.s32 %s170, %s171
      %s173 = smul.addr %s172, 4
      %s174 = scalar_lea.vmem %s1, %s173
      %p175 = pneg %p70
      %p176 = pneg %p67
      %p177 = pneg %p91
      %p178 = pneg %p88
      %p179 = pneg %p119
      %p180 = pneg %p116
      %s181 = smul.u32 8, %s19
      %p182 = scmp.lt.s32.totalorder %s18, 1
      %s183 = scalar_select %p182, %s18, 1
      %p184 = scmp.lt.s32.totalorder %s181, 7
      %s185 = scalar_select %p184, %s181, 7
      %s186 = smul.addr %s183, 16
      %s187 = sadd.s32 %s185, %s186
      %s188 = smul.addr %s187, 8
      %s189 = scalar_lea.vmem %s3, %s188
      %s190 = smul.u32 8, %s19
      %p191 = scmp.lt.s32.totalorder %s18, 1
      %s192 = scalar_select %p191, %s18, 1
      %p193 = scmp.lt.s32.totalorder %s190, 7
      %s194 = scalar_select %p193, %s190, 7
      %s195 = smul.addr %s192, 144
      %s196 = sadd.s32 %s194, %s195
      %s197 = smul.addr %s196, 4
      %s198 = scalar_lea.vmem %s1, %s197
      %s199 = smul.u32 8, %s19
      %s200 = smul.u32 8, %s19
      %p201 = scmp.lt.s32.totalorder %s18, 1
      %s202 = scalar_select %p201, %s18, 1
      %p203 = scmp.lt.s32.totalorder %s200, 7
      %s204 = scalar_select %p203, %s200, 7
      %s205 = smul.addr %s202, 16
      %s206 = sadd.s32 %s204, %s205
      %s207 = smul.addr %s206, 8
      %s208 = scalar_lea.vmem %s3, %s207
      %s209 = smul.u32 8, %s19
      %v211 = vld [vmem:[%s0] sm:$0xff]
      %v212 = vld [vmem:[%s0 + $0x8] sm:$0xff]
      %v213 = vld [vmem:[%s198] sm:$0xff]
      %v214 = vld [vmem:[%s198 + $0x8] sm:$0xff]
      %v215 = vld [vmem:[%s198 + $0x10] sm:$0xff]
      %v216 = vld [vmem:[%s198 + $0x18] sm:$0xff]
      %v217 = vld [vmem:[%s198 + $0x20] sm:$0xff]
      %v218 = vld [vmem:[%s198 + $0x28] sm:$0xff]
      %v219 = vld [vmem:[%s198 + $0x30] sm:$0xff]
      %v220 = vld [vmem:[%s198 + $0x38] sm:$0xff]
      %v221 = vld [vmem:[%s198 + $0x40] sm:$0xff]
      %v222 = vld [vmem:[%s198 + $0x48] sm:$0xff]
      %v223 = vld [vmem:[%s198 + $0x50] sm:$0xff]
      %v224 = vld [vmem:[%s198 + $0x58] sm:$0xff]
      %v225 = vld [vmem:[%s198 + $0x60] sm:$0xff]
      %v226 = vld [vmem:[%s198 + $0x68] sm:$0xff]
      %v227 = vld [vmem:[%s198 + $0x70] sm:$0xff]
      %v228 = vld [vmem:[%s198 + $0x78] sm:$0xff]
      %v229 = vld [vmem:[%s198 + $0x80] sm:$0xff]
      %v230 = vld [vmem:[%s198 + $0x88] sm:$0xff]
      %v231 = vld [vmem:[%s198 + $0x90] sm:$0xff]
      %v232 = vld [vmem:[%s198 + $0x98] sm:$0xff]
      %v233 = vld [vmem:[%s198 + $0xa0] sm:$0xff]
      %v234 = vld [vmem:[%s198 + $0xa8] sm:$0xff]
      %v235 = vld [vmem:[%s198 + $0xb0] sm:$0xff]
      %v236 = vld [vmem:[%s198 + $0xb8] sm:$0xff]
      %v237 = vld [vmem:[%s198 + $0xc0] sm:$0xff]
      %v238 = vld [vmem:[%s198 + $0xc8] sm:$0xff]
      %v239 = vld [vmem:[%s198 + $0xd0] sm:$0xff]
      %v240 = vld [vmem:[%s198 + $0xd8] sm:$0xff]
      %v241 = vld [vmem:[%s198 + $0xe0] sm:$0xff]
      %v242 = vld [vmem:[%s198 + $0xe8] sm:$0xff]
      %v243 = vld [vmem:[%s198 + $0xf0] sm:$0xff]
      %v244 = vld [vmem:[%s198 + $0xf8] sm:$0xff]
      %v245 = vld [vmem:[%s198 + $0x100] sm:$0xff]
      %v246 = vld [vmem:[%s198 + $0x108] sm:$0xff]
      %v247 = vld [vmem:[%s198 + $0x110] sm:$0xff]
      %v248 = vld [vmem:[%s198 + $0x118] sm:$0xff]
      %v249 = vld [vmem:[%s198 + $0x120] sm:$0xff]
      %v250 = vld [vmem:[%s198 + $0x128] sm:$0xff]
      %v251 = vld [vmem:[%s198 + $0x130] sm:$0xff]
      %v252 = vld [vmem:[%s198 + $0x138] sm:$0xff]
      %v253 = vld [vmem:[%s198 + $0x140] sm:$0xff]
      %v254 = vld [vmem:[%s198 + $0x148] sm:$0xff]
      %v255 = vld [vmem:[%s198 + $0x150] sm:$0xff]
      %v256 = vld [vmem:[%s198 + $0x158] sm:$0xff]
      %v257 = vld [vmem:[%s198 + $0x160] sm:$0xff]
      %v258 = vld [vmem:[%s198 + $0x168] sm:$0xff]
      %v259 = vld [vmem:[%s198 + $0x170] sm:$0xff]
      %v260 = vld [vmem:[%s198 + $0x178] sm:$0xff]
      %v261 = vld [vmem:[%s198 + $0x180] sm:$0xff]
      %v262 = vld [vmem:[%s198 + $0x188] sm:$0xff]
      %v263 = vld [vmem:[%s198 + $0x190] sm:$0xff]
      %v264 = vld [vmem:[%s198 + $0x198] sm:$0xff]
      %v265 = vld [vmem:[%s198 + $0x1a0] sm:$0xff]
      %v266 = vld [vmem:[%s198 + $0x1a8] sm:$0xff]
      %v267 = vld [vmem:[%s198 + $0x1b0] sm:$0xff]
      %v268 = vld [vmem:[%s198 + $0x1b8] sm:$0xff]
      %v269 = vld [vmem:[%s198 + $0x1c0] sm:$0xff]
      %v270 = vld [vmem:[%s198 + $0x1c8] sm:$0xff]
      %v271 = vld [vmem:[%s198 + $0x1d0] sm:$0xff]
      %v272 = vld [vmem:[%s198 + $0x1d8] sm:$0xff]
      %v273 = vld [vmem:[%s198 + $0x1e0] sm:$0xff]
      %v274 = vld [vmem:[%s198 + $0x1e8] sm:$0xff]
      %v275 = vld [vmem:[%s198 + $0x1f0] sm:$0xff]
      %v276 = vld [vmem:[%s198 + $0x1f8] sm:$0xff]
      %v277 = vld [vmem:[%s198 + $0x200] sm:$0xff]
      %v278 = vld [vmem:[%s198 + $0x208] sm:$0xff]
      %v279 = vld [vmem:[%s198 + $0x210] sm:$0xff]
      %v280 = vld [vmem:[%s198 + $0x218] sm:$0xff]
      %v281 = vld [vmem:[%s198 + $0x220] sm:$0xff]
      %v282 = vld [vmem:[%s198 + $0x228] sm:$0xff]
      %v283 = vld [vmem:[%s198 + $0x230] sm:$0xff]
      %v284 = vld [vmem:[%s198 + $0x238] sm:$0xff]
      %v285 = vld [vmem:[%s2] sm:$0xff]
      %v286 = vld [vmem:[%s2 + $0x8] sm:$0xff]
      %288 = vset.pattern.permute.xlu0 0
      %289 = vperm.xlu0 %288, %v285
      %v290 = vpop.permute.xlu0 %289
      %293 = vset.pattern.permute.xlu0 0
      %294 = vperm.xlu0 %293, %v286
      %v295 = vpop.permute.xlu0 %294
      %v299 = vunpack.c.l.b16 %v211
      %v300 = vunpack.c.h.b16 %v211
      %v301 = vunpack.c.l.b16 %v212
      %v302 = vunpack.c.h.b16 %v212
      %v303 = vpack.c.b16 %v301, %v299
      %v304 = vpack.c.b16 %v302, %v300
      %v378 = vunpack.c.l.b16 %v213
      %v379 = vunpack.c.h.b16 %v213
      %v380 = vunpack.c.l.b16 %v214
      %v381 = vunpack.c.h.b16 %v214
      %v382 = vunpack.c.l.b16 %v215
      %v383 = vunpack.c.h.b16 %v215
      %v384 = vunpack.c.l.b16 %v216
      %v385 = vunpack.c.h.b16 %v216
      %v386 = vunpack.c.l.b16 %v217
      %v387 = vunpack.c.h.b16 %v217
      %v388 = vunpack.c.l.b16 %v218
      %v389 = vunpack.c.h.b16 %v218
      %v390 = vunpack.c.l.b16 %v219
      %v391 = vunpack.c.h.b16 %v219
      %v392 = vunpack.c.l.b16 %v220
      %v393 = vunpack.c.h.b16 %v220
      %v394 = vunpack.c.l.b16 %v221
      %v395 = vunpack.c.h.b16 %v221
      %v396 = vunpack.c.l.b16 %v222
      %v397 = vunpack.c.h.b16 %v222
      %v398 = vunpack.c.l.b16 %v223
      %v399 = vunpack.c.h.b16 %v223
      %v400 = vunpack.c.l.b16 %v224
      %v401 = vunpack.c.h.b16 %v224
      %v402 = vunpack.c.l.b16 %v225
      %v403 = vunpack.c.h.b16 %v225
      %v404 = vunpack.c.l.b16 %v226
      %v405 = vunpack.c.h.b16 %v226
      %v406 = vunpack.c.l.b16 %v227
      %v407 = vunpack.c.h.b16 %v227
      %v408 = vunpack.c.l.b16 %v228
      %v409 = vunpack.c.h.b16 %v228
      %v410 = vunpack.c.l.b16 %v229
      %v411 = vunpack.c.h.b16 %v229
      %v412 = vunpack.c.l.b16 %v230
      %v413 = vunpack.c.h.b16 %v230
      %v414 = vunpack.c.l.b16 %v231
      %v415 = vunpack.c.h.b16 %v231
      %v416 = vunpack.c.l.b16 %v232
      %v417 = vunpack.c.h.b16 %v232
      %v418 = vunpack.c.l.b16 %v233
      %v419 = vunpack.c.h.b16 %v233
      %v420 = vunpack.c.l.b16 %v234
      %v421 = vunpack.c.h.b16 %v234
      %v422 = vunpack.c.l.b16 %v235
      %v423 = vunpack.c.h.b16 %v235
      %v424 = vunpack.c.l.b16 %v236
      %v425 = vunpack.c.h.b16 %v236
      %v426 = vunpack.c.l.b16 %v237
      %v427 = vunpack.c.h.b16 %v237
      %v428 = vunpack.c.l.b16 %v238
      %v429 = vunpack.c.h.b16 %v238
      %v430 = vunpack.c.l.b16 %v239
      %v431 = vunpack.c.h.b16 %v239
      %v432 = vunpack.c.l.b16 %v240
      %v433 = vunpack.c.h.b16 %v240
      %v434 = vunpack.c.l.b16 %v241
      %v435 = vunpack.c.h.b16 %v241
      %v436 = vunpack.c.l.b16 %v242
      %v437 = vunpack.c.h.b16 %v242
      %v438 = vunpack.c.l.b16 %v243
      %v439 = vunpack.c.h.b16 %v243
      %v440 = vunpack.c.l.b16 %v244
      %v441 = vunpack.c.h.b16 %v244
      %v442 = vunpack.c.l.b16 %v245
      %v443 = vunpack.c.h.b16 %v245
      %v444 = vunpack.c.l.b16 %v246
      %v445 = vunpack.c.h.b16 %v246
      %v446 = vunpack.c.l.b16 %v247
      %v447 = vunpack.c.h.b16 %v247
      %v448 = vunpack.c.l.b16 %v248
      %v449 = vunpack.c.h.b16 %v248
      %v450 = vunpack.c.l.b16 %v249
      %v451 = vunpack.c.h.b16 %v249
      %v452 = vunpack.c.l.b16 %v250
      %v453 = vunpack.c.h.b16 %v250
      %v454 = vunpack.c.l.b16 %v251
      %v455 = vunpack.c.h.b16 %v251
      %v456 = vunpack.c.l.b16 %v252
      %v457 = vunpack.c.h.b16 %v252
      %v458 = vunpack.c.l.b16 %v253
      %v459 = vunpack.c.h.b16 %v253
      %v460 = vunpack.c.l.b16 %v254
      %v461 = vunpack.c.h.b16 %v254
      %v462 = vunpack.c.l.b16 %v255
      %v463 = vunpack.c.h.b16 %v255
      %v464 = vunpack.c.l.b16 %v256
      %v465 = vunpack.c.h.b16 %v256
      %v466 = vunpack.c.l.b16 %v257
      %v467 = vunpack.c.h.b16 %v257
      %v468 = vunpack.c.l.b16 %v258
      %v469 = vunpack.c.h.b16 %v258
      %v470 = vunpack.c.l.b16 %v259
      %v471 = vunpack.c.h.b16 %v259
      %v472 = vunpack.c.l.b16 %v260
      %v473 = vunpack.c.h.b16 %v260
      %v474 = vunpack.c.l.b16 %v261
      %v475 = vunpack.c.h.b16 %v261
      %v476 = vunpack.c.l.b16 %v262
      %v477 = vunpack.c.h.b16 %v262
      %v478 = vunpack.c.l.b16 %v263
      %v479 = vunpack.c.h.b16 %v263
      %v480 = vunpack.c.l.b16 %v264
      %v481 = vunpack.c.h.b16 %v264
      %v482 = vunpack.c.l.b16 %v265
      %v483 = vunpack.c.h.b16 %v265
      %v484 = vunpack.c.l.b16 %v266
      %v485 = vunpack.c.h.b16 %v266
      %v486 = vunpack.c.l.b16 %v267
      %v487 = vunpack.c.h.b16 %v267
      %v488 = vunpack.c.l.b16 %v268
      %v489 = vunpack.c.h.b16 %v268
      %v490 = vunpack.c.l.b16 %v269
      %v491 = vunpack.c.h.b16 %v269
      %v492 = vunpack.c.l.b16 %v270
      %v493 = vunpack.c.h.b16 %v270
      %v494 = vunpack.c.l.b16 %v271
      %v495 = vunpack.c.h.b16 %v271
      %v496 = vunpack.c.l.b16 %v272
      %v497 = vunpack.c.h.b16 %v272
      %v498 = vunpack.c.l.b16 %v273
      %v499 = vunpack.c.h.b16 %v273
      %v500 = vunpack.c.l.b16 %v274
      %v501 = vunpack.c.h.b16 %v274
      %v502 = vunpack.c.l.b16 %v275
      %v503 = vunpack.c.h.b16 %v275
      %v504 = vunpack.c.l.b16 %v276
      %v505 = vunpack.c.h.b16 %v276
      %v506 = vunpack.c.l.b16 %v277
      %v507 = vunpack.c.h.b16 %v277
      %v508 = vunpack.c.l.b16 %v278
      %v509 = vunpack.c.h.b16 %v278
      %v510 = vunpack.c.l.b16 %v279
      %v511 = vunpack.c.h.b16 %v279
      %v512 = vunpack.c.l.b16 %v280
      %v513 = vunpack.c.h.b16 %v280
      %v514 = vunpack.c.l.b16 %v281
      %v515 = vunpack.c.h.b16 %v281
      %v516 = vunpack.c.l.b16 %v282
      %v517 = vunpack.c.h.b16 %v282
      %v518 = vunpack.c.l.b16 %v283
      %v519 = vunpack.c.h.b16 %v283
      %v520 = vunpack.c.l.b16 %v284
      %v521 = vunpack.c.h.b16 %v284
      %v522 = vpack.c.b16 %v386, %v378
      %v523 = vpack.c.b16 %v387, %v379
      %v524 = vpack.c.b16 %v388, %v380
      %v525 = vpack.c.b16 %v389, %v381
      %v526 = vpack.c.b16 %v390, %v382
      %v527 = vpack.c.b16 %v391, %v383
      %v528 = vpack.c.b16 %v392, %v384
      %v529 = vpack.c.b16 %v393, %v385
      %v530 = vpack.c.b16 %v402, %v394
      %v531 = vpack.c.b16 %v403, %v395
      %v532 = vpack.c.b16 %v404, %v396
      %v533 = vpack.c.b16 %v405, %v397
      %v534 = vpack.c.b16 %v406, %v398
      %v535 = vpack.c.b16 %v407, %v399
      %v536 = vpack.c.b16 %v408, %v400
      %v537 = vpack.c.b16 %v409, %v401
      %v538 = vpack.c.b16 %v418, %v410
      %v539 = vpack.c.b16 %v419, %v411
      %v540 = vpack.c.b16 %v420, %v412
      %v541 = vpack.c.b16 %v421, %v413
      %v542 = vpack.c.b16 %v422, %v414
      %v543 = vpack.c.b16 %v423, %v415
      %v544 = vpack.c.b16 %v424, %v416
      %v545 = vpack.c.b16 %v425, %v417
      %v546 = vpack.c.b16 %v434, %v426
      %v547 = vpack.c.b16 %v435, %v427
      %v548 = vpack.c.b16 %v436, %v428
      %v549 = vpack.c.b16 %v437, %v429
      %v550 = vpack.c.b16 %v438, %v430
      %v551 = vpack.c.b16 %v439, %v431
      %v552 = vpack.c.b16 %v440, %v432
      %v553 = vpack.c.b16 %v441, %v433
      %v554 = vpack.c.b16 %v450, %v442
      %v555 = vpack.c.b16 %v451, %v443
      %v556 = vpack.c.b16 %v452, %v444
      %v557 = vpack.c.b16 %v453, %v445
      %v558 = vpack.c.b16 %v454, %v446
      %v559 = vpack.c.b16 %v455, %v447
      %v560 = vpack.c.b16 %v456, %v448
      %v561 = vpack.c.b16 %v457, %v449
      %v562 = vpack.c.b16 %v466, %v458
      %v563 = vpack.c.b16 %v467, %v459
      %v564 = vpack.c.b16 %v468, %v460
      %v565 = vpack.c.b16 %v469, %v461
      %v566 = vpack.c.b16 %v470, %v462
      %v567 = vpack.c.b16 %v471, %v463
      %v568 = vpack.c.b16 %v472, %v464
      %v569 = vpack.c.b16 %v473, %v465
      %v570 = vpack.c.b16 %v482, %v474
      %v571 = vpack.c.b16 %v483, %v475
      %v572 = vpack.c.b16 %v484, %v476
      %v573 = vpack.c.b16 %v485, %v477
      %v574 = vpack.c.b16 %v486, %v478
      %v575 = vpack.c.b16 %v487, %v479
      %v576 = vpack.c.b16 %v488, %v480
      %v577 = vpack.c.b16 %v489, %v481
      %v578 = vpack.c.b16 %v498, %v490
      %v579 = vpack.c.b16 %v499, %v491
      %v580 = vpack.c.b16 %v500, %v492
      %v581 = vpack.c.b16 %v501, %v493
      %v582 = vpack.c.b16 %v502, %v494
      %v583 = vpack.c.b16 %v503, %v495
      %v584 = vpack.c.b16 %v504, %v496
      %v585 = vpack.c.b16 %v505, %v497
      %v586 = vpack.c.b16 %v514, %v506
      %v587 = vpack.c.b16 %v515, %v507
      %v588 = vpack.c.b16 %v516, %v508
      %v589 = vpack.c.b16 %v517, %v509
      %v590 = vpack.c.b16 %v518, %v510
      %v591 = vpack.c.b16 %v519, %v511
      %v592 = vpack.c.b16 %v520, %v512
      %v593 = vpack.c.b16 %v521, %v513
      %vm666 = vcmask 130048
      %v668 = vsel %vm666, %v304, 0
      %670 = vmatpush.bf16.msra.mxu0 %v578
      %671 = vmatpush.bf16.msra.mxu0 %v570
      %672 = vmatpush.bf16.msra.mxu0 %v562
      %673 = vmatpush.bf16.msra.mxu0 %v554
      %674 = vmatpush.bf16.msra.mxu0 %v546
      %675 = vmatpush.bf16.msra.mxu0 %v538
      %676 = vmatpush.bf16.msra.mxu0 %v530
      %677 = vmatpush.bf16.msra.mxu0 %v522
      %678 = vmatmul.bf16.gmra.mxu0 %v303
      %v679 = vpop.f32.mrf.mxu0
      %v680 = vadd.f32 %v290, %v679
      %v681 = vpop.f32.mrf.mxu0
      %v682 = vadd.f32 %v295, %v681
      %683 = vdwg.mxu0
      %684 = vmatpush.bf16.msra.mxu0 0
      %685 = vmatpush.bf16.msra.mxu0 0
      %686 = vmatpush.bf16.msra.mxu0 0
      %687 = vmatpush.bf16.msra.mxu0 0
      %688 = vmatpush.bf16.msra.mxu0 0
      %689 = vmatpush.bf16.msra.mxu0 0
      %690 = vmatpush.bf16.msra.mxu0 0
      %691 = vmatpush.bf16.msra.mxu0 %v586
      %692 = vmatmul.bf16.gmra.mxu0 %v668
      %v693 = vpop.f32.mrf.mxu0
      %v694 = vadd.f32 %v680, %v693
      %v695 = vpop.f32.mrf.mxu0
      %v696 = vadd.f32 %v682, %v695
      %697 = vdwg.mxu0
      %698 = vmatpush.bf16.msra.mxu0 %v579
      %699 = vmatpush.bf16.msra.mxu0 %v571
      %700 = vmatpush.bf16.msra.mxu0 %v563
      %701 = vmatpush.bf16.msra.mxu0 %v555
      %702 = vmatpush.bf16.msra.mxu0 %v547
      %703 = vmatpush.bf16.msra.mxu0 %v539
      %704 = vmatpush.bf16.msra.mxu0 %v531
      %705 = vmatpush.bf16.msra.mxu0 %v523
      %706 = vmatmul.bf16.gmra.mxu0 %v303
      %v707 = vpop.f32.mrf.mxu0
      %v708 = vadd.f32 %v290, %v707
      %v709 = vpop.f32.mrf.mxu0
      %v710 = vadd.f32 %v295, %v709
      %711 = vdwg.mxu0
      %712 = vmatpush.bf16.msra.mxu0 0
      %713 = vmatpush.bf16.msra.mxu0 0
      %714 = vmatpush.bf16.msra.mxu0 0
      %715 = vmatpush.bf16.msra.mxu0 0
      %716 = vmatpush.bf16.msra.mxu0 0
      %717 = vmatpush.bf16.msra.mxu0 0
      %718 = vmatpush.bf16.msra.mxu0 0
      %719 = vmatpush.bf16.msra.mxu0 %v587
      %720 = vmatmul.bf16.gmra.mxu0 %v668
      %v721 = vpop.f32.mrf.mxu0
      %v722 = vadd.f32 %v708, %v721
      %v723 = vpop.f32.mrf.mxu0
      %v724 = vadd.f32 %v710, %v723
      %725 = vdwg.mxu0
      %726 = vmatpush.bf16.msra.mxu0 %v580
      %727 = vmatpush.bf16.msra.mxu0 %v572
      %728 = vmatpush.bf16.msra.mxu0 %v564
      %729 = vmatpush.bf16.msra.mxu0 %v556
      %730 = vmatpush.bf16.msra.mxu0 %v548
      %731 = vmatpush.bf16.msra.mxu0 %v540
      %732 = vmatpush.bf16.msra.mxu0 %v532
      %733 = vmatpush.bf16.msra.mxu0 %v524
      %734 = vmatmul.bf16.gmra.mxu0 %v303
      %v735 = vpop.f32.mrf.mxu0
      %v736 = vadd.f32 %v290, %v735
      %v737 = vpop.f32.mrf.mxu0
      %v738 = vadd.f32 %v295, %v737
      %739 = vdwg.mxu0
      %740 = vmatpush.bf16.msra.mxu0 0
      %741 = vmatpush.bf16.msra.mxu0 0
      %742 = vmatpush.bf16.msra.mxu0 0
      %743 = vmatpush.bf16.msra.mxu0 0
      %744 = vmatpush.bf16.msra.mxu0 0
      %745 = vmatpush.bf16.msra.mxu0 0
      %746 = vmatpush.bf16.msra.mxu0 0
      %747 = vmatpush.bf16.msra.mxu0 %v588
      %748 = vmatmul.bf16.gmra.mxu0 %v668
      %v749 = vpop.f32.mrf.mxu0
      %v750 = vadd.f32 %v736, %v749
      %v751 = vpop.f32.mrf.mxu0
      %v752 = vadd.f32 %v738, %v751
      %753 = vdwg.mxu0
      %754 = vmatpush.bf16.msra.mxu0 %v581
      %755 = vmatpush.bf16.msra.mxu0 %v573
      %756 = vmatpush.bf16.msra.mxu0 %v565
      %757 = vmatpush.bf16.msra.mxu0 %v557
      %758 = vmatpush.bf16.msra.mxu0 %v549
      %759 = vmatpush.bf16.msra.mxu0 %v541
      %760 = vmatpush.bf16.msra.mxu0 %v533
      %761 = vmatpush.bf16.msra.mxu0 %v525
      %762 = vmatmul.bf16.gmra.mxu0 %v303
      %v763 = vpop.f32.mrf.mxu0
      %v764 = vadd.f32 %v290, %v763
      %v765 = vpop.f32.mrf.mxu0
      %v766 = vadd.f32 %v295, %v765
      %767 = vdwg.mxu0
      %768 = vmatpush.bf16.msra.mxu0 0
      %769 = vmatpush.bf16.msra.mxu0 0
      %770 = vmatpush.bf16.msra.mxu0 0
      %771 = vmatpush.bf16.msra.mxu0 0
      %772 = vmatpush.bf16.msra.mxu0 0
      %773 = vmatpush.bf16.msra.mxu0 0
      %774 = vmatpush.bf16.msra.mxu0 0
      %775 = vmatpush.bf16.msra.mxu0 %v589
      %776 = vmatmul.bf16.gmra.mxu0 %v668
      %v777 = vpop.f32.mrf.mxu0
      %v778 = vadd.f32 %v764, %v777
      %v779 = vpop.f32.mrf.mxu0
      %v780 = vadd.f32 %v766, %v779
      %781 = vdwg.mxu0
      %782 = vmatpush.bf16.msra.mxu0 %v582
      %783 = vmatpush.bf16.msra.mxu0 %v574
      %784 = vmatpush.bf16.msra.mxu0 %v566
      %785 = vmatpush.bf16.msra.mxu0 %v558
      %786 = vmatpush.bf16.msra.mxu0 %v550
      %787 = vmatpush.bf16.msra.mxu0 %v542
      %788 = vmatpush.bf16.msra.mxu0 %v534
      %789 = vmatpush.bf16.msra.mxu0 %v526
      %790 = vmatmul.bf16.gmra.mxu0 %v303
      %v791 = vpop.f32.mrf.mxu0
      %v792 = vadd.f32 %v290, %v791
      %v793 = vpop.f32.mrf.mxu0
      %v794 = vadd.f32 %v295, %v793
      %795 = vdwg.mxu0
      %796 = vmatpush.bf16.msra.mxu0 0
      %797 = vmatpush.bf16.msra.mxu0 0
      %798 = vmatpush.bf16.msra.mxu0 0
      %799 = vmatpush.bf16.msra.mxu0 0
      %800 = vmatpush.bf16.msra.mxu0 0
      %801 = vmatpush.bf16.msra.mxu0 0
      %802 = vmatpush.bf16.msra.mxu0 0
      %803 = vmatpush.bf16.msra.mxu0 %v590
      %804 = vmatmul.bf16.gmra.mxu0 %v668
      %v805 = vpop.f32.mrf.mxu0
      %v806 = vadd.f32 %v792, %v805
      %v807 = vpop.f32.mrf.mxu0
      %v808 = vadd.f32 %v794, %v807
      %809 = vdwg.mxu0
      %810 = vmatpush.bf16.msra.mxu0 %v583
      %811 = vmatpush.bf16.msra.mxu0 %v575
      %812 = vmatpush.bf16.msra.mxu0 %v567
      %813 = vmatpush.bf16.msra.mxu0 %v559
      %814 = vmatpush.bf16.msra.mxu0 %v551
      %815 = vmatpush.bf16.msra.mxu0 %v543
      %816 = vmatpush.bf16.msra.mxu0 %v535
      %817 = vmatpush.bf16.msra.mxu0 %v527
      %818 = vmatmul.bf16.gmra.mxu0 %v303
      %v819 = vpop.f32.mrf.mxu0
      %v820 = vadd.f32 %v290, %v819
      %v821 = vpop.f32.mrf.mxu0
      %v822 = vadd.f32 %v295, %v821
      %823 = vdwg.mxu0
      %824 = vmatpush.bf16.msra.mxu0 0
      %825 = vmatpush.bf16.msra.mxu0 0
      %826 = vmatpush.bf16.msra.mxu0 0
      %827 = vmatpush.bf16.msra.mxu0 0
      %828 = vmatpush.bf16.msra.mxu0 0
      %829 = vmatpush.bf16.msra.mxu0 0
      %830 = vmatpush.bf16.msra.mxu0 0
      %831 = vmatpush.bf16.msra.mxu0 %v591
      %832 = vmatmul.bf16.gmra.mxu0 %v668
      %v833 = vpop.f32.mrf.mxu0
      %v834 = vadd.f32 %v820, %v833
      %v835 = vpop.f32.mrf.mxu0
      %v836 = vadd.f32 %v822, %v835
      %837 = vdwg.mxu0
      %838 = vmatpush.bf16.msra.mxu0 %v584
      %839 = vmatpush.bf16.msra.mxu0 %v576
      %840 = vmatpush.bf16.msra.mxu0 %v568
      %841 = vmatpush.bf16.msra.mxu0 %v560
      %842 = vmatpush.bf16.msra.mxu0 %v552
      %843 = vmatpush.bf16.msra.mxu0 %v544
      %844 = vmatpush.bf16.msra.mxu0 %v536
      %845 = vmatpush.bf16.msra.mxu0 %v528
      %846 = vmatmul.bf16.gmra.mxu0 %v303
      %v847 = vpop.f32.mrf.mxu0
      %v848 = vadd.f32 %v290, %v847
      %v849 = vpop.f32.mrf.mxu0
      %v850 = vadd.f32 %v295, %v849
      %851 = vdwg.mxu0
      %852 = vmatpush.bf16.msra.mxu0 0
      %853 = vmatpush.bf16.msra.mxu0 0
      %854 = vmatpush.bf16.msra.mxu0 0
      %855 = vmatpush.bf16.msra.mxu0 0
      %856 = vmatpush.bf16.msra.mxu0 0
      %857 = vmatpush.bf16.msra.mxu0 0
      %858 = vmatpush.bf16.msra.mxu0 0
      %859 = vmatpush.bf16.msra.mxu0 %v592
      %860 = vmatmul.bf16.gmra.mxu0 %v668
      %v861 = vpop.f32.mrf.mxu0
      %v862 = vadd.f32 %v848, %v861
      %v863 = vpop.f32.mrf.mxu0
      %v864 = vadd.f32 %v850, %v863
      %865 = vdwg.mxu0
      %866 = vmatpush.bf16.msra.mxu0 %v585
      %867 = vmatpush.bf16.msra.mxu0 %v577
      %868 = vmatpush.bf16.msra.mxu0 %v569
      %869 = vmatpush.bf16.msra.mxu0 %v561
      %870 = vmatpush.bf16.msra.mxu0 %v553
      %871 = vmatpush.bf16.msra.mxu0 %v545
      %872 = vmatpush.bf16.msra.mxu0 %v537
      %873 = vmatpush.bf16.msra.mxu0 %v529
      %874 = vmatmul.bf16.gmra.mxu0 %v303
      %v875 = vpop.f32.mrf.mxu0
      %v876 = vadd.f32 %v290, %v875
      %v877 = vpop.f32.mrf.mxu0
      %v878 = vadd.f32 %v295, %v877
      %879 = vdwg.mxu0
      %880 = vmatpush.bf16.msra.mxu0 0
      %881 = vmatpush.bf16.msra.mxu0 0
      %882 = vmatpush.bf16.msra.mxu0 0
      %883 = vmatpush.bf16.msra.mxu0 0
      %884 = vmatpush.bf16.msra.mxu0 0
      %885 = vmatpush.bf16.msra.mxu0 0
      %886 = vmatpush.bf16.msra.mxu0 0
      %887 = vmatpush.bf16.msra.mxu0 %v593
      %888 = vmatmul.bf16.gmra.mxu0 %v668
      %v889 = vpop.f32.mrf.mxu0
      %v890 = vadd.f32 %v876, %v889
      %v891 = vpop.f32.mrf.mxu0
      %v892 = vadd.f32 %v878, %v891
      %893 = vdwg.mxu0
      %894 = vst [vmem:[%s208] sm:$0xff] %v694
      %895 = vst [vmem:[%s208 + $0x8] sm:$0xff] %v722
      %896 = vst [vmem:[%s208 + $0x10] sm:$0xff] %v750
      %897 = vst [vmem:[%s208 + $0x18] sm:$0xff] %v778
      %898 = vst [vmem:[%s208 + $0x20] sm:$0xff] %v806
      %899 = vst [vmem:[%s208 + $0x28] sm:$0xff] %v834
      %900 = vst [vmem:[%s208 + $0x30] sm:$0xff] %v862
      %901 = vst [vmem:[%s208 + $0x38] sm:$0xff] %v890
      %902 = vst [vmem:[%s208 + $0x40] sm:$0xff] %v696
      %903 = vst [vmem:[%s208 + $0x48] sm:$0xff] %v724
      %904 = vst [vmem:[%s208 + $0x50] sm:$0xff] %v752
      %905 = vst [vmem:[%s208 + $0x58] sm:$0xff] %v780
      %906 = vst [vmem:[%s208 + $0x60] sm:$0xff] %v808
      %907 = vst [vmem:[%s208 + $0x68] sm:$0xff] %v836
      %908 = vst [vmem:[%s208 + $0x70] sm:$0xff] %v864
      %909 = vst [vmem:[%s208 + $0x78] sm:$0xff] %v892
      %s910 = smul.u32 8, %s19
      %p911 = scmp.lt.s32.totalorder %s18, 1
      %s912 = scalar_select %p911, %s18, 1
      %p913 = scmp.lt.s32.totalorder %s910, 7
      %s914 = scalar_select %p913, %s910, 7
      %s915 = smul.addr %s912, 16
      %s916 = sadd.s32 %s914, %s915
      %s917 = smul.addr %s916, 8
      %s918 = scalar_lea.vmem %s3, %s917
      // Predicated region
      $region33: #{resblock_decoder_forward.9} parent=31 // pred_check
        %p919 = pneg %p116
      $region34: #{resblock_decoder_forward.9} parent=31 // pred_check_branch
        %921 = sbr.rel (%p919) target = $region36
      $region35: #{resblock_decoder_forward.9} parent=31 // pred_region
        %s922 = smul.u32 8, %s19
      $region36: #{resblock_decoder_forward.9} parent=31 // pred_fallthru
        _
    $region32: #{resblock_decoder_forward.9} parent=5 // pred_fallthru
      _
    %p923 = scmp.le.s32.totalorder 2, %s9
    // Predicated region
    $region37: #{resblock_decoder_forward.9} parent=5 // pred_check
      %p924 = pneg %p923
    $region38: #{resblock_decoder_forward.9} parent=5 // pred_check_branch
      %926 = sbr.rel (%p924) target = $region40
    $region39: #{resblock_decoder_forward.9} parent=5 // pred_region
      %s927 = ssub.s32 %s9, 2
      // Predicated region
      $region41: #{resblock_decoder_forward.9} parent=39 // pred_check
        %p928 = pneg %p122
      $region42: #{resblock_decoder_forward.9} parent=39 // pred_check_branch
        %930 = sbr.rel (%p928) target = $region44
      $region43: #{resblock_decoder_forward.9} parent=39 // pred_region
        %s931 = smul.u32 8, %s21
        %p932 = scmp.lt.s32.totalorder %s20, 1
        %s933 = scalar_select %p932, %s20, 1
        %p934 = scmp.lt.s32.totalorder %s931, 7
        %s935 = scalar_select %p934, %s931, 7
        %s936 = smul.addr %s933, 16
        %s937 = sadd.s32 %s935, %s936
        %s938 = smul.addr %s937, 8
        %s939 = scalar_lea.vmem %s3, %s938
      $region44: #{resblock_decoder_forward.9} parent=39 // pred_fallthru
        _
    $region40: #{resblock_decoder_forward.9} parent=5 // pred_fallthru
      _
  $region6: #{resblock_decoder_forward.9} parent=0 // loop_footer
    %s13 = sadd.s32 1, %s9
  $region7: #{resblock_decoder_forward.9} parent=0 // loop_footer_branch
    %8 = sbr.rel target = $region3
  $region8: #{resblock_decoder_forward.9} parent=0 // loop_exit
    _

// kernel: resblock_decoder_forward.11
$region0: #{resblock_decoder_forward.11}
  #allocation0 [shape = 'u32[]', space=smem, size = 0x4, offset = 0x4, fixed_abs, tag = 'smem constant byte address 0x4 - core index']
  #allocation1 [shape = 'u32[72,128]{1,0:T(1,128)}', space=vmem, size = 0x9000, scoped, tag = 'internal scratch']
  %s0 = inlined_call_operand.vmem [shape: bf16[16,152], index: 0, kind: input, shape index: {}]
  %s1 = inlined_call_operand.vmem [shape: bf16[2,152,1024], index: 1, kind: input, shape index: {}]
  %s2 = inlined_call_operand.vmem [shape: f32[16,1], index: 2, kind: input, shape index: {}]
  %s3 = inlined_call_operand.vmem [shape: f32[2,16,1024], index: 3, kind: output, shape index: {}]
  %s4 = sld [smem:[#allocation0]]
  $region45: #{resblock_decoder_forward.11} parent=0
    _
  %s6 = ssub.s32 1, %s4
  %s7 = scalar_select 0, %s6, %s4
  loop: start=0, step=1, limit=4
  $region2: #{resblock_decoder_forward.11} parent=0 // loop_pre_header
    _
  $region3: #{resblock_decoder_forward.11} parent=0 // loop_header
    %s9 = sphi 0, %s13
    %p10 = scmp.ge.s32.totalorder %s9, 4
    %s16 = sphi 0, %s28
    %s17 = sphi 0, %s24
    %s18 = sphi 0, %s16
    %s19 = sphi 0, %s17
    %s20 = sphi 0, %s18
    %s21 = sphi 0, %s19
    %s29 = sphi 0, %s29
    %s31 = sphi 0, %s29
    %s32 = sphi 0, %s31
    %s46 = sphi 0, %s32
    %s54 = sphi 0, %s56
    %s57 = sphi 0, %s54
    %s58 = sphi 0, %s57
    %s74 = sphi 0, %s58
    %s78 = sphi 0, %s78
    %s80 = sphi 0, %s78
    %s81 = sphi 0, %s80
    %s95 = sphi 0, %s81
    %s103 = sphi 0, %s105
    %s106 = sphi 0, %s103
    %s107 = sphi 0, %s106
    %s123 = sphi 0, %s107
  $region4: #{resblock_decoder_forward.11} parent=0 // loop_header_branch
    %12 = sbr.rel (%p10) target = $region8
  $region5: #{resblock_decoder_forward.11} parent=0 // loop_body
    %s14 = ssub.s32 %s9, 1
    %s15 = ssub.s32 %s9, 2
    %s22 = sadd.s32 1, %s17
    %p23 = scmp.ge.s32.totalorder %s22, 1
    %s24 = scalar_select %p23, 0, %s22
    %s25 = sadd.s32 1, %s16
    %s26 = scalar_select %p23, %s25, %s16
    %p27 = scmp.ge.s32.totalorder %s26, 2
    %s28 = scalar_select %p27, 0, %s26
    %s30 = sadd.s32 %s29, 1
    %p33 = scmp.eq.s32.totalorder %s9, 1
    %p34 = scmp.ne.s32.totalorder %s29, %s31
    %p35 = scmp.eq.s32.totalorder %s9, 0
    %p36 = por %p34, %p35
    %p37 = scmp.ne.s32.totalorder %s29, %s31
    %p38 = scmp.eq.s32.totalorder %s14, 1
    %p39 = por %p37, %p38
    %p40 = scmp.ne.s32.totalorder %s31, %s32
    %p41 = scmp.eq.s32.totalorder %s14, 0
    %p42 = por %p40, %p41
    %p43 = scmp.ne.s32.totalorder %s31, %s32
    %p44 = scmp.eq.s32.totalorder %s15, 1
    %p45 = por %p43, %p44
    %p47 = scmp.ne.s32.totalorder %s32, %s46
    %p48 = scmp.eq.s32.totalorder %s15, 0
    %p49 = por %p47, %p48
    %s50 = ssub.s32 %s16, %s28
    %s51 = ssub.s32 %s17, %s24
    %s52 = sor.u32 %s50, %s51
    %p53 = scmp.eq.s32.totalorder %s52, 0
    %s55 = sadd.s32 %s54, 1
    %s56 = scalar_select %p53, %s54, %s55
    %p59 = pneg %p53
    %p60 = scmp.eq.s32.totalorder %s9, 1
    %p61 = por %p59, %p60
    %p62 = scmp.ne.s32.totalorder %s54, %s57
    %p63 = scmp.eq.s32.totalorder %s9, 0
    %p64 = por %p62, %p63
    %p65 = scmp.ne.s32.totalorder %s54, %s57
    %p66 = scmp.eq.s32.totalorder %s14, 1
    %p67 = por %p65, %p66
    %p68 = scmp.ne.s32.totalorder %s57, %s58
    %p69 = scmp.eq.s32.totalorder %s14, 0
    %p70 = por %p68, %p69
    %p71 = scmp.ne.s32.totalorder %s57, %s58
    %p72 = scmp.eq.s32.totalorder %s15, 1
    %p73 = por %p71, %p72
    %p75 = scmp.ne.s32.totalorder %s58, %s74
    %p76 = scmp.eq.s32.totalorder %s15, 0
    %p77 = por %p75, %p76
    %s79 = sadd.s32 %s78, 1
    %p82 = scmp.eq.s32.totalorder %s9, 1
    %p83 = scmp.ne.s32.totalorder %s78, %s80
    %p84 = scmp.eq.s32.totalorder %s9, 0
    %p85 = por %p83, %p84
    %p86 = scmp.ne.s32.totalorder %s78, %s80
    %p87 = scmp.eq.s32.totalorder %s14, 1
    %p88 = por %p86, %p87
    %p89 = scmp.ne.s32.totalorder %s80, %s81
    %p90 = scmp.eq.s32.totalorder %s14, 0
    %p91 = por %p89, %p90
    %p92 = scmp.ne.s32.totalorder %s80, %s81
    %p93 = scmp.eq.s32.totalorder %s15, 1
    %p94 = por %p92, %p93
    %p96 = scmp.ne.s32.totalorder %s81, %s95
    %p97 = scmp.eq.s32.totalorder %s15, 0
    %p98 = por %p96, %p97
    %s99 = ssub.s32 %s16, %s28
    %s100 = ssub.s32 %s17, %s24
    %s101 = sor.u32 %s99, %s100
    %p102 = scmp.eq.s32.totalorder %s101, 0
    %s104 = sadd.s32 %s103, 1
    %s105 = scalar_select %p102, %s103, %s104
    %p108 = pneg %p102
    %p109 = scmp.eq.s32.totalorder %s9, 1
    %p110 = por %p108, %p109
    %p111 = scmp.ne.s32.totalorder %s103, %s106
    %p112 = scmp.eq.s32.totalorder %s9, 0
    %p113 = por %p111, %p112
    %p114 = scmp.ne.s32.totalorder %s103, %s106
    %p115 = scmp.eq.s32.totalorder %s14, 1
    %p116 = por %p114, %p115
    %p117 = scmp.ne.s32.totalorder %s106, %s107
    %p118 = scmp.eq.s32.totalorder %s14, 0
    %p119 = por %p117, %p118
    %p120 = scmp.ne.s32.totalorder %s106, %s107
    %p121 = scmp.eq.s32.totalorder %s15, 1
    %p122 = por %p120, %p121
    %p124 = scmp.ne.s32.totalorder %s107, %s123
    %p125 = scmp.eq.s32.totalorder %s15, 0
    %p126 = por %p124, %p125
    %p127 = scmp.le.s32.totalorder 1, %s9
    %p128 = scmp.lt.s32.totalorder %s9, 3
    %p129 = pnand %p127, %p128
    %p130 = pneg %p129
    // Predicated region
    $region9: #{resblock_decoder_forward.11} parent=5 // pred_check
      _
    $region10: #{resblock_decoder_forward.11} parent=5 // pred_check_branch
      %132 = sbr.rel (%p129) target = $region12
    $region11: #{resblock_decoder_forward.11} parent=5 // pred_region
      %s133 = ssub.s32 %s9, 1
      // Predicated region
      $region13: #{resblock_decoder_forward.11} parent=11 // pred_check
        %p134 = pneg %p42
      $region14: #{resblock_decoder_forward.11} parent=11 // pred_check_branch
        %136 = sbr.rel (%p134) target = $region16
      $region15: #{resblock_decoder_forward.11} parent=11 // pred_region
        _
      $region16: #{resblock_decoder_forward.11} parent=11 // pred_fallthru
        _
      // Predicated region
      $region17: #{resblock_decoder_forward.11} parent=11 // pred_check
        %p137 = pneg %p91
      $region18: #{resblock_decoder_forward.11} parent=11 // pred_check_branch
        %139 = sbr.rel (%p137) target = $region20
      $region19: #{resblock_decoder_forward.11} parent=11 // pred_region
        _
      $region20: #{resblock_decoder_forward.11} parent=11 // pred_fallthru
        _
    $region12: #{resblock_decoder_forward.11} parent=5 // pred_fallthru
      _
    %p140 = scmp.lt.s32.totalorder %s9, 2
    // Predicated region
    $region21: #{resblock_decoder_forward.11} parent=5 // pred_check
      %p141 = pneg %p140
    $region22: #{resblock_decoder_forward.11} parent=5 // pred_check_branch
      %143 = sbr.rel (%p141) target = $region24
    $region23: #{resblock_decoder_forward.11} parent=5 // pred_region
      // Predicated region
      $region25: #{resblock_decoder_forward.11} parent=23 // pred_check
        %p144 = pneg %p64
      $region26: #{resblock_decoder_forward.11} parent=23 // pred_check_branch
        %146 = sbr.rel (%p144) target = $region28
      $region27: #{resblock_decoder_forward.11} parent=23 // pred_region
        %s147 = smul.u32 8, %s17
        %p148 = scmp.lt.s32.totalorder %s16, 1
        %s149 = scalar_select %p148, %s16, 1
        %p150 = scmp.lt.s32.totalorder %s147, 7
        %s151 = scalar_select %p150, %s147, 7
        %s152 = smul.addr %s149, 152
        %s153 = sadd.s32 %s151, %s152
        %s154 = smul.addr %s153, 4
        %s155 = scalar_lea.vmem %s1, %s154
        %s156 = smul.u32 8, %s17
      $region28: #{resblock_decoder_forward.11} parent=23 // pred_fallthru
        _
    $region24: #{resblock_decoder_forward.11} parent=5 // pred_fallthru
      _
    %p157 = scmp.le.s32.totalorder 1, %s9
    %p158 = scmp.lt.s32.totalorder %s9, 3
    %p159 = pnand %p157, %p158
    %p160 = pneg %p159
    // Predicated region
    $region29: #{resblock_decoder_forward.11} parent=5 // pred_check
      _
    $region30: #{resblock_decoder_forward.11} parent=5 // pred_check_branch
      %162 = sbr.rel (%p159) target = $region32
    $region31: #{resblock_decoder_forward.11} parent=5 // pred_region
      %s163 = ssub.s32 %s9, 1
      %p164 = pneg %p42
      %p165 = pneg %p39
      %s166 = smul.u32 8, %s19
      %p167 = scmp.lt.s32.totalorder %s18, 1
      %s168 = scalar_select %p167, %s18, 1
      %p169 = scmp.lt.s32.totalorder %s166, 7
      %s170 = scalar_select %p169, %s166, 7
      %s171 = smul.addr %s168, 152
      %s172 = sadd.s32 %s170, %s171
      %s173 = smul.addr %s172, 4
      %s174 = scalar_lea.vmem %s1, %s173
      %p175 = pneg %p70
      %p176 = pneg %p67
      %p177 = pneg %p91
      %p178 = pneg %p88
      %p179 = pneg %p119
      %p180 = pneg %p116
      %s181 = smul.u32 8, %s19
      %p182 = scmp.lt.s32.totalorder %s18, 1
      %s183 = scalar_select %p182, %s18, 1
      %p184 = scmp.lt.s32.totalorder %s181, 7
      %s185 = scalar_select %p184, %s181, 7
      %s186 = smul.addr %s183, 16
      %s187 = sadd.s32 %s185, %s186
      %s188 = smul.addr %s187, 8
      %s189 = scalar_lea.vmem %s3, %s188
      %s190 = smul.u32 8, %s19
      %p191 = scmp.lt.s32.totalorder %s18, 1
      %s192 = scalar_select %p191, %s18, 1
      %p193 = scmp.lt.s32.totalorder %s190, 7
      %s194 = scalar_select %p193, %s190, 7
      %s195 = smul.addr %s192, 152
      %s196 = sadd.s32 %s194, %s195
      %s197 = smul.addr %s196, 4
      %s198 = scalar_lea.vmem %s1, %s197
      %s199 = smul.u32 8, %s19
      %s200 = smul.u32 8, %s19
      %p201 = scmp.lt.s32.totalorder %s18, 1
      %s202 = scalar_select %p201, %s18, 1
      %p203 = scmp.lt.s32.totalorder %s200, 7
      %s204 = scalar_select %p203, %s200, 7
      %s205 = smul.addr %s202, 16
      %s206 = sadd.s32 %s204, %s205
      %s207 = smul.addr %s206, 8
      %s208 = scalar_lea.vmem %s3, %s207
      %s209 = smul.u32 8, %s19
      %v211 = vld [vmem:[%s0] sm:$0xff]
      %v212 = vld [vmem:[%s0 + $0x8] sm:$0xff]
      %v213 = vld [vmem:[%s198] sm:$0xff]
      %v214 = vld [vmem:[%s198 + $0x8] sm:$0xff]
      %v215 = vld [vmem:[%s198 + $0x10] sm:$0xff]
      %v216 = vld [vmem:[%s198 + $0x18] sm:$0xff]
      %v217 = vld [vmem:[%s198 + $0x20] sm:$0xff]
      %v218 = vld [vmem:[%s198 + $0x28] sm:$0xff]
      %v219 = vld [vmem:[%s198 + $0x30] sm:$0xff]
      %v220 = vld [vmem:[%s198 + $0x38] sm:$0xff]
      %v221 = vld [vmem:[%s198 + $0x40] sm:$0xff]
      %v222 = vld [vmem:[%s198 + $0x48] sm:$0xff]
      %v223 = vld [vmem:[%s198 + $0x50] sm:$0xff]
      %v224 = vld [vmem:[%s198 + $0x58] sm:$0xff]
      %v225 = vld [vmem:[%s198 + $0x60] sm:$0xff]
      %v226 = vld [vmem:[%s198 + $0x68] sm:$0xff]
      %v227 = vld [vmem:[%s198 + $0x70] sm:$0xff]
      %v228 = vld [vmem:[%s198 + $0x78] sm:$0xff]
      %v229 = vld [vmem:[%s198 + $0x80] sm:$0xff]
      %v230 = vld [vmem:[%s198 + $0x88] sm:$0xff]
      %v231 = vld [vmem:[%s198 + $0x90] sm:$0xff]
      %v232 = vld [vmem:[%s198 + $0x98] sm:$0xff]
      %v233 = vld [vmem:[%s198 + $0xa0] sm:$0xff]
      %v234 = vld [vmem:[%s198 + $0xa8] sm:$0xff]
      %v235 = vld [vmem:[%s198 + $0xb0] sm:$0xff]
      %v236 = vld [vmem:[%s198 + $0xb8] sm:$0xff]
      %v237 = vld [vmem:[%s198 + $0xc0] sm:$0xff]
      %v238 = vld [vmem:[%s198 + $0xc8] sm:$0xff]
      %v239 = vld [vmem:[%s198 + $0xd0] sm:$0xff]
      %v240 = vld [vmem:[%s198 + $0xd8] sm:$0xff]
      %v241 = vld [vmem:[%s198 + $0xe0] sm:$0xff]
      %v242 = vld [vmem:[%s198 + $0xe8] sm:$0xff]
      %v243 = vld [vmem:[%s198 + $0xf0] sm:$0xff]
      %v244 = vld [vmem:[%s198 + $0xf8] sm:$0xff]
      %v245 = vld [vmem:[%s198 + $0x100] sm:$0xff]
      %v246 = vld [vmem:[%s198 + $0x108] sm:$0xff]
      %v247 = vld [vmem:[%s198 + $0x110] sm:$0xff]
      %v248 = vld [vmem:[%s198 + $0x118] sm:$0xff]
      %v249 = vld [vmem:[%s198 + $0x120] sm:$0xff]
      %v250 = vld [vmem:[%s198 + $0x128] sm:$0xff]
      %v251 = vld [vmem:[%s198 + $0x130] sm:$0xff]
      %v252 = vld [vmem:[%s198 + $0x138] sm:$0xff]
      %v253 = vld [vmem:[%s198 + $0x140] sm:$0xff]
      %v254 = vld [vmem:[%s198 + $0x148] sm:$0xff]
      %v255 = vld [vmem:[%s198 + $0x150] sm:$0xff]
      %v256 = vld [vmem:[%s198 + $0x158] sm:$0xff]
      %v257 = vld [vmem:[%s198 + $0x160] sm:$0xff]
      %v258 = vld [vmem:[%s198 + $0x168] sm:$0xff]
      %v259 = vld [vmem:[%s198 + $0x170] sm:$0xff]
      %v260 = vld [vmem:[%s198 + $0x178] sm:$0xff]
      %v261 = vld [vmem:[%s198 + $0x180] sm:$0xff]
      %v262 = vld [vmem:[%s198 + $0x188] sm:$0xff]
      %v263 = vld [vmem:[%s198 + $0x190] sm:$0xff]
      %v264 = vld [vmem:[%s198 + $0x198] sm:$0xff]
      %v265 = vld [vmem:[%s198 + $0x1a0] sm:$0xff]
      %v266 = vld [vmem:[%s198 + $0x1a8] sm:$0xff]
      %v267 = vld [vmem:[%s198 + $0x1b0] sm:$0xff]
      %v268 = vld [vmem:[%s198 + $0x1b8] sm:$0xff]
      %v269 = vld [vmem:[%s198 + $0x1c0] sm:$0xff]
      %v270 = vld [vmem:[%s198 + $0x1c8] sm:$0xff]
      %v271 = vld [vmem:[%s198 + $0x1d0] sm:$0xff]
      %v272 = vld [vmem:[%s198 + $0x1d8] sm:$0xff]
      %v273 = vld [vmem:[%s198 + $0x1e0] sm:$0xff]
      %v274 = vld [vmem:[%s198 + $0x1e8] sm:$0xff]
      %v275 = vld [vmem:[%s198 + $0x1f0] sm:$0xff]
      %v276 = vld [vmem:[%s198 + $0x1f8] sm:$0xff]
      %v277 = vld [vmem:[%s198 + $0x200] sm:$0xff]
      %v278 = vld [vmem:[%s198 + $0x208] sm:$0xff]
      %v279 = vld [vmem:[%s198 + $0x210] sm:$0xff]
      %v280 = vld [vmem:[%s198 + $0x218] sm:$0xff]
      %v281 = vld [vmem:[%s198 + $0x220] sm:$0xff]
      %v282 = vld [vmem:[%s198 + $0x228] sm:$0xff]
      %v283 = vld [vmem:[%s198 + $0x230] sm:$0xff]
      %v284 = vld [vmem:[%s198 + $0x238] sm:$0xff]
      %v285 = vld [vmem:[%s198 + $0x240] sm:$0xff]
      %v286 = vld [vmem:[%s198 + $0x248] sm:$0xff]
      %v287 = vld [vmem:[%s198 + $0x250] sm:$0xff]
      %v288 = vld [vmem:[%s198 + $0x258] sm:$0xff]
      %v289 = vld [vmem:[%s2] sm:$0xff]
      %v290 = vld [vmem:[%s2 + $0x8] sm:$0xff]
      %292 = vset.pattern.permute.xlu0 0
      %293 = vperm.xlu0 %292, %v289
      %v294 = vpop.permute.xlu0 %293
      %297 = vset.pattern.permute.xlu0 0
      %298 = vperm.xlu0 %297, %v290
      %v299 = vpop.permute.xlu0 %298
      %v303 = vunpack.c.l.b16 %v211
      %v304 = vunpack.c.h.b16 %v211
      %v305 = vunpack.c.l.b16 %v212
      %v306 = vunpack.c.h.b16 %v212
      %v307 = vpack.c.b16 %v305, %v303
      %v308 = vpack.c.b16 %v306, %v304
      %v386 = vunpack.c.l.b16 %v213
      %v387 = vunpack.c.h.b16 %v213
      %v388 = vunpack.c.l.b16 %v214
      %v389 = vunpack.c.h.b16 %v214
      %v390 = vunpack.c.l.b16 %v215
      %v391 = vunpack.c.h.b16 %v215
      %v392 = vunpack.c.l.b16 %v216
      %v393 = vunpack.c.h.b16 %v216
      %v394 = vunpack.c.l.b16 %v217
      %v395 = vunpack.c.h.b16 %v217
      %v396 = vunpack.c.l.b16 %v218
      %v397 = vunpack.c.h.b16 %v218
      %v398 = vunpack.c.l.b16 %v219
      %v399 = vunpack.c.h.b16 %v219
      %v400 = vunpack.c.l.b16 %v220
      %v401 = vunpack.c.h.b16 %v220
      %v402 = vunpack.c.l.b16 %v221
      %v403 = vunpack.c.h.b16 %v221
      %v404 = vunpack.c.l.b16 %v222
      %v405 = vunpack.c.h.b16 %v222
      %v406 = vunpack.c.l.b16 %v223
      %v407 = vunpack.c.h.b16 %v223
      %v408 = vunpack.c.l.b16 %v224
      %v409 = vunpack.c.h.b16 %v224
      %v410 = vunpack.c.l.b16 %v225
      %v411 = vunpack.c.h.b16 %v225
      %v412 = vunpack.c.l.b16 %v226
      %v413 = vunpack.c.h.b16 %v226
      %v414 = vunpack.c.l.b16 %v227
      %v415 = vunpack.c.h.b16 %v227
      %v416 = vunpack.c.l.b16 %v228
      %v417 = vunpack.c.h.b16 %v228
      %v418 = vunpack.c.l.b16 %v229
      %v419 = vunpack.c.h.b16 %v229
      %v420 = vunpack.c.l.b16 %v230
      %v421 = vunpack.c.h.b16 %v230
      %v422 = vunpack.c.l.b16 %v231
      %v423 = vunpack.c.h.b16 %v231
      %v424 = vunpack.c.l.b16 %v232
      %v425 = vunpack.c.h.b16 %v232
      %v426 = vunpack.c.l.b16 %v233
      %v427 = vunpack.c.h.b16 %v233
      %v428 = vunpack.c.l.b16 %v234
      %v429 = vunpack.c.h.b16 %v234
      %v430 = vunpack.c.l.b16 %v235
      %v431 = vunpack.c.h.b16 %v235
      %v432 = vunpack.c.l.b16 %v236
      %v433 = vunpack.c.h.b16 %v236
      %v434 = vunpack.c.l.b16 %v237
      %v435 = vunpack.c.h.b16 %v237
      %v436 = vunpack.c.l.b16 %v238
      %v437 = vunpack.c.h.b16 %v238
      %v438 = vunpack.c.l.b16 %v239
      %v439 = vunpack.c.h.b16 %v239
      %v440 = vunpack.c.l.b16 %v240
      %v441 = vunpack.c.h.b16 %v240
      %v442 = vunpack.c.l.b16 %v241
      %v443 = vunpack.c.h.b16 %v241
      %v444 = vunpack.c.l.b16 %v242
      %v445 = vunpack.c.h.b16 %v242
      %v446 = vunpack.c.l.b16 %v243
      %v447 = vunpack.c.h.b16 %v243
      %v448 = vunpack.c.l.b16 %v244
      %v449 = vunpack.c.h.b16 %v244
      %v450 = vunpack.c.l.b16 %v245
      %v451 = vunpack.c.h.b16 %v245
      %v452 = vunpack.c.l.b16 %v246
      %v453 = vunpack.c.h.b16 %v246
      %v454 = vunpack.c.l.b16 %v247
      %v455 = vunpack.c.h.b16 %v247
      %v456 = vunpack.c.l.b16 %v248
      %v457 = vunpack.c.h.b16 %v248
      %v458 = vunpack.c.l.b16 %v249
      %v459 = vunpack.c.h.b16 %v249
      %v460 = vunpack.c.l.b16 %v250
      %v461 = vunpack.c.h.b16 %v250
      %v462 = vunpack.c.l.b16 %v251
      %v463 = vunpack.c.h.b16 %v251
      %v464 = vunpack.c.l.b16 %v252
      %v465 = vunpack.c.h.b16 %v252
      %v466 = vunpack.c.l.b16 %v253
      %v467 = vunpack.c.h.b16 %v253
      %v468 = vunpack.c.l.b16 %v254
      %v469 = vunpack.c.h.b16 %v254
      %v470 = vunpack.c.l.b16 %v255
      %v471 = vunpack.c.h.b16 %v255
      %v472 = vunpack.c.l.b16 %v256
      %v473 = vunpack.c.h.b16 %v256
      %v474 = vunpack.c.l.b16 %v257
      %v475 = vunpack.c.h.b16 %v257
      %v476 = vunpack.c.l.b16 %v258
      %v477 = vunpack.c.h.b16 %v258
      %v478 = vunpack.c.l.b16 %v259
      %v479 = vunpack.c.h.b16 %v259
      %v480 = vunpack.c.l.b16 %v260
      %v481 = vunpack.c.h.b16 %v260
      %v482 = vunpack.c.l.b16 %v261
      %v483 = vunpack.c.h.b16 %v261
      %v484 = vunpack.c.l.b16 %v262
      %v485 = vunpack.c.h.b16 %v262
      %v486 = vunpack.c.l.b16 %v263
      %v487 = vunpack.c.h.b16 %v263
      %v488 = vunpack.c.l.b16 %v264
      %v489 = vunpack.c.h.b16 %v264
      %v490 = vunpack.c.l.b16 %v265
      %v491 = vunpack.c.h.b16 %v265
      %v492 = vunpack.c.l.b16 %v266
      %v493 = vunpack.c.h.b16 %v266
      %v494 = vunpack.c.l.b16 %v267
      %v495 = vunpack.c.h.b16 %v267
      %v496 = vunpack.c.l.b16 %v268
      %v497 = vunpack.c.h.b16 %v268
      %v498 = vunpack.c.l.b16 %v269
      %v499 = vunpack.c.h.b16 %v269
      %v500 = vunpack.c.l.b16 %v270
      %v501 = vunpack.c.h.b16 %v270
      %v502 = vunpack.c.l.b16 %v271
      %v503 = vunpack.c.h.b16 %v271
      %v504 = vunpack.c.l.b16 %v272
      %v505 = vunpack.c.h.b16 %v272
      %v506 = vunpack.c.l.b16 %v273
      %v507 = vunpack.c.h.b16 %v273
      %v508 = vunpack.c.l.b16 %v274
      %v509 = vunpack.c.h.b16 %v274
      %v510 = vunpack.c.l.b16 %v275
      %v511 = vunpack.c.h.b16 %v275
      %v512 = vunpack.c.l.b16 %v276
      %v513 = vunpack.c.h.b16 %v276
      %v514 = vunpack.c.l.b16 %v277
      %v515 = vunpack.c.h.b16 %v277
      %v516 = vunpack.c.l.b16 %v278
      %v517 = vunpack.c.h.b16 %v278
      %v518 = vunpack.c.l.b16 %v279
      %v519 = vunpack.c.h.b16 %v279
      %v520 = vunpack.c.l.b16 %v280
      %v521 = vunpack.c.h.b16 %v280
      %v522 = vunpack.c.l.b16 %v281
      %v523 = vunpack.c.h.b16 %v281
      %v524 = vunpack.c.l.b16 %v282
      %v525 = vunpack.c.h.b16 %v282
      %v526 = vunpack.c.l.b16 %v283
      %v527 = vunpack.c.h.b16 %v283
      %v528 = vunpack.c.l.b16 %v284
      %v529 = vunpack.c.h.b16 %v284
      %v530 = vunpack.c.l.b16 %v285
      %v531 = vunpack.c.h.b16 %v285
      %v532 = vunpack.c.l.b16 %v286
      %v533 = vunpack.c.h.b16 %v286
      %v534 = vunpack.c.l.b16 %v287
      %v535 = vunpack.c.h.b16 %v287
      %v536 = vunpack.c.l.b16 %v288
      %v537 = vunpack.c.h.b16 %v288
      %v538 = vpack.c.b16 %v394, %v386
      %v539 = vpack.c.b16 %v395, %v387
      %v540 = vpack.c.b16 %v396, %v388
      %v541 = vpack.c.b16 %v397, %v389
      %v542 = vpack.c.b16 %v398, %v390
      %v543 = vpack.c.b16 %v399, %v391
      %v544 = vpack.c.b16 %v400, %v392
      %v545 = vpack.c.b16 %v401, %v393
      %v546 = vpack.c.b16 %v410, %v402
      %v547 = vpack.c.b16 %v411, %v403
      %v548 = vpack.c.b16 %v412, %v404
      %v549 = vpack.c.b16 %v413, %v405
      %v550 = vpack.c.b16 %v414, %v406
      %v551 = vpack.c.b16 %v415, %v407
      %v552 = vpack.c.b16 %v416, %v408
      %v553 = vpack.c.b16 %v417, %v409
      %v554 = vpack.c.b16 %v426, %v418
      %v555 = vpack.c.b16 %v427, %v419
      %v556 = vpack.c.b16 %v428, %v420
      %v557 = vpack.c.b16 %v429, %v421
      %v558 = vpack.c.b16 %v430, %v422
      %v559 = vpack.c.b16 %v431, %v423
      %v560 = vpack.c.b16 %v432, %v424
      %v561 = vpack.c.b16 %v433, %v425
      %v562 = vpack.c.b16 %v442, %v434
      %v563 = vpack.c.b16 %v443, %v435
      %v564 = vpack.c.b16 %v444, %v436
      %v565 = vpack.c.b16 %v445, %v437
      %v566 = vpack.c.b16 %v446, %v438
      %v567 = vpack.c.b16 %v447, %v439
      %v568 = vpack.c.b16 %v448, %v440
      %v569 = vpack.c.b16 %v449, %v441
      %v570 = vpack.c.b16 %v458, %v450
      %v571 = vpack.c.b16 %v459, %v451
      %v572 = vpack.c.b16 %v460, %v452
      %v573 = vpack.c.b16 %v461, %v453
      %v574 = vpack.c.b16 %v462, %v454
      %v575 = vpack.c.b16 %v463, %v455
      %v576 = vpack.c.b16 %v464, %v456
      %v577 = vpack.c.b16 %v465, %v457
      %v578 = vpack.c.b16 %v474, %v466
      %v579 = vpack.c.b16 %v475, %v467
      %v580 = vpack.c.b16 %v476, %v468
      %v581 = vpack.c.b16 %v477, %v469
      %v582 = vpack.c.b16 %v478, %v470
      %v583 = vpack.c.b16 %v479, %v471
      %v584 = vpack.c.b16 %v480, %v472
      %v585 = vpack.c.b16 %v481, %v473
      %v586 = vpack.c.b16 %v490, %v482
      %v587 = vpack.c.b16 %v491, %v483
      %v588 = vpack.c.b16 %v492, %v484
      %v589 = vpack.c.b16 %v493, %v485
      %v590 = vpack.c.b16 %v494, %v486
      %v591 = vpack.c.b16 %v495, %v487
      %v592 = vpack.c.b16 %v496, %v488
      %v593 = vpack.c.b16 %v497, %v489
      %v594 = vpack.c.b16 %v506, %v498
      %v595 = vpack.c.b16 %v507, %v499
      %v596 = vpack.c.b16 %v508, %v500
      %v597 = vpack.c.b16 %v509, %v501
      %v598 = vpack.c.b16 %v510, %v502
      %v599 = vpack.c.b16 %v511, %v503
      %v600 = vpack.c.b16 %v512, %v504
      %v601 = vpack.c.b16 %v513, %v505
      %v602 = vpack.c.b16 %v522, %v514
      %v603 = vpack.c.b16 %v523, %v515
      %v604 = vpack.c.b16 %v524, %v516
      %v605 = vpack.c.b16 %v525, %v517
      %v606 = vpack.c.b16 %v526, %v518
      %v607 = vpack.c.b16 %v527, %v519
      %v608 = vpack.c.b16 %v528, %v520
      %v609 = vpack.c.b16 %v529, %v521
      %v610 = vpack.c.b16 %v530, %v530
      %v611 = vpack.c.b16 %v531, %v531
      %v612 = vpack.c.b16 %v532, %v532
      %v613 = vpack.c.b16 %v533, %v533
      %v614 = vpack.c.b16 %v534, %v534
      %v615 = vpack.c.b16 %v535, %v535
      %v616 = vpack.c.b16 %v536, %v536
      %v617 = vpack.c.b16 %v537, %v537
      %vm690 = vcmask 195584
      %v692 = vsel %vm690, %v308, 0
      %vm694 = vcmask 1043456
      %v696 = vsel %vm694, %v610, 0
      %v699 = vsel %vm694, %v611, 0
      %v702 = vsel %vm694, %v612, 0
      %v705 = vsel %vm694, %v613, 0
      %v708 = vsel %vm694, %v614, 0
      %v711 = vsel %vm694, %v615, 0
      %v714 = vsel %vm694, %v616, 0
      %v717 = vsel %vm694, %v617, 0
      %719 = vmatpush.bf16.msra.mxu0 %v594
      %720 = vmatpush.bf16.msra.mxu0 %v586
      %721 = vmatpush.bf16.msra.mxu0 %v578
      %722 = vmatpush.bf16.msra.mxu0 %v570
      %723 = vmatpush.bf16.msra.mxu0 %v562
      %724 = vmatpush.bf16.msra.mxu0 %v554
      %725 = vmatpush.bf16.msra.mxu0 %v546
      %726 = vmatpush.bf16.msra.mxu0 %v538
      %727 = vmatmul.bf16.gmra.mxu0 %v307
      %v728 = vpop.f32.mrf.mxu0
      %v729 = vadd.f32 %v294, %v728
      %v730 = vpop.f32.mrf.mxu0
      %v731 = vadd.f32 %v299, %v730
      %732 = vdwg.mxu0
      %733 = vmatpush.bf16.msra.mxu0 0
      %734 = vmatpush.bf16.msra.mxu0 0
      %735 = vmatpush.bf16.msra.mxu0 0
      %736 = vmatpush.bf16.msra.mxu0 0
      %737 = vmatpush.bf16.msra.mxu0 0
      %738 = vmatpush.bf16.msra.mxu0 0
      %739 = vmatpush.bf16.msra.mxu0 %v696
      %740 = vmatpush.bf16.msra.mxu0 %v602
      %741 = vmatmul.bf16.gmra.mxu0 %v692
      %v742 = vpop.f32.mrf.mxu0
      %v743 = vadd.f32 %v729, %v742
      %v744 = vpop.f32.mrf.mxu0
      %v745 = vadd.f32 %v731, %v744
      %746 = vdwg.mxu0
      %747 = vmatpush.bf16.msra.mxu0 %v595
      %748 = vmatpush.bf16.msra.mxu0 %v587
      %749 = vmatpush.bf16.msra.mxu0 %v579
      %750 = vmatpush.bf16.msra.mxu0 %v571
      %751 = vmatpush.bf16.msra.mxu0 %v563
      %752 = vmatpush.bf16.msra.mxu0 %v555
      %753 = vmatpush.bf16.msra.mxu0 %v547
      %754 = vmatpush.bf16.msra.mxu0 %v539
      %755 = vmatmul.bf16.gmra.mxu0 %v307
      %v756 = vpop.f32.mrf.mxu0
      %v757 = vadd.f32 %v294, %v756
      %v758 = vpop.f32.mrf.mxu0
      %v759 = vadd.f32 %v299, %v758
      %760 = vdwg.mxu0
      %761 = vmatpush.bf16.msra.mxu0 0
      %762 = vmatpush.bf16.msra.mxu0 0
      %763 = vmatpush.bf16.msra.mxu0 0
      %764 = vmatpush.bf16.msra.mxu0 0
      %765 = vmatpush.bf16.msra.mxu0 0
      %766 = vmatpush.bf16.msra.mxu0 0
      %767 = vmatpush.bf16.msra.mxu0 %v699
      %768 = vmatpush.bf16.msra.mxu0 %v603
      %769 = vmatmul.bf16.gmra.mxu0 %v692
      %v770 = vpop.f32.mrf.mxu0
      %v771 = vadd.f32 %v757, %v770
      %v772 = vpop.f32.mrf.mxu0
      %v773 = vadd.f32 %v759, %v772
      %774 = vdwg.mxu0
      %775 = vmatpush.bf16.msra.mxu0 %v596
      %776 = vmatpush.bf16.msra.mxu0 %v588
      %777 = vmatpush.bf16.msra.mxu0 %v580
      %778 = vmatpush.bf16.msra.mxu0 %v572
      %779 = vmatpush.bf16.msra.mxu0 %v564
      %780 = vmatpush.bf16.msra.mxu0 %v556
      %781 = vmatpush.bf16.msra.mxu0 %v548
      %782 = vmatpush.bf16.msra.mxu0 %v540
      %783 = vmatmul.bf16.gmra.mxu0 %v307
      %v784 = vpop.f32.mrf.mxu0
      %v785 = vadd.f32 %v294, %v784
      %v786 = vpop.f32.mrf.mxu0
      %v787 = vadd.f32 %v299, %v786
      %788 = vdwg.mxu0
      %789 = vmatpush.bf16.msra.mxu0 0
      %790 = vmatpush.bf16.msra.mxu0 0
      %791 = vmatpush.bf16.msra.mxu0 0
      %792 = vmatpush.bf16.msra.mxu0 0
      %793 = vmatpush.bf16.msra.mxu0 0
      %794 = vmatpush.bf16.msra.mxu0 0
      %795 = vmatpush.bf16.msra.mxu0 %v702
      %796 = vmatpush.bf16.msra.mxu0 %v604
      %797 = vmatmul.bf16.gmra.mxu0 %v692
      %v798 = vpop.f32.mrf.mxu0
      %v799 = vadd.f32 %v785, %v798
      %v800 = vpop.f32.mrf.mxu0
      %v801 = vadd.f32 %v787, %v800
      %802 = vdwg.mxu0
      %803 = vmatpush.bf16.msra.mxu0 %v597
      %804 = vmatpush.bf16.msra.mxu0 %v589
      %805 = vmatpush.bf16.msra.mxu0 %v581
      %806 = vmatpush.bf16.msra.mxu0 %v573
      %807 = vmatpush.bf16.msra.mxu0 %v565
      %808 = vmatpush.bf16.msra.mxu0 %v557
      %809 = vmatpush.bf16.msra.mxu0 %v549
      %810 = vmatpush.bf16.msra.mxu0 %v541
      %811 = vmatmul.bf16.gmra.mxu0 %v307
      %v812 = vpop.f32.mrf.mxu0
      %v813 = vadd.f32 %v294, %v812
      %v814 = vpop.f32.mrf.mxu0
      %v815 = vadd.f32 %v299, %v814
      %816 = vdwg.mxu0
      %817 = vmatpush.bf16.msra.mxu0 0
      %818 = vmatpush.bf16.msra.mxu0 0
      %819 = vmatpush.bf16.msra.mxu0 0
      %820 = vmatpush.bf16.msra.mxu0 0
      %821 = vmatpush.bf16.msra.mxu0 0
      %822 = vmatpush.bf16.msra.mxu0 0
      %823 = vmatpush.bf16.msra.mxu0 %v705
      %824 = vmatpush.bf16.msra.mxu0 %v605
      %825 = vmatmul.bf16.gmra.mxu0 %v692
      %v826 = vpop.f32.mrf.mxu0
      %v827 = vadd.f32 %v813, %v826
      %v828 = vpop.f32.mrf.mxu0
      %v829 = vadd.f32 %v815, %v828
      %830 = vdwg.mxu0
      %831 = vmatpush.bf16.msra.mxu0 %v598
      %832 = vmatpush.bf16.msra.mxu0 %v590
      %833 = vmatpush.bf16.msra.mxu0 %v582
      %834 = vmatpush.bf16.msra.mxu0 %v574
      %835 = vmatpush.bf16.msra.mxu0 %v566
      %836 = vmatpush.bf16.msra.mxu0 %v558
      %837 = vmatpush.bf16.msra.mxu0 %v550
      %838 = vmatpush.bf16.msra.mxu0 %v542
      %839 = vmatmul.bf16.gmra.mxu0 %v307
      %v840 = vpop.f32.mrf.mxu0
      %v841 = vadd.f32 %v294, %v840
      %v842 = vpop.f32.mrf.mxu0
      %v843 = vadd.f32 %v299, %v842
      %844 = vdwg.mxu0
      %845 = vmatpush.bf16.msra.mxu0 0
      %846 = vmatpush.bf16.msra.mxu0 0
      %847 = vmatpush.bf16.msra.mxu0 0
      %848 = vmatpush.bf16.msra.mxu0 0
      %849 = vmatpush.bf16.msra.mxu0 0
      %850 = vmatpush.bf16.msra.mxu0 0
      %851 = vmatpush.bf16.msra.mxu0 %v708
      %852 = vmatpush.bf16.msra.mxu0 %v606
      %853 = vmatmul.bf16.gmra.mxu0 %v692
      %v854 = vpop.f32.mrf.mxu0
      %v855 = vadd.f32 %v841, %v854
      %v856 = vpop.f32.mrf.mxu0
      %v857 = vadd.f32 %v843, %v856
      %858 = vdwg.mxu0
      %859 = vmatpush.bf16.msra.mxu0 %v599
      %860 = vmatpush.bf16.msra.mxu0 %v591
      %861 = vmatpush.bf16.msra.mxu0 %v583
      %862 = vmatpush.bf16.msra.mxu0 %v575
      %863 = vmatpush.bf16.msra.mxu0 %v567
      %864 = vmatpush.bf16.msra.mxu0 %v559
      %865 = vmatpush.bf16.msra.mxu0 %v551
      %866 = vmatpush.bf16.msra.mxu0 %v543
      %867 = vmatmul.bf16.gmra.mxu0 %v307
      %v868 = vpop.f32.mrf.mxu0
      %v869 = vadd.f32 %v294, %v868
      %v870 = vpop.f32.mrf.mxu0
      %v871 = vadd.f32 %v299, %v870
      %872 = vdwg.mxu0
      %873 = vmatpush.bf16.msra.mxu0 0
      %874 = vmatpush.bf16.msra.mxu0 0
      %875 = vmatpush.bf16.msra.mxu0 0
      %876 = vmatpush.bf16.msra.mxu0 0
      %877 = vmatpush.bf16.msra.mxu0 0
      %878 = vmatpush.bf16.msra.mxu0 0
      %879 = vmatpush.bf16.msra.mxu0 %v711
      %880 = vmatpush.bf16.msra.mxu0 %v607
      %881 = vmatmul.bf16.gmra.mxu0 %v692
      %v882 = vpop.f32.mrf.mxu0
      %v883 = vadd.f32 %v869, %v882
      %v884 = vpop.f32.mrf.mxu0
      %v885 = vadd.f32 %v871, %v884
      %886 = vdwg.mxu0
      %887 = vmatpush.bf16.msra.mxu0 %v600
      %888 = vmatpush.bf16.msra.mxu0 %v592
      %889 = vmatpush.bf16.msra.mxu0 %v584
      %890 = vmatpush.bf16.msra.mxu0 %v576
      %891 = vmatpush.bf16.msra.mxu0 %v568
      %892 = vmatpush.bf16.msra.mxu0 %v560
      %893 = vmatpush.bf16.msra.mxu0 %v552
      %894 = vmatpush.bf16.msra.mxu0 %v544
      %895 = vmatmul.bf16.gmra.mxu0 %v307
      %v896 = vpop.f32.mrf.mxu0
      %v897 = vadd.f32 %v294, %v896
      %v898 = vpop.f32.mrf.mxu0
      %v899 = vadd.f32 %v299, %v898
      %900 = vdwg.mxu0
      %901 = vmatpush.bf16.msra.mxu0 0
      %902 = vmatpush.bf16.msra.mxu0 0
      %903 = vmatpush.bf16.msra.mxu0 0
      %904 = vmatpush.bf16.msra.mxu0 0
      %905 = vmatpush.bf16.msra.mxu0 0
      %906 = vmatpush.bf16.msra.mxu0 0
      %907 = vmatpush.bf16.msra.mxu0 %v714
      %908 = vmatpush.bf16.msra.mxu0 %v608
      %909 = vmatmul.bf16.gmra.mxu0 %v692
      %v910 = vpop.f32.mrf.mxu0
      %v911 = vadd.f32 %v897, %v910
      %v912 = vpop.f32.mrf.mxu0
      %v913 = vadd.f32 %v899, %v912
      %914 = vdwg.mxu0
      %915 = vmatpush.bf16.msra.mxu0 %v601
      %916 = vmatpush.bf16.msra.mxu0 %v593
      %917 = vmatpush.bf16.msra.mxu0 %v585
      %918 = vmatpush.bf16.msra.mxu0 %v577
      %919 = vmatpush.bf16.msra.mxu0 %v569
      %920 = vmatpush.bf16.msra.mxu0 %v561
      %921 = vmatpush.bf16.msra.mxu0 %v553
      %922 = vmatpush.bf16.msra.mxu0 %v545
      %923 = vmatmul.bf16.gmra.mxu0 %v307
      %v924 = vpop.f32.mrf.mxu0
      %v925 = vadd.f32 %v294, %v924
      %v926 = vpop.f32.mrf.mxu0
      %v927 = vadd.f32 %v299, %v926
      %928 = vdwg.mxu0
      %929 = vmatpush.bf16.msra.mxu0 0
      %930 = vmatpush.bf16.msra.mxu0 0
      %931 = vmatpush.bf16.msra.mxu0 0
      %932 = vmatpush.bf16.msra.mxu0 0
      %933 = vmatpush.bf16.msra.mxu0 0
      %934 = vmatpush.bf16.msra.mxu0 0
      %935 = vmatpush.bf16.msra.mxu0 %v717
      %936 = vmatpush.bf16.msra.mxu0 %v609
      %937 = vmatmul.bf16.gmra.mxu0 %v692
      %v938 = vpop.f32.mrf.mxu0
      %v939 = vadd.f32 %v925, %v938
      %v940 = vpop.f32.mrf.mxu0
      %v941 = vadd.f32 %v927, %v940
      %942 = vdwg.mxu0
      %943 = vst [vmem:[%s208] sm:$0xff] %v743
      %944 = vst [vmem:[%s208 + $0x8] sm:$0xff] %v771
      %945 = vst [vmem:[%s208 + $0x10] sm:$0xff] %v799
      %946 = vst [vmem:[%s208 + $0x18] sm:$0xff] %v827
      %947 = vst [vmem:[%s208 + $0x20] sm:$0xff] %v855
      %948 = vst [vmem:[%s208 + $0x28] sm:$0xff] %v883
      %949 = vst [vmem:[%s208 + $0x30] sm:$0xff] %v911
      %950 = vst [vmem:[%s208 + $0x38] sm:$0xff] %v939
      %951 = vst [vmem:[%s208 + $0x40] sm:$0xff] %v745
      %952 = vst [vmem:[%s208 + $0x48] sm:$0xff] %v773
      %953 = vst [vmem:[%s208 + $0x50] sm:$0xff] %v801
      %954 = vst [vmem:[%s208 + $0x58] sm:$0xff] %v829
      %955 = vst [vmem:[%s208 + $0x60] sm:$0xff] %v857
      %956 = vst [vmem:[%s208 + $0x68] sm:$0xff] %v885
      %957 = vst [vmem:[%s208 + $0x70] sm:$0xff] %v913
      %958 = vst [vmem:[%s208 + $0x78] sm:$0xff] %v941
      %s959 = smul.u32 8, %s19
      %p960 = scmp.lt.s32.totalorder %s18, 1
      %s961 = scalar_select %p960, %s18, 1
      %p962 = scmp.lt.s32.totalorder %s959, 7
      %s963 = scalar_select %p962, %s959, 7
      %s964 = smul.addr %s961, 16
      %s965 = sadd.s32 %s963, %s964
      %s966 = smul.addr %s965, 8
      %s967 = scalar_lea.vmem %s3, %s966
      // Predicated region
      $region33: #{resblock_decoder_forward.11} parent=31 // pred_check
        %p968 = pneg %p116
      $region34: #{resblock_decoder_forward.11} parent=31 // pred_check_branch
        %970 = sbr.rel (%p968) target = $region36
      $region35: #{resblock_decoder_forward.11} parent=31 // pred_region
        %s971 = smul.u32 8, %s19
      $region36: #{resblock_decoder_forward.11} parent=31 // pred_fallthru
        _
    $region32: #{resblock_decoder_forward.11} parent=5 // pred_fallthru
      _
    %p972 = scmp.le.s32.totalorder 2, %s9
    // Predicated region
    $region37: #{resblock_decoder_forward.11} parent=5 // pred_check
      %p973 = pneg %p972
    $region38: #{resblock_decoder_forward.11} parent=5 // pred_check_branch
      %975 = sbr.rel (%p973) target = $region40
    $region39: #{resblock_decoder_forward.11} parent=5 // pred_region
      %s976 = ssub.s32 %s9, 2
      // Predicated region
      $region41: #{resblock_decoder_forward.11} parent=39 // pred_check
        %p977 = pneg %p122
      $region42: #{resblock_decoder_forward.11} parent=39 // pred_check_branch
        %979 = sbr.rel (%p977) target = $region44
      $region43: #{resblock_decoder_forward.11} parent=39 // pred_region
        %s980 = smul.u32 8, %s21
        %p981 = scmp.lt.s32.totalorder %s20, 1
        %s982 = scalar_select %p981, %s20, 1
        %p983 = scmp.lt.s32.totalorder %s980, 7
        %s984 = scalar_select %p983, %s980, 7
        %s985 = smul.addr %s982, 16
        %s986 = sadd.s32 %s984, %s985
        %s987 = smul.addr %s986, 8
        %s988 = scalar_lea.vmem %s3, %s987
      $region44: #{resblock_decoder_forward.11} parent=39 // pred_fallthru
        _
    $region40: #{resblock_decoder_forward.11} parent=5 // pred_fallthru
      _
  $region6: #{resblock_decoder_forward.11} parent=0 // loop_footer
    %s13 = sadd.s32 1, %s9
  $region7: #{resblock_decoder_forward.11} parent=0 // loop_footer_branch
    %8 = sbr.rel target = $region3
  $region8: #{resblock_decoder_forward.11} parent=0 // loop_exit
    _

</llo_original>
